<compile_context>
chip_gen: v6e
topology: v6e:2x2x1
jax: 0.10.0
libtpu: 0.0.40
codegen_flags: <defaults>
</compile_context>

<pallas_src>
import functools
import math

import jax
import jax.numpy as jnp
from jax.experimental import pallas as pl
from jax.experimental.pallas import tpu as pltpu

PI = math.pi


def entity_projection_kernel(
    qa_ref, qg_ref, ra_ref, rg_ref, ta_ref, tg_ref,
    w1_ref, b1_ref, w2_ref, b2_ref, w0_ref, b0_ref,
    axis_out_ref, arg_out_ref,
    *, dim,
):
    f32 = jnp.float32
    bf16 = jnp.bfloat16

    # Sum the three axis / arg embeddings in f32 (inputs may arrive as bf16).
    x_axis = (qa_ref[...].astype(f32) + ra_ref[...].astype(f32)
              + ta_ref[...].astype(f32))                       # [TB, dim]
    x_arg = (qg_ref[...].astype(f32) + rg_ref[...].astype(f32)
             + tg_ref[...].astype(f32))                        # [TB, dim]

    # Lane concat at a dim (=multiple of 128) boundary: layout-only. Single
    # K=2*dim dot uses the full MXU depth on v6e/v7x.
    x = jnp.concatenate([x_axis, x_arg], axis=-1).astype(bf16)  # [TB, 2*dim]

    # layer1: (2*dim -> hidden), ReLU
    h = jnp.dot(x, w1_ref[...], preferred_element_type=f32) + b1_ref[...]
    h = jnp.maximum(h, 0.0).astype(bf16)

    # layer2: (hidden -> hidden), ReLU
    h = jnp.dot(h, w2_ref[...], preferred_element_type=f32) + b2_ref[...]
    h = jnp.maximum(h, 0.0).astype(bf16)

    # layer0: (hidden -> 2*dim) as a single N=2*dim dot; split at the
    # 128-aligned lane boundary and write each half straight to its output.
    y = jnp.dot(h, w0_ref[...], preferred_element_type=f32) + b0_ref[...]
    y_axis = y[:, :dim]
    y_arg = y[:, dim:]

    # convert_to_axis: tanh(x) * pi
    axis_out_ref[...] = (jnp.tanh(y_axis) * PI).astype(axis_out_ref.dtype)
    # convert_to_arg: tanh(2x) * pi/2 + pi/2
    arg_out_ref[...] = (jnp.tanh(2.0 * y_arg) * (PI / 2.0)
                        + (PI / 2.0)).astype(arg_out_ref.dtype)


def _round_up(x, m):
    return ((x + m - 1) // m) * m


def _vmem_budget_bytes():
    """Generation-aware VMEM budget (v7x: 64 MiB/TC, v5e/v6e: 128 MiB)."""
    cap = 128 * 1024 * 1024
    try:
        info = pltpu.get_tpu_info()
        cap = int(getattr(info, "vmem_capacity_bytes", cap))
    except Exception:
        pass
    # Leave headroom for compiler scratch / internal buffers.
    return min((cap * 3) // 4, 100 * 1024 * 1024)


def _pick_batch_tile(B, dim, hidden, in_bytes, out_bytes, block_b, vmem_limit):
    """Largest batch tile (multiple of 8) that fits the VMEM budget."""
    # Resident weights (bf16); assume compiler may double-buffer them.
    weight_bytes = 2 * 2 * (2 * dim * hidden + hidden * hidden + hidden * 2 * dim)
    bias_bytes = 2 * 4 * (hidden + hidden + 2 * dim)
    # Streamed blocks are double-buffered: 6 inputs + 2 outputs, dim lanes each.
    per_row = 2 * dim * (6 * in_bytes + 2 * out_bytes)
    budget = int(vmem_limit * 0.8) - weight_bytes - bias_bytes
    tb_cap = max(budget // max(per_row, 1), 8)
    tb = min(block_b, tb_cap, _round_up(B, 8))
    return max((tb // 8) * 8, 8)


def entity_projection(q_axis, q_arg, r_axis, r_arg, t_axis, t_arg, params,
                      *, block_b=512, out_dtype=jnp.float32):
    """params = (w1, b1, w2, b2, w0, b0); weights laid out [in, out].

    Embeddings may be f32 or bf16 (bf16 halves the dominant HBM read traffic);
    outputs are `out_dtype` (default f32, pass bf16 if downstream tolerates it).
    """
    B, dim = q_axis.shape
    w1, b1, w2, b2, w0, b0 = params
    hidden = w1.shape[1]

    bf16 = jnp.bfloat16
    # One-time (static) weight casts; biases stay f32 and broadcast [1, out].
    w1b = w1.astype(bf16)                      # [2*dim, hidden]
    w2b = w2.astype(bf16)                      # [hidden, hidden]
    w0b = w0.astype(bf16)                      # [hidden, 2*dim]
    b1r = jnp.reshape(b1, (1, hidden)).astype(jnp.float32)
    b2r = jnp.reshape(b2, (1, hidden)).astype(jnp.float32)
    b0r = jnp.reshape(b0, (1, 2 * dim)).astype(jnp.float32)

    in_bytes = jnp.dtype(q_axis.dtype).itemsize
    out_bytes = jnp.dtype(out_dtype).itemsize
    vmem_limit = _vmem_budget_bytes()
    tb = _pick_batch_tile(B, dim, hidden, in_bytes, out_bytes, block_b, vmem_limit)

    # No padding / slicing: Pallas masks the partial last block on store.
    grid = (pl.cdiv(B, tb),)

    emb_spec = pl.BlockSpec((tb, dim), lambda i: (i, 0))
    out_spec = pl.BlockSpec((tb, dim), lambda i: (i, 0))
    # Constant block index -> weights/biases stay VMEM-resident across the grid.
    resident = lambda shape: pl.BlockSpec(shape, lambda i: (0, 0))

    gemm_macs = 2 * dim * hidden + hidden * hidden + hidden * 2 * dim
    weight_bytes = 2 * (2 * dim * hidden + hidden * hidden + hidden * 2 * dim)
    bias_bytes = 4 * (hidden + hidden + 2 * dim)
    cost = pl.CostEstimate(
        flops=2 * B * gemm_macs,
        transcendentals=2 * B * dim,                       # the two tanh maps
        bytes_accessed=(B * dim * (6 * in_bytes + 2 * out_bytes)
                        + weight_bytes + bias_bytes),
    )

    out_shapes = (
        jax.ShapeDtypeStruct((B, dim), out_dtype),         # axis_embedding
        jax.ShapeDtypeStruct((B, dim), out_dtype),         # arg_embedding
    )

    kernel = functools.partial(entity_projection_kernel, dim=dim)

    axis_emb, arg_emb = pl.pallas_call(
        kernel,
        out_shape=out_shapes,
        grid=grid,
        in_specs=[emb_spec] * 6 + [
            resident((2 * dim, hidden)), resident((1, hidden)),
            resident((hidden, hidden)), resident((1, hidden)),
            resident((hidden, 2 * dim)), resident((1, 2 * dim)),
        ],
        out_specs=(out_spec, out_spec),
        compiler_params=pltpu.CompilerParams(
            dimension_semantics=("parallel",),   # v7x: batch grid over 2 TCs
            vmem_limit_bytes=vmem_limit,         # generation-aware budget
        ),
        cost_estimate=cost,
    )(q_axis, q_arg, r_axis, r_arg, t_axis, t_arg,
      w1b, b1r, w2b, b2r, w0b, b0r)

    return axis_emb, arg_emb


def _xavier_uniform(key, out_features, in_features):
    # matches torch.nn.init.xavier_uniform_ on weight of shape (out, in)
    bound = math.sqrt(6.0 / (in_features + out_features))
    return jax.random.uniform(
        key, (out_features, in_features), jnp.float32, -bound, bound)


def _linear_bias(key, in_features, out_features):
    # matches default torch.nn.Linear bias init: U(-1/sqrt(fan_in), 1/sqrt(fan_in))
    bound = 1.0 / math.sqrt(in_features)
    return jax.random.uniform(key, (1, out_features), jnp.float32, -bound, bound)


def make_params(key, dim, hidden_dim):
    token_dim = dim * 2
    keys = jax.random.split(key, 6)
    w1 = _xavier_uniform(keys[0], hidden_dim, token_dim).T   # [token_dim, hidden]
    b1 = _linear_bias(keys[1], token_dim, hidden_dim)        # [1, hidden]
    w2 = _xavier_uniform(keys[2], hidden_dim, hidden_dim).T  # [hidden, hidden]
    b2 = _linear_bias(keys[3], hidden_dim, hidden_dim)       # [1, hidden]
    w0 = _xavier_uniform(keys[4], token_dim, hidden_dim).T   # [hidden, token_dim]
    b0 = _linear_bias(keys[5], hidden_dim, token_dim)        # [1, token_dim]
    return (w1, b1, w2, b2, w0, b0)


if __name__ == "__main__":
    # Small, lane-dense demo: dim=128 (token_dim=256), hidden=256.
    # B=300 is deliberately not a multiple of the batch tile so the un-padded
    # partial-last-block path (masked stores, no wrapper pad/slice) is exercised.
    B = 300
    DIM = 128
    HIDDEN = 256

    key = jax.random.PRNGKey(0)
    k_in, k_par = jax.random.split(key)
    ks = jax.random.split(k_in, 6)

    embs_f32 = [jax.random.normal(k, (B, DIM), jnp.float32) for k in ks]
    # Pass the embeddings in bf16 (recommended: input reads dominate HBM traffic).
    embs = [e.astype(jnp.bfloat16) for e in embs_f32]

    params = make_params(k_par, DIM, HIDDEN)
    w1, b1, w2, b2, w0, b0 = params

    axis_emb, arg_emb = entity_projection(*embs, params, block_b=256)
    jax.block_until_ready((axis_emb, arg_emb))

    # Inputs as the kernel actually sees them (bf16-rounded, then f32).
    qa, qg, ra, rg, ta, tg = [e.astype(jnp.float32) for e in embs]

    # Reference 1 (tight): identical numerics to the kernel — f32 sums, bf16
    # matmul operands, f32 accumulation, f32 bias/tanh.
    bf = jnp.bfloat16
    f32 = jnp.float32
    x = jnp.concatenate([qa + ra + ta, qg + rg + tg], -1).astype(bf)
    h = jnp.dot(x, w1.astype(bf), preferred_element_type=f32) + b1
    h = jnp.maximum(h, 0.0).astype(bf)
    h = jnp.dot(h, w2.astype(bf), preferred_element_type=f32) + b2
    h = jnp.maximum(h, 0.0).astype(bf)
    y = jnp.dot(h, w0.astype(bf), preferred_element_type=f32) + b0
    axis_ref = jnp.tanh(y[:, :DIM]) * PI
    arg_ref = jnp.tanh(2.0 * y[:, DIM:]) * (PI / 2.0) + (PI / 2.0)
    assert jnp.allclose(axis_emb, axis_ref, atol=5e-3), "axis mismatch (bf16 ref)"
    assert jnp.allclose(arg_emb, arg_ref, atol=5e-3), "arg mismatch (bf16 ref)"

    # Reference 2 (loose sanity): full-f32 PyTorch math from the same inputs;
    # only deviation is bf16 rounding of the matmul operands.
    xf = jnp.concatenate([qa + ra + ta, qg + rg + tg], -1)
    hf = jnp.maximum(xf @ w1 + b1, 0.0)
    hf = jnp.maximum(hf @ w2 + b2, 0.0)
    yf = hf @ w0 + b0
    axis_f32 = jnp.tanh(yf[:, :DIM]) * PI
    arg_f32 = jnp.tanh(2.0 * yf[:, DIM:]) * (PI / 2.0) + (PI / 2.0)
    assert jnp.allclose(axis_emb, axis_f32, atol=0.35), "axis far from f32 ref"
    assert jnp.allclose(arg_emb, arg_f32, atol=0.35), "arg far from f32 ref"

    print("KERNEL_OK")
</pallas_src>

<mosaic_0001>
module attributes {stable_mosaic.version = 11 : i64} {
  func.func @entity_projection_kernel(%arg0: i32, %arg1: memref<256x128xbf16, #tpu.memory_space<vmem>>, %arg2: memref<256x128xbf16, #tpu.memory_space<vmem>>, %arg3: memref<256x128xbf16, #tpu.memory_space<vmem>>, %arg4: memref<256x128xbf16, #tpu.memory_space<vmem>>, %arg5: memref<256x128xbf16, #tpu.memory_space<vmem>>, %arg6: memref<256x128xbf16, #tpu.memory_space<vmem>>, %arg7: memref<256x256xbf16, #tpu.memory_space<vmem>>, %arg8: memref<1x256xf32, #tpu.memory_space<vmem>>, %arg9: memref<256x256xbf16, #tpu.memory_space<vmem>>, %arg10: memref<1x256xf32, #tpu.memory_space<vmem>>, %arg11: memref<256x256xbf16, #tpu.memory_space<vmem>>, %arg12: memref<1x256xf32, #tpu.memory_space<vmem>>, %arg13: memref<256x128xf32, #tpu.memory_space<vmem>>, %arg14: memref<256x128xf32, #tpu.memory_space<vmem>>) attributes {dimension_semantics = [#tpu.dimension_semantics<parallel>], iteration_bounds = array<i64: 2>, scalar_prefetch = 0 : i64, scratch_operands = 0 : i64, tpu.core_type = #tpu.core_type<tc>, window_params = [{transform_indices = @transform_0, window_bounds = array<i64: 256, 128>}, {transform_indices = @transform_1, window_bounds = array<i64: 256, 128>}, {transform_indices = @transform_2, window_bounds = array<i64: 256, 128>}, {transform_indices = @transform_3, window_bounds = array<i64: 256, 128>}, {transform_indices = @transform_4, window_bounds = array<i64: 256, 128>}, {transform_indices = @transform_5, window_bounds = array<i64: 256, 128>}, {pipeline_mode = #tpu.pipeline_mode<synchronous>, transform_indices = @transform_6, window_bounds = array<i64: 256, 256>}, {pipeline_mode = #tpu.pipeline_mode<synchronous>, transform_indices = @transform_7, window_bounds = array<i64: 1, 256>}, {pipeline_mode = #tpu.pipeline_mode<synchronous>, transform_indices = @transform_8, window_bounds = array<i64: 256, 256>}, {pipeline_mode = #tpu.pipeline_mode<synchronous>, transform_indices = @transform_9, window_bounds = array<i64: 1, 256>}, {pipeline_mode = #tpu.pipeline_mode<synchronous>, transform_indices = @transform_10, window_bounds = array<i64: 256, 256>}, {pipeline_mode = #tpu.pipeline_mode<synchronous>, transform_indices = @transform_11, window_bounds = array<i64: 1, 256>}, {transform_indices = @transform_12, window_bounds = array<i64: 256, 128>}, {transform_indices = @transform_13, window_bounds = array<i64: 256, 128>}]} {
    %c0 = arith.constant 0 : index
    %c0_0 = arith.constant 0 : index
    %0 = vector.load %arg1[%c0, %c0_0] : memref<256x128xbf16, #tpu.memory_space<vmem>>, vector<256x128xbf16>
    %1 = arith.extf %0 : vector<256x128xbf16> to vector<256x128xf32>
    %c0_1 = arith.constant 0 : index
    %c0_2 = arith.constant 0 : index
    %2 = vector.load %arg3[%c0_1, %c0_2] : memref<256x128xbf16, #tpu.memory_space<vmem>>, vector<256x128xbf16>
    %3 = arith.extf %2 : vector<256x128xbf16> to vector<256x128xf32>
    %4 = arith.addf %1, %3 : vector<256x128xf32>
    %c0_3 = arith.constant 0 : index
    %c0_4 = arith.constant 0 : index
    %5 = vector.load %arg5[%c0_3, %c0_4] : memref<256x128xbf16, #tpu.memory_space<vmem>>, vector<256x128xbf16>
    %6 = arith.extf %5 : vector<256x128xbf16> to vector<256x128xf32>
    %7 = arith.addf %4, %6 : vector<256x128xf32>
    %c0_5 = arith.constant 0 : index
    %c0_6 = arith.constant 0 : index
    %8 = vector.load %arg2[%c0_5, %c0_6] : memref<256x128xbf16, #tpu.memory_space<vmem>>, vector<256x128xbf16>
    %9 = arith.extf %8 : vector<256x128xbf16> to vector<256x128xf32>
    %c0_7 = arith.constant 0 : index
    %c0_8 = arith.constant 0 : index
    %10 = vector.load %arg4[%c0_7, %c0_8] : memref<256x128xbf16, #tpu.memory_space<vmem>>, vector<256x128xbf16>
    %11 = arith.extf %10 : vector<256x128xbf16> to vector<256x128xf32>
    %12 = arith.addf %9, %11 : vector<256x128xf32>
    %c0_9 = arith.constant 0 : index
    %c0_10 = arith.constant 0 : index
    %13 = vector.load %arg6[%c0_9, %c0_10] : memref<256x128xbf16, #tpu.memory_space<vmem>>, vector<256x128xbf16>
    %14 = arith.extf %13 : vector<256x128xbf16> to vector<256x128xf32>
    %15 = arith.addf %12, %14 : vector<256x128xf32>
    %16 = tpu.concatenate %7, %15 in 1 : vector<256x128xf32>, vector<256x128xf32> -> vector<256x256xf32>
    %17 = arith.truncf %16 : vector<256x256xf32> to vector<256x256xbf16>
    %c0_11 = arith.constant 0 : index
    %c0_12 = arith.constant 0 : index
    %18 = vector.load %arg7[%c0_11, %c0_12] : memref<256x256xbf16, #tpu.memory_space<vmem>>, vector<256x256xbf16>
    %cst = arith.constant dense<0.000000e+00> : vector<256x256xf32>
    %19 = tpu.matmul %17, %18, %cst {dimension_numbers = #tpu.dot_dimension_numbers<[1], [0], [0], [1], [0, 0, 1, 1], [], []>} : vector<256x256xbf16>, vector<256x256xbf16>, vector<256x256xf32> -> vector<256x256xf32>
    %c0_13 = arith.constant 0 : index
    %c0_14 = arith.constant 0 : index
    %20 = vector.load %arg8[%c0_13, %c0_14] : memref<1x256xf32, #tpu.memory_space<vmem>>, vector<1x256xf32>
    %21 = vector.broadcast %20 : vector<1x256xf32> to vector<256x256xf32>
    %22 = arith.addf %19, %21 : vector<256x256xf32>
    %cst_15 = arith.constant 0.000000e+00 : f32
    %23 = vector.broadcast %cst_15 : f32 to vector<256x256xf32>
    %24 = arith.maximumf %22, %23 : vector<256x256xf32>
    %25 = arith.truncf %24 : vector<256x256xf32> to vector<256x256xbf16>
    %c0_16 = arith.constant 0 : index
    %c0_17 = arith.constant 0 : index
    %26 = vector.load %arg9[%c0_16, %c0_17] : memref<256x256xbf16, #tpu.memory_space<vmem>>, vector<256x256xbf16>
    %cst_18 = arith.constant dense<0.000000e+00> : vector<256x256xf32>
    %27 = tpu.matmul %25, %26, %cst_18 {dimension_numbers = #tpu.dot_dimension_numbers<[1], [0], [0], [1], [0, 0, 1, 1], [], []>} : vector<256x256xbf16>, vector<256x256xbf16>, vector<256x256xf32> -> vector<256x256xf32>
    %c0_19 = arith.constant 0 : index
    %c0_20 = arith.constant 0 : index
    %28 = vector.load %arg10[%c0_19, %c0_20] : memref<1x256xf32, #tpu.memory_space<vmem>>, vector<1x256xf32>
    %29 = vector.broadcast %28 : vector<1x256xf32> to vector<256x256xf32>
    %30 = arith.addf %27, %29 : vector<256x256xf32>
    %cst_21 = arith.constant 0.000000e+00 : f32
    %31 = vector.broadcast %cst_21 : f32 to vector<256x256xf32>
    %32 = arith.maximumf %30, %31 : vector<256x256xf32>
    %33 = arith.truncf %32 : vector<256x256xf32> to vector<256x256xbf16>
    %c0_22 = arith.constant 0 : index
    %c0_23 = arith.constant 0 : index
    %34 = vector.load %arg11[%c0_22, %c0_23] : memref<256x256xbf16, #tpu.memory_space<vmem>>, vector<256x256xbf16>
    %cst_24 = arith.constant dense<0.000000e+00> : vector<256x256xf32>
    %35 = tpu.matmul %33, %34, %cst_24 {dimension_numbers = #tpu.dot_dimension_numbers<[1], [0], [0], [1], [0, 0, 1, 1], [], []>} : vector<256x256xbf16>, vector<256x256xbf16>, vector<256x256xf32> -> vector<256x256xf32>
    %c0_25 = arith.constant 0 : index
    %c0_26 = arith.constant 0 : index
    %36 = vector.load %arg12[%c0_25, %c0_26] : memref<1x256xf32, #tpu.memory_space<vmem>>, vector<1x256xf32>
    %37 = vector.broadcast %36 : vector<1x256xf32> to vector<256x256xf32>
    %38 = arith.addf %35, %37 : vector<256x256xf32>
    %39 = vector.extract_strided_slice %38 {offsets = [0, 0], sizes = [256, 128], strides = [1, 1]} : vector<256x256xf32> to vector<256x128xf32>
    %40 = vector.extract_strided_slice %38 {offsets = [0, 128], sizes = [256, 128], strides = [1, 1]} : vector<256x256xf32> to vector<256x128xf32>
    %41 = math.tanh %39 : vector<256x128xf32>
    %cst_27 = arith.constant 3.14159274 : f32
    %42 = vector.broadcast %cst_27 : f32 to vector<256x128xf32>
    %43 = arith.mulf %41, %42 : vector<256x128xf32>
    %c0_28 = arith.constant 0 : index
    %c0_29 = arith.constant 0 : index
    %44 = vector.load %arg13[%c0_28, %c0_29] : memref<256x128xf32, #tpu.memory_space<vmem>>, vector<256x128xf32>
    tpu.vector_store %arg13[%c0_28, %c0_29], %43 {strides = array<i32>} : memref<256x128xf32, #tpu.memory_space<vmem>>, vector<256x128xf32>,
    %cst_30 = arith.constant 2.000000e+00 : f32
    %45 = vector.broadcast %cst_30 : f32 to vector<256x128xf32>
    %46 = arith.mulf %45, %40 : vector<256x128xf32>
    %47 = math.tanh %46 : vector<256x128xf32>
    %cst_31 = arith.constant 1.57079637 : f32
    %48 = vector.broadcast %cst_31 : f32 to vector<256x128xf32>
    %49 = arith.mulf %47, %48 : vector<256x128xf32>
    %cst_32 = arith.constant 1.57079637 : f32
    %50 = vector.broadcast %cst_32 : f32 to vector<256x128xf32>
    %51 = arith.addf %49, %50 : vector<256x128xf32>
    %c0_33 = arith.constant 0 : index
    %c0_34 = arith.constant 0 : index
    %52 = vector.load %arg14[%c0_33, %c0_34] : memref<256x128xf32, #tpu.memory_space<vmem>>, vector<256x128xf32>
    tpu.vector_store %arg14[%c0_33, %c0_34], %51 {strides = array<i32>} : memref<256x128xf32, #tpu.memory_space<vmem>>, vector<256x128xf32>,
    return
  }
  func.func @transform_0(%arg0: i32) -> (i32, i32) {
    %c0_i32 = arith.constant 0 : i32
    %c0_i32_0 = arith.constant 0 : i32
    return %arg0, %c0_i32 : i32, i32
  }
  func.func @transform_1(%arg0: i32) -> (i32, i32) {
    %c0_i32 = arith.constant 0 : i32
    %c0_i32_0 = arith.constant 0 : i32
    return %arg0, %c0_i32 : i32, i32
  }
  func.func @transform_2(%arg0: i32) -> (i32, i32) {
    %c0_i32 = arith.constant 0 : i32
    %c0_i32_0 = arith.constant 0 : i32
    return %arg0, %c0_i32 : i32, i32
  }
  func.func @transform_3(%arg0: i32) -> (i32, i32) {
    %c0_i32 = arith.constant 0 : i32
    %c0_i32_0 = arith.constant 0 : i32
    return %arg0, %c0_i32 : i32, i32
  }
  func.func @transform_4(%arg0: i32) -> (i32, i32) {
    %c0_i32 = arith.constant 0 : i32
    %c0_i32_0 = arith.constant 0 : i32
    return %arg0, %c0_i32 : i32, i32
  }
  func.func @transform_5(%arg0: i32) -> (i32, i32) {
    %c0_i32 = arith.constant 0 : i32
    %c0_i32_0 = arith.constant 0 : i32
    return %arg0, %c0_i32 : i32, i32
  }
  func.func @transform_6(%arg0: i32) -> (i32, i32) {
    %c0_i32 = arith.constant 0 : i32
    %c0_i32_0 = arith.constant 0 : i32
    %c0_i32_1 = arith.constant 0 : i32
    return %c0_i32, %c0_i32_0 : i32, i32
  }
  func.func @transform_7(%arg0: i32) -> (i32, i32) {
    %c0_i32 = arith.constant 0 : i32
    %c0_i32_0 = arith.constant 0 : i32
    %c0_i32_1 = arith.constant 0 : i32
    return %c0_i32, %c0_i32_0 : i32, i32
  }
  func.func @transform_8(%arg0: i32) -> (i32, i32) {
    %c0_i32 = arith.constant 0 : i32
    %c0_i32_0 = arith.constant 0 : i32
    %c0_i32_1 = arith.constant 0 : i32
    return %c0_i32, %c0_i32_0 : i32, i32
  }
  func.func @transform_9(%arg0: i32) -> (i32, i32) {
    %c0_i32 = arith.constant 0 : i32
    %c0_i32_0 = arith.constant 0 : i32
    %c0_i32_1 = arith.constant 0 : i32
    return %c0_i32, %c0_i32_0 : i32, i32
  }
  func.func @transform_10(%arg0: i32) -> (i32, i32) {
    %c0_i32 = arith.constant 0 : i32
    %c0_i32_0 = arith.constant 0 : i32
    %c0_i32_1 = arith.constant 0 : i32
    return %c0_i32, %c0_i32_0 : i32, i32
  }
  func.func @transform_11(%arg0: i32) -> (i32, i32) {
    %c0_i32 = arith.constant 0 : i32
    %c0_i32_0 = arith.constant 0 : i32
    %c0_i32_1 = arith.constant 0 : i32
    return %c0_i32, %c0_i32_0 : i32, i32
  }
  func.func @transform_12(%arg0: i32) -> (i32, i32) {
    %c0_i32 = arith.constant 0 : i32
    %c0_i32_0 = arith.constant 0 : i32
    return %arg0, %c0_i32 : i32, i32
  }
  func.func @transform_13(%arg0: i32) -> (i32, i32) {
    %c0_i32 = arith.constant 0 : i32
    %c0_i32_0 = arith.constant 0 : i32
    return %arg0, %c0_i32 : i32, i32
  }
}

</mosaic_0001>

<llo_original>
// kernel: tpu_custom_call.1
$region0: #{tpu_custom_call.1}
  #allocation0 [shape = 'u32[]', space=smem, size = 0x4, offset = 0x4, fixed_abs, tag = 'smem constant byte address 0x4 - core index']
  #allocation1 [shape = 'u32[144,128]{1,0:T(1,128)}', space=vmem, size = 0x12000, scoped, tag = 'internal scratch']
  %s0 = inlined_call_operand.hbm [shape: bf16[300,128], index: 0, kind: input, shape index: {}]
  %s1 = inlined_call_operand.hbm [shape: bf16[300,128], index: 1, kind: input, shape index: {}]
  %s2 = inlined_call_operand.hbm [shape: bf16[300,128], index: 2, kind: input, shape index: {}]
  %s3 = inlined_call_operand.hbm [shape: bf16[300,128], index: 3, kind: input, shape index: {}]
  %s4 = inlined_call_operand.hbm [shape: bf16[300,128], index: 4, kind: input, shape index: {}]
  %s5 = inlined_call_operand.hbm [shape: bf16[300,128], index: 5, kind: input, shape index: {}]
  %s6 = inlined_call_operand.hbm [shape: bf16[256,256], index: 6, kind: input, shape index: {}]
  %s7 = inlined_call_operand.vmem [shape: f32[1,256], index: 7, kind: input, shape index: {}]
  %s8 = inlined_call_operand.hbm [shape: bf16[256,256], index: 8, kind: input, shape index: {}]
  %s9 = inlined_call_operand.vmem [shape: f32[1,256], index: 9, kind: input, shape index: {}]
  %s10 = inlined_call_operand.hbm [shape: bf16[256,256], index: 10, kind: input, shape index: {}]
  %s11 = inlined_call_operand.vmem [shape: f32[1,256], index: 11, kind: input, shape index: {}]
  %s12 = inlined_call_operand.hbm [shape: f32[300,128], index: 12, kind: output, shape index: {0}]
  %s13 = inlined_call_operand.hbm [shape: f32[300,128], index: 13, kind: output, shape index: {1}]
  %14 = xla_tuple %s12, %s13
  %s15 = sld [smem:[#allocation0]]
  $region125: #{tpu_custom_call.1} parent=0
    _
  %s17 = ssub.s32 1, %s15
  %s18 = scalar_select 0, %s17, %s15
  $region1: #{tpu_custom_call.1} parent=0
    #allocation2 [shape = 'u8[131072]{0}', space=vmem, size = 0x20000, scoped, tag = 'input window, operand 0']
    #allocation3 [shape = 's32[2]{0}', space=sflag, size = 0x8, scoped, tag = 'scoped memory for tpu_custom_call.1']
    #allocation4 [shape = 's32[2]{0}', space=sflag, size = 0x8, scoped, tag = 'scoped memory for tpu_custom_call.1']
    #allocation5 [shape = 'u8[131072]{0}', space=vmem, size = 0x20000, scoped, tag = 'input window, operand 1']
    #allocation6 [shape = 's32[2]{0}', space=sflag, size = 0x8, scoped, tag = 'scoped memory for tpu_custom_call.1']
    #allocation7 [shape = 'u8[131072]{0}', space=vmem, size = 0x20000, scoped, tag = 'input window, operand 2']
    #allocation8 [shape = 'u8[131072]{0}', space=vmem, size = 0x20000, scoped, tag = 'input window, operand 3']
    #allocation9 [shape = 's32[2]{0}', space=sflag, size = 0x8, scoped, tag = 'scoped memory for tpu_custom_call.1']
    #allocation10 [shape = 'u8[131072]{0}', space=vmem, size = 0x20000, scoped, tag = 'input window, operand 4']
    #allocation11 [shape = 'u8[131072]{0}', space=vmem, size = 0x20000, scoped, tag = 'input window, operand 5']
    #allocation12 [shape = 's32[2]{0}', space=sflag, size = 0x8, scoped, tag = 'scoped memory for tpu_custom_call.1']
    #allocation13 [shape = 'u8[131072]{0}', space=vmem, size = 0x20000, scoped, tag = 'input window, operand 6, single buffered']
    #allocation14 [shape = 'u8[131072]{0}', space=vmem, size = 0x20000, scoped, tag = 'input window, operand 8, single buffered']
    #allocation15 [shape = 's32[1]{0}', space=sflag, size = 0x4, scoped, tag = 'scoped memory for tpu_custom_call.1']
    #allocation16 [shape = 'u8[131072]{0}', space=vmem, size = 0x20000, scoped, tag = 'input window, operand 10, single buffered']
    #allocation17 [shape = 'u8[262144]{0}', space=vmem, size = 0x40000, scoped, tag = 'output window, operand 0']
    #allocation18 [shape = 'u8[262144]{0}', space=vmem, size = 0x40000, scoped, tag = 'output window, operand 1']
    #allocation19 [shape = 's32[2]{0}', space=sflag, size = 0x8, scoped, tag = 'scoped memory for tpu_custom_call.1']
    %19 = vsyncpa [#allocation3], 0
    %s20 = scalar_lea.sflag [#allocation3], 1
    %21 = vsyncpa %s20, 0
    %22 = vsyncpa [#allocation6], 0
    %s23 = scalar_lea.sflag [#allocation6], 1
    %24 = vsyncpa %s23, 0
    %25 = vsyncpa [#allocation9], 0
    %s26 = scalar_lea.sflag [#allocation9], 1
    %27 = vsyncpa %s26, 0
    %28 = vsyncpa [#allocation12], 0
    %s29 = scalar_lea.sflag [#allocation12], 1
    %30 = vsyncpa %s29, 0
    %31 = vsyncpa [#allocation15], 0
    %32 = vsyncpa [#allocation4], 0
    %s33 = scalar_lea.sflag [#allocation4], 1
    %34 = vsyncpa %s33, 0
    %35 = vsyncpa [#allocation19], 0
    %s36 = scalar_lea.sflag [#allocation19], 1
    %37 = vsyncpa %s36, 0
    loop: start=0, step=1, limit=4
    $region2: #{tpu_custom_call.1} parent=1 // loop_pre_header
      _
    $region3: #{tpu_custom_call.1} parent=1 // loop_header
      %s39 = sphi 0, %s43
      %p40 = scmp.ge.s32.totalorder %s39, 4
      %s49 = sphi 0, %s51
      %s52 = sphi 0, %s49
      %s53 = sphi 0, %s52
      %s69 = sphi 0, %s53
      %s75 = sphi 0, %s77
      %s78 = sphi 0, %s75
      %s79 = sphi 0, %s78
      %s95 = sphi 0, %s79
      %s101 = sphi 0, %s103
      %s104 = sphi 0, %s101
      %s105 = sphi 0, %s104
      %s121 = sphi 0, %s105
      %s127 = sphi 0, %s129
      %s130 = sphi 0, %s127
      %s131 = sphi 0, %s130
      %s147 = sphi 0, %s131
      %s153 = sphi 0, %s155
      %s156 = sphi 0, %s153
      %s157 = sphi 0, %s156
      %s173 = sphi 0, %s157
      %s179 = sphi 0, %s181
      %s182 = sphi 0, %s179
      %s183 = sphi 0, %s182
      %s199 = sphi 0, %s183
      %s203 = sphi 0, %s203
      %s205 = sphi 0, %s203
      %s206 = sphi 0, %s205
      %s220 = sphi 0, %s206
      %s224 = sphi 0, %s224
      %s226 = sphi 0, %s224
      %s227 = sphi 0, %s226
      %s241 = sphi 0, %s227
      %s245 = sphi 0, %s245
      %s247 = sphi 0, %s245
      %s248 = sphi 0, %s247
      %s262 = sphi 0, %s248
      %s266 = sphi 0, %s266
      %s268 = sphi 0, %s266
      %s269 = sphi 0, %s268
      %s283 = sphi 0, %s269
      %s287 = sphi 0, %s287
      %s289 = sphi 0, %s287
      %s290 = sphi 0, %s289
      %s304 = sphi 0, %s290
      %s308 = sphi 0, %s308
      %s310 = sphi 0, %s308
      %s311 = sphi 0, %s310
      %s325 = sphi 0, %s311
      %s331 = sphi 0, %s333
      %s334 = sphi 0, %s331
      %s335 = sphi 0, %s334
      %s351 = sphi 0, %s335
      %s357 = sphi 0, %s359
      %s360 = sphi 0, %s357
      %s361 = sphi 0, %s360
      %s377 = sphi 0, %s361
    $region4: #{tpu_custom_call.1} parent=1 // loop_header_branch
      %42 = sbr.rel (%p40) target = $region8
    $region5: #{tpu_custom_call.1} parent=1 // loop_body
      %s44 = ssub.s32 %s39, 1
      %s45 = ssub.s32 %s39, 2
      %s46 = sadd.s32 %s39, 1
      %s47 = ssub.s32 %s39, %s46
      %p48 = scmp.eq.s32.totalorder %s47, 0
      %s50 = sadd.s32 %s49, 1
      %s51 = scalar_select %p48, %s49, %s50
      %p54 = pneg %p48
      %p55 = scmp.eq.s32.totalorder %s39, 1
      %p56 = por %p54, %p55
      %p57 = scmp.ne.s32.totalorder %s49, %s52
      %p58 = scmp.eq.s32.totalorder %s39, 0
      %p59 = por %p57, %p58
      %p60 = scmp.ne.s32.totalorder %s49, %s52
      %p61 = scmp.eq.s32.totalorder %s44, 1
      %p62 = por %p60, %p61
      %p63 = scmp.ne.s32.totalorder %s52, %s53
      %p64 = scmp.eq.s32.totalorder %s44, 0
      %p65 = por %p63, %p64
      %p66 = scmp.ne.s32.totalorder %s52, %s53
      %p67 = scmp.eq.s32.totalorder %s45, 1
      %p68 = por %p66, %p67
      %p70 = scmp.ne.s32.totalorder %s53, %s69
      %p71 = scmp.eq.s32.totalorder %s45, 0
      %p72 = por %p70, %p71
      %s73 = ssub.s32 %s39, %s46
      %p74 = scmp.eq.s32.totalorder %s73, 0
      %s76 = sadd.s32 %s75, 1
      %s77 = scalar_select %p74, %s75, %s76
      %p80 = pneg %p74
      %p81 = scmp.eq.s32.totalorder %s39, 1
      %p82 = por %p80, %p81
      %p83 = scmp.ne.s32.totalorder %s75, %s78
      %p84 = scmp.eq.s32.totalorder %s39, 0
      %p85 = por %p83, %p84
      %p86 = scmp.ne.s32.totalorder %s75, %s78
      %p87 = scmp.eq.s32.totalorder %s44, 1
      %p88 = por %p86, %p87
      %p89 = scmp.ne.s32.totalorder %s78, %s79
      %p90 = scmp.eq.s32.totalorder %s44, 0
      %p91 = por %p89, %p90
      %p92 = scmp.ne.s32.totalorder %s78, %s79
      %p93 = scmp.eq.s32.totalorder %s45, 1
      %p94 = por %p92, %p93
      %p96 = scmp.ne.s32.totalorder %s79, %s95
      %p97 = scmp.eq.s32.totalorder %s45, 0
      %p98 = por %p96, %p97
      %s99 = ssub.s32 %s39, %s46
      %p100 = scmp.eq.s32.totalorder %s99, 0
      %s102 = sadd.s32 %s101, 1
      %s103 = scalar_select %p100, %s101, %s102
      %p106 = pneg %p100
      %p107 = scmp.eq.s32.totalorder %s39, 1
      %p108 = por %p106, %p107
      %p109 = scmp.ne.s32.totalorder %s101, %s104
      %p110 = scmp.eq.s32.totalorder %s39, 0
      %p111 = por %p109, %p110
      %p112 = scmp.ne.s32.totalorder %s101, %s104
      %p113 = scmp.eq.s32.totalorder %s44, 1
      %p114 = por %p112, %p113
      %p115 = scmp.ne.s32.totalorder %s104, %s105
      %p116 = scmp.eq.s32.totalorder %s44, 0
      %p117 = por %p115, %p116
      %p118 = scmp.ne.s32.totalorder %s104, %s105
      %p119 = scmp.eq.s32.totalorder %s45, 1
      %p120 = por %p118, %p119
      %p122 = scmp.ne.s32.totalorder %s105, %s121
      %p123 = scmp.eq.s32.totalorder %s45, 0
      %p124 = por %p122, %p123
      %s125 = ssub.s32 %s39, %s46
      %p126 = scmp.eq.s32.totalorder %s125, 0
      %s128 = sadd.s32 %s127, 1
      %s129 = scalar_select %p126, %s127, %s128
      %p132 = pneg %p126
      %p133 = scmp.eq.s32.totalorder %s39, 1
      %p134 = por %p132, %p133
      %p135 = scmp.ne.s32.totalorder %s127, %s130
      %p136 = scmp.eq.s32.totalorder %s39, 0
      %p137 = por %p135, %p136
      %p138 = scmp.ne.s32.totalorder %s127, %s130
      %p139 = scmp.eq.s32.totalorder %s44, 1
      %p140 = por %p138, %p139
      %p141 = scmp.ne.s32.totalorder %s130, %s131
      %p142 = scmp.eq.s32.totalorder %s44, 0
      %p143 = por %p141, %p142
      %p144 = scmp.ne.s32.totalorder %s130, %s131
      %p145 = scmp.eq.s32.totalorder %s45, 1
      %p146 = por %p144, %p145
      %p148 = scmp.ne.s32.totalorder %s131, %s147
      %p149 = scmp.eq.s32.totalorder %s45, 0
      %p150 = por %p148, %p149
      %s151 = ssub.s32 %s39, %s46
      %p152 = scmp.eq.s32.totalorder %s151, 0
      %s154 = sadd.s32 %s153, 1
      %s155 = scalar_select %p152, %s153, %s154
      %p158 = pneg %p152
      %p159 = scmp.eq.s32.totalorder %s39, 1
      %p160 = por %p158, %p159
      %p161 = scmp.ne.s32.totalorder %s153, %s156
      %p162 = scmp.eq.s32.totalorder %s39, 0
      %p163 = por %p161, %p162
      %p164 = scmp.ne.s32.totalorder %s153, %s156
      %p165 = scmp.eq.s32.totalorder %s44, 1
      %p166 = por %p164, %p165
      %p167 = scmp.ne.s32.totalorder %s156, %s157
      %p168 = scmp.eq.s32.totalorder %s44, 0
      %p169 = por %p167, %p168
      %p170 = scmp.ne.s32.totalorder %s156, %s157
      %p171 = scmp.eq.s32.totalorder %s45, 1
      %p172 = por %p170, %p171
      %p174 = scmp.ne.s32.totalorder %s157, %s173
      %p175 = scmp.eq.s32.totalorder %s45, 0
      %p176 = por %p174, %p175
      %s177 = ssub.s32 %s39, %s46
      %p178 = scmp.eq.s32.totalorder %s177, 0
      %s180 = sadd.s32 %s179, 1
      %s181 = scalar_select %p178, %s179, %s180
      %p184 = pneg %p178
      %p185 = scmp.eq.s32.totalorder %s39, 1
      %p186 = por %p184, %p185
      %p187 = scmp.ne.s32.totalorder %s179, %s182
      %p188 = scmp.eq.s32.totalorder %s39, 0
      %p189 = por %p187, %p188
      %p190 = scmp.ne.s32.totalorder %s179, %s182
      %p191 = scmp.eq.s32.totalorder %s44, 1
      %p192 = por %p190, %p191
      %p193 = scmp.ne.s32.totalorder %s182, %s183
      %p194 = scmp.eq.s32.totalorder %s44, 0
      %p195 = por %p193, %p194
      %p196 = scmp.ne.s32.totalorder %s182, %s183
      %p197 = scmp.eq.s32.totalorder %s45, 1
      %p198 = por %p196, %p197
      %p200 = scmp.ne.s32.totalorder %s183, %s199
      %p201 = scmp.eq.s32.totalorder %s45, 0
      %p202 = por %p200, %p201
      %s204 = sadd.s32 %s203, 1
      %p207 = scmp.eq.s32.totalorder %s39, 1
      %p208 = scmp.ne.s32.totalorder %s203, %s205
      %p209 = scmp.eq.s32.totalorder %s39, 0
      %p210 = por %p208, %p209
      %p211 = scmp.ne.s32.totalorder %s203, %s205
      %p212 = scmp.eq.s32.totalorder %s44, 1
      %p213 = por %p211, %p212
      %p214 = scmp.ne.s32.totalorder %s205, %s206
      %p215 = scmp.eq.s32.totalorder %s44, 0
      %p216 = por %p214, %p215
      %p217 = scmp.ne.s32.totalorder %s205, %s206
      %p218 = scmp.eq.s32.totalorder %s45, 1
      %p219 = por %p217, %p218
      %p221 = scmp.ne.s32.totalorder %s206, %s220
      %p222 = scmp.eq.s32.totalorder %s45, 0
      %p223 = por %p221, %p222
      %s225 = sadd.s32 %s224, 1
      %p228 = scmp.eq.s32.totalorder %s39, 1
      %p229 = scmp.ne.s32.totalorder %s224, %s226
      %p230 = scmp.eq.s32.totalorder %s39, 0
      %p231 = por %p229, %p230
      %p232 = scmp.ne.s32.totalorder %s224, %s226
      %p233 = scmp.eq.s32.totalorder %s44, 1
      %p234 = por %p232, %p233
      %p235 = scmp.ne.s32.totalorder %s226, %s227
      %p236 = scmp.eq.s32.totalorder %s44, 0
      %p237 = por %p235, %p236
      %p238 = scmp.ne.s32.totalorder %s226, %s227
      %p239 = scmp.eq.s32.totalorder %s45, 1
      %p240 = por %p238, %p239
      %p242 = scmp.ne.s32.totalorder %s227, %s241
      %p243 = scmp.eq.s32.totalorder %s45, 0
      %p244 = por %p242, %p243
      %s246 = sadd.s32 %s245, 1
      %p249 = scmp.eq.s32.totalorder %s39, 1
      %p250 = scmp.ne.s32.totalorder %s245, %s247
      %p251 = scmp.eq.s32.totalorder %s39, 0
      %p252 = por %p250, %p251
      %p253 = scmp.ne.s32.totalorder %s245, %s247
      %p254 = scmp.eq.s32.totalorder %s44, 1
      %p255 = por %p253, %p254
      %p256 = scmp.ne.s32.totalorder %s247, %s248
      %p257 = scmp.eq.s32.totalorder %s44, 0
      %p258 = por %p256, %p257
      %p259 = scmp.ne.s32.totalorder %s247, %s248
      %p260 = scmp.eq.s32.totalorder %s45, 1
      %p261 = por %p259, %p260
      %p263 = scmp.ne.s32.totalorder %s248, %s262
      %p264 = scmp.eq.s32.totalorder %s45, 0
      %p265 = por %p263, %p264
      %s267 = sadd.s32 %s266, 1
      %p270 = scmp.eq.s32.totalorder %s39, 1
      %p271 = scmp.ne.s32.totalorder %s266, %s268
      %p272 = scmp.eq.s32.totalorder %s39, 0
      %p273 = por %p271, %p272
      %p274 = scmp.ne.s32.totalorder %s266, %s268
      %p275 = scmp.eq.s32.totalorder %s44, 1
      %p276 = por %p274, %p275
      %p277 = scmp.ne.s32.totalorder %s268, %s269
      %p278 = scmp.eq.s32.totalorder %s44, 0
      %p279 = por %p277, %p278
      %p280 = scmp.ne.s32.totalorder %s268, %s269
      %p281 = scmp.eq.s32.totalorder %s45, 1
      %p282 = por %p280, %p281
      %p284 = scmp.ne.s32.totalorder %s269, %s283
      %p285 = scmp.eq.s32.totalorder %s45, 0
      %p286 = por %p284, %p285
      %s288 = sadd.s32 %s287, 1
      %p291 = scmp.eq.s32.totalorder %s39, 1
      %p292 = scmp.ne.s32.totalorder %s287, %s289
      %p293 = scmp.eq.s32.totalorder %s39, 0
      %p294 = por %p292, %p293
      %p295 = scmp.ne.s32.totalorder %s287, %s289
      %p296 = scmp.eq.s32.totalorder %s44, 1
      %p297 = por %p295, %p296
      %p298 = scmp.ne.s32.totalorder %s289, %s290
      %p299 = scmp.eq.s32.totalorder %s44, 0
      %p300 = por %p298, %p299
      %p301 = scmp.ne.s32.totalorder %s289, %s290
      %p302 = scmp.eq.s32.totalorder %s45, 1
      %p303 = por %p301, %p302
      %p305 = scmp.ne.s32.totalorder %s290, %s304
      %p306 = scmp.eq.s32.totalorder %s45, 0
      %p307 = por %p305, %p306
      %s309 = sadd.s32 %s308, 1
      %p312 = scmp.eq.s32.totalorder %s39, 1
      %p313 = scmp.ne.s32.totalorder %s308, %s310
      %p314 = scmp.eq.s32.totalorder %s39, 0
      %p315 = por %p313, %p314
      %p316 = scmp.ne.s32.totalorder %s308, %s310
      %p317 = scmp.eq.s32.totalorder %s44, 1
      %p318 = por %p316, %p317
      %p319 = scmp.ne.s32.totalorder %s310, %s311
      %p320 = scmp.eq.s32.totalorder %s44, 0
      %p321 = por %p319, %p320
      %p322 = scmp.ne.s32.totalorder %s310, %s311
      %p323 = scmp.eq.s32.totalorder %s45, 1
      %p324 = por %p322, %p323
      %p326 = scmp.ne.s32.totalorder %s311, %s325
      %p327 = scmp.eq.s32.totalorder %s45, 0
      %p328 = por %p326, %p327
      %s329 = ssub.s32 %s39, %s46
      %p330 = scmp.eq.s32.totalorder %s329, 0
      %s332 = sadd.s32 %s331, 1
      %s333 = scalar_select %p330, %s331, %s332
      %p336 = pneg %p330
      %p337 = scmp.eq.s32.totalorder %s39, 1
      %p338 = por %p336, %p337
      %p339 = scmp.ne.s32.totalorder %s331, %s334
      %p340 = scmp.eq.s32.totalorder %s39, 0
      %p341 = por %p339, %p340
      %p342 = scmp.ne.s32.totalorder %s331, %s334
      %p343 = scmp.eq.s32.totalorder %s44, 1
      %p344 = por %p342, %p343
      %p345 = scmp.ne.s32.totalorder %s334, %s335
      %p346 = scmp.eq.s32.totalorder %s44, 0
      %p347 = por %p345, %p346
      %p348 = scmp.ne.s32.totalorder %s334, %s335
      %p349 = scmp.eq.s32.totalorder %s45, 1
      %p350 = por %p348, %p349
      %p352 = scmp.ne.s32.totalorder %s335, %s351
      %p353 = scmp.eq.s32.totalorder %s45, 0
      %p354 = por %p352, %p353
      %s355 = ssub.s32 %s39, %s46
      %p356 = scmp.eq.s32.totalorder %s355, 0
      %s358 = sadd.s32 %s357, 1
      %s359 = scalar_select %p356, %s357, %s358
      %p362 = pneg %p356
      %p363 = scmp.eq.s32.totalorder %s39, 1
      %p364 = por %p362, %p363
      %p365 = scmp.ne.s32.totalorder %s357, %s360
      %p366 = scmp.eq.s32.totalorder %s39, 0
      %p367 = por %p365, %p366
      %p368 = scmp.ne.s32.totalorder %s357, %s360
      %p369 = scmp.eq.s32.totalorder %s44, 1
      %p370 = por %p368, %p369
      %p371 = scmp.ne.s32.totalorder %s360, %s361
      %p372 = scmp.eq.s32.totalorder %s44, 0
      %p373 = por %p371, %p372
      %p374 = scmp.ne.s32.totalorder %s360, %s361
      %p375 = scmp.eq.s32.totalorder %s45, 1
      %p376 = por %p374, %p375
      %p378 = scmp.ne.s32.totalorder %s361, %s377
      %p379 = scmp.eq.s32.totalorder %s45, 0
      %p380 = por %p378, %p379
      %p381 = scmp.le.s32.totalorder 1, %s39
      %p382 = scmp.lt.s32.totalorder %s39, 3
      %p383 = pnand %p381, %p382
      %p384 = pneg %p383
      // Predicated region
      $region9: #{tpu_custom_call.1} parent=5 // pred_check
        _
      $region10: #{tpu_custom_call.1} parent=5 // pred_check_branch
        %386 = sbr.rel (%p383) target = $region12
      $region11: #{tpu_custom_call.1} parent=5 // pred_region
        %s387 = ssub.s32 %s39, 1
        // Predicated region
        $region13: #{tpu_custom_call.1} parent=11 // pred_check
          %p388 = pneg %p216
        $region14: #{tpu_custom_call.1} parent=11 // pred_check_branch
          %390 = sbr.rel (%p388) target = $region16
        $region15: #{tpu_custom_call.1} parent=11 // pred_region
          %s392 = ssub.s32 4096, 4096
          %393 = vsyncadd [#allocation12], %s392
          %s394 = sshll.u32 [#allocation13], 4
          %s395 = int_to_ptr.vmem [resolvable:$true] %s394
          %400 = dma.hbm_to_vmem [thread:$0]  %s6, 4096, %s395, [#allocation12], 128, 128, 8
        $region16: #{tpu_custom_call.1} parent=11 // pred_fallthru
          _
        // Predicated region
        $region17: #{tpu_custom_call.1} parent=11 // pred_check
          %p401 = pneg %p237
        $region18: #{tpu_custom_call.1} parent=11 // pred_check_branch
          %403 = sbr.rel (%p401) target = $region20
        $region19: #{tpu_custom_call.1} parent=11 // pred_region
          _
        $region20: #{tpu_custom_call.1} parent=11 // pred_fallthru
          _
        // Predicated region
        $region21: #{tpu_custom_call.1} parent=11 // pred_check
          %p404 = pneg %p258
        $region22: #{tpu_custom_call.1} parent=11 // pred_check_branch
          %406 = sbr.rel (%p404) target = $region24
        $region23: #{tpu_custom_call.1} parent=11 // pred_region
          %s408 = ssub.s32 4096, 4096
          %409 = vsyncadd [#allocation15], %s408
          %s410 = sshll.u32 [#allocation14], 4
          %s411 = int_to_ptr.vmem [resolvable:$true] %s410
          %416 = dma.hbm_to_vmem [thread:$0]  %s8, 4096, %s411, [#allocation15], 128, 128, 8
        $region24: #{tpu_custom_call.1} parent=11 // pred_fallthru
          _
        // Predicated region
        $region25: #{tpu_custom_call.1} parent=11 // pred_check
          %p417 = pneg %p279
        $region26: #{tpu_custom_call.1} parent=11 // pred_check_branch
          %419 = sbr.rel (%p417) target = $region28
        $region27: #{tpu_custom_call.1} parent=11 // pred_region
          _
        $region28: #{tpu_custom_call.1} parent=11 // pred_fallthru
          _
        // Predicated region
        $region29: #{tpu_custom_call.1} parent=11 // pred_check
          %p420 = pneg %p300
        $region30: #{tpu_custom_call.1} parent=11 // pred_check_branch
          %422 = sbr.rel (%p420) target = $region32
        $region31: #{tpu_custom_call.1} parent=11 // pred_region
          %s424 = ssub.s32 4096, 4096
          %425 = vsyncadd [#allocation15], %s424
          %s426 = sshll.u32 [#allocation16], 4
          %s427 = int_to_ptr.vmem [resolvable:$true] %s426
          %432 = dma.hbm_to_vmem [thread:$0]  %s10, 4096, %s427, [#allocation15], 128, 128, 8
        $region32: #{tpu_custom_call.1} parent=11 // pred_fallthru
          _
        // Predicated region
        $region33: #{tpu_custom_call.1} parent=11 // pred_check
          %p433 = pneg %p321
        $region34: #{tpu_custom_call.1} parent=11 // pred_check_branch
          %435 = sbr.rel (%p433) target = $region36
        $region35: #{tpu_custom_call.1} parent=11 // pred_region
          _
        $region36: #{tpu_custom_call.1} parent=11 // pred_fallthru
          _
      $region12: #{tpu_custom_call.1} parent=5 // pred_fallthru
        _
      %p436 = scmp.lt.s32.totalorder %s39, 2
      // Predicated region
      $region37: #{tpu_custom_call.1} parent=5 // pred_check
        %p437 = pneg %p436
      $region38: #{tpu_custom_call.1} parent=5 // pred_check_branch
        %439 = sbr.rel (%p437) target = $region40
      $region39: #{tpu_custom_call.1} parent=5 // pred_region
        // Predicated region
        $region41: #{tpu_custom_call.1} parent=39 // pred_check
          %p440 = pneg %p59
        $region42: #{tpu_custom_call.1} parent=39 // pred_check_branch
          %442 = sbr.rel (%p440) target = $region44
        $region43: #{tpu_custom_call.1} parent=39 // pred_region
          %s443 = sand.u32 %s49, 1
          %s444 = scalar_lea.sflag [#allocation3], %s443
          %s445 = sand.u32 %s49, 1
          %s446 = smul.addr %s445, 128
          %s447 = scalar_lea.vmem [#allocation2], %s446
          %s448 = smul.u32 32, %s39
          %s449 = ssub.s32 38, %s448
          %p450 = scmp.lt.s32.totalorder %s449, 32
          %s451 = scalar_select %p450, %s449, 32
          %s452 = smul.u32 64, %s451
          %s454 = ssub.s32 2048, %s452
          %455 = vsyncadd %s444, %s454
          %p456 = scmp.ne.s32.totalorder 0, %s452
          %s457 = smul.addr %s448, 64
          %s458 = scalar_lea.hbm %s0, %s457
          %s459 = smul.u32 4, %s451
          %s460 = sshll.u32 %s447, 4
          %s461 = int_to_ptr.vmem [resolvable:$true] %s460
          %s462 = sshll.u32 %s459, 4
          %466 = dma.hbm_to_vmem [thread:$0]  (%p456), %s458, %s462, %s461, %s444, 64, 64, 4
        $region44: #{tpu_custom_call.1} parent=39 // pred_fallthru
          _
        // Predicated region
        $region45: #{tpu_custom_call.1} parent=39 // pred_check
          %p467 = pneg %p85
        $region46: #{tpu_custom_call.1} parent=39 // pred_check_branch
          %469 = sbr.rel (%p467) target = $region48
        $region47: #{tpu_custom_call.1} parent=39 // pred_region
          %s470 = sand.u32 %s39, 1
          %s471 = scalar_lea.sflag [#allocation6], %s470
          %s472 = sand.u32 %s75, 1
          %s473 = smul.addr %s472, 128
          %s474 = scalar_lea.vmem [#allocation5], %s473
          %s475 = smul.u32 32, %s39
          %s476 = ssub.s32 38, %s475
          %p477 = scmp.lt.s32.totalorder %s476, 32
          %s478 = scalar_select %p477, %s476, 32
          %s479 = smul.u32 64, %s478
          %s481 = ssub.s32 2048, %s479
          %482 = vsyncadd %s471, %s481
          %p483 = scmp.ne.s32.totalorder 0, %s479
          %s484 = smul.addr %s475, 64
          %s485 = scalar_lea.hbm %s1, %s484
          %s486 = smul.u32 4, %s478
          %s487 = sshll.u32 %s474, 4
          %s488 = int_to_ptr.vmem [resolvable:$true] %s487
          %s489 = sshll.u32 %s486, 4
          %493 = dma.hbm_to_vmem [thread:$0]  (%p483), %s485, %s489, %s488, %s471, 64, 64, 4
        $region48: #{tpu_custom_call.1} parent=39 // pred_fallthru
          _
        // Predicated region
        $region49: #{tpu_custom_call.1} parent=39 // pred_check
          %p494 = pneg %p111
        $region50: #{tpu_custom_call.1} parent=39 // pred_check_branch
          %496 = sbr.rel (%p494) target = $region52
        $region51: #{tpu_custom_call.1} parent=39 // pred_region
          %s497 = sand.u32 %s39, 1
          %s498 = scalar_lea.sflag [#allocation6], %s497
          %s499 = sand.u32 %s101, 1
          %s500 = smul.addr %s499, 128
          %s501 = scalar_lea.vmem [#allocation7], %s500
          %s502 = smul.u32 32, %s39
          %s503 = ssub.s32 38, %s502
          %p504 = scmp.lt.s32.totalorder %s503, 32
          %s505 = scalar_select %p504, %s503, 32
          %s506 = smul.u32 64, %s505
          %s508 = ssub.s32 2048, %s506
          %509 = vsyncadd %s498, %s508
          %p510 = scmp.ne.s32.totalorder 0, %s506
          %s511 = smul.addr %s502, 64
          %s512 = scalar_lea.hbm %s2, %s511
          %s513 = smul.u32 4, %s505
          %s514 = sshll.u32 %s501, 4
          %s515 = int_to_ptr.vmem [resolvable:$true] %s514
          %s516 = sshll.u32 %s513, 4
          %520 = dma.hbm_to_vmem [thread:$0]  (%p510), %s512, %s516, %s515, %s498, 64, 64, 4
        $region52: #{tpu_custom_call.1} parent=39 // pred_fallthru
          _
        // Predicated region
        $region53: #{tpu_custom_call.1} parent=39 // pred_check
          %p521 = pneg %p137
        $region54: #{tpu_custom_call.1} parent=39 // pred_check_branch
          %523 = sbr.rel (%p521) target = $region56
        $region55: #{tpu_custom_call.1} parent=39 // pred_region
          %s524 = sand.u32 %s39, 1
          %s525 = scalar_lea.sflag [#allocation9], %s524
          %s526 = sand.u32 %s127, 1
          %s527 = smul.addr %s526, 128
          %s528 = scalar_lea.vmem [#allocation8], %s527
          %s529 = smul.u32 32, %s39
          %s530 = ssub.s32 38, %s529
          %p531 = scmp.lt.s32.totalorder %s530, 32
          %s532 = scalar_select %p531, %s530, 32
          %s533 = smul.u32 64, %s532
          %s535 = ssub.s32 2048, %s533
          %536 = vsyncadd %s525, %s535
          %p537 = scmp.ne.s32.totalorder 0, %s533
          %s538 = smul.addr %s529, 64
          %s539 = scalar_lea.hbm %s3, %s538
          %s540 = smul.u32 4, %s532
          %s541 = sshll.u32 %s528, 4
          %s542 = int_to_ptr.vmem [resolvable:$true] %s541
          %s543 = sshll.u32 %s540, 4
          %547 = dma.hbm_to_vmem [thread:$0]  (%p537), %s539, %s543, %s542, %s525, 64, 64, 4
        $region56: #{tpu_custom_call.1} parent=39 // pred_fallthru
          _
        // Predicated region
        $region57: #{tpu_custom_call.1} parent=39 // pred_check
          %p548 = pneg %p163
        $region58: #{tpu_custom_call.1} parent=39 // pred_check_branch
          %550 = sbr.rel (%p548) target = $region60
        $region59: #{tpu_custom_call.1} parent=39 // pred_region
          %s551 = sand.u32 %s39, 1
          %s552 = scalar_lea.sflag [#allocation9], %s551
          %s553 = sand.u32 %s153, 1
          %s554 = smul.addr %s553, 128
          %s555 = scalar_lea.vmem [#allocation10], %s554
          %s556 = smul.u32 32, %s39
          %s557 = ssub.s32 38, %s556
          %p558 = scmp.lt.s32.totalorder %s557, 32
          %s559 = scalar_select %p558, %s557, 32
          %s560 = smul.u32 64, %s559
          %s562 = ssub.s32 2048, %s560
          %563 = vsyncadd %s552, %s562
          %p564 = scmp.ne.s32.totalorder 0, %s560
          %s565 = smul.addr %s556, 64
          %s566 = scalar_lea.hbm %s4, %s565
          %s567 = smul.u32 4, %s559
          %s568 = sshll.u32 %s555, 4
          %s569 = int_to_ptr.vmem [resolvable:$true] %s568
          %s570 = sshll.u32 %s567, 4
          %574 = dma.hbm_to_vmem [thread:$0]  (%p564), %s566, %s570, %s569, %s552, 64, 64, 4
        $region60: #{tpu_custom_call.1} parent=39 // pred_fallthru
          _
        // Predicated region
        $region61: #{tpu_custom_call.1} parent=39 // pred_check
          %p575 = pneg %p189
        $region62: #{tpu_custom_call.1} parent=39 // pred_check_branch
          %577 = sbr.rel (%p575) target = $region64
        $region63: #{tpu_custom_call.1} parent=39 // pred_region
          %s578 = sand.u32 %s39, 1
          %s579 = scalar_lea.sflag [#allocation12], %s578
          %s580 = sand.u32 %s179, 1
          %s581 = smul.addr %s580, 128
          %s582 = scalar_lea.vmem [#allocation11], %s581
          %s583 = smul.u32 32, %s39
          %s584 = ssub.s32 38, %s583
          %p585 = scmp.lt.s32.totalorder %s584, 32
          %s586 = scalar_select %p585, %s584, 32
          %s587 = smul.u32 64, %s586
          %s589 = ssub.s32 2048, %s587
          %590 = vsyncadd %s579, %s589
          %p591 = scmp.ne.s32.totalorder 0, %s587
          %s592 = smul.addr %s583, 64
          %s593 = scalar_lea.hbm %s5, %s592
          %s594 = smul.u32 4, %s586
          %s595 = sshll.u32 %s582, 4
          %s596 = int_to_ptr.vmem [resolvable:$true] %s595
          %s597 = sshll.u32 %s594, 4
          %601 = dma.hbm_to_vmem [thread:$0]  (%p591), %s593, %s597, %s596, %s579, 64, 64, 4
        $region64: #{tpu_custom_call.1} parent=39 // pred_fallthru
          _
      $region40: #{tpu_custom_call.1} parent=5 // pred_fallthru
        _
      %p602 = scmp.le.s32.totalorder 1, %s39
      %p603 = scmp.lt.s32.totalorder %s39, 3
      %p604 = pnand %p602, %p603
      %p605 = pneg %p604
      // Predicated region
      $region65: #{tpu_custom_call.1} parent=5 // pred_check
        _
      $region66: #{tpu_custom_call.1} parent=5 // pred_check_branch
        %607 = sbr.rel (%p604) target = $region68
      $region67: #{tpu_custom_call.1} parent=5 // pred_region
        %s608 = ssub.s32 %s39, 1
        %s609 = sand.u32 %s52, 1
        %s610 = scalar_lea.sflag [#allocation3], %s609
        %s611 = sand.u32 %s52, 1
        %s612 = smul.addr %s611, 128
        %s613 = scalar_lea.vmem [#allocation2], %s612
        // Predicated region
        $region69: #{tpu_custom_call.1} parent=67 // pred_check
          %p614 = pneg %p65
        $region70: #{tpu_custom_call.1} parent=67 // pred_check_branch
          %616 = sbr.rel (%p614) target = $region72
        $region71: #{tpu_custom_call.1} parent=67 // pred_region
          %617 = dma.done %s610, 2048
        $region72: #{tpu_custom_call.1} parent=67 // pred_fallthru
          _
        %s618 = sand.u32 %s44, 1
        %s619 = scalar_lea.sflag [#allocation6], %s618
        %s620 = sand.u32 %s78, 1
        %s621 = smul.addr %s620, 128
        %s622 = scalar_lea.vmem [#allocation5], %s621
        // Predicated region
        $region73: #{tpu_custom_call.1} parent=67 // pred_check
          %p623 = pneg %p91
        $region74: #{tpu_custom_call.1} parent=67 // pred_check_branch
          %625 = sbr.rel (%p623) target = $region76
        $region75: #{tpu_custom_call.1} parent=67 // pred_region
          %626 = dma.done %s619, 2048
        $region76: #{tpu_custom_call.1} parent=67 // pred_fallthru
          _
        %s627 = sand.u32 %s44, 1
        %s628 = scalar_lea.sflag [#allocation6], %s627
        %s629 = sand.u32 %s104, 1
        %s630 = smul.addr %s629, 128
        %s631 = scalar_lea.vmem [#allocation7], %s630
        // Predicated region
        $region77: #{tpu_custom_call.1} parent=67 // pred_check
          %p632 = pneg %p117
        $region78: #{tpu_custom_call.1} parent=67 // pred_check_branch
          %634 = sbr.rel (%p632) target = $region80
        $region79: #{tpu_custom_call.1} parent=67 // pred_region
          %635 = dma.done %s628, 2048
        $region80: #{tpu_custom_call.1} parent=67 // pred_fallthru
          _
        %s636 = sand.u32 %s44, 1
        %s637 = scalar_lea.sflag [#allocation9], %s636
        %s638 = sand.u32 %s130, 1
        %s639 = smul.addr %s638, 128
        %s640 = scalar_lea.vmem [#allocation8], %s639
        // Predicated region
        $region81: #{tpu_custom_call.1} parent=67 // pred_check
          %p641 = pneg %p143
        $region82: #{tpu_custom_call.1} parent=67 // pred_check_branch
          %643 = sbr.rel (%p641) target = $region84
        $region83: #{tpu_custom_call.1} parent=67 // pred_region
          %644 = dma.done %s637, 2048
        $region84: #{tpu_custom_call.1} parent=67 // pred_fallthru
          _
        %s645 = sand.u32 %s44, 1
        %s646 = scalar_lea.sflag [#allocation9], %s645
        %s647 = sand.u32 %s156, 1
        %s648 = smul.addr %s647, 128
        %s649 = scalar_lea.vmem [#allocation10], %s648
        // Predicated region
        $region85: #{tpu_custom_call.1} parent=67 // pred_check
          %p650 = pneg %p169
        $region86: #{tpu_custom_call.1} parent=67 // pred_check_branch
          %652 = sbr.rel (%p650) target = $region88
        $region87: #{tpu_custom_call.1} parent=67 // pred_region
          %653 = dma.done %s646, 2048
        $region88: #{tpu_custom_call.1} parent=67 // pred_fallthru
          _
        %s654 = sand.u32 %s44, 1
        %s655 = scalar_lea.sflag [#allocation12], %s654
        %s656 = sand.u32 %s182, 1
        %s657 = smul.addr %s656, 128
        %s658 = scalar_lea.vmem [#allocation11], %s657
        // Predicated region
        $region89: #{tpu_custom_call.1} parent=67 // pred_check
          %p659 = pneg %p195
        $region90: #{tpu_custom_call.1} parent=67 // pred_check_branch
          %661 = sbr.rel (%p659) target = $region92
        $region91: #{tpu_custom_call.1} parent=67 // pred_region
          %662 = dma.done %s655, 2048
        $region92: #{tpu_custom_call.1} parent=67 // pred_fallthru
          _
        // Predicated region
        $region93: #{tpu_custom_call.1} parent=67 // pred_check
          %p663 = pneg %p216
        $region94: #{tpu_custom_call.1} parent=67 // pred_check_branch
          %665 = sbr.rel (%p663) target = $region96
        $region95: #{tpu_custom_call.1} parent=67 // pred_region
          %666 = dma.done [#allocation12], 4096
        $region96: #{tpu_custom_call.1} parent=67 // pred_fallthru
          _
        // Predicated region
        $region97: #{tpu_custom_call.1} parent=67 // pred_check
          %p667 = pneg %p258
        $region98: #{tpu_custom_call.1} parent=67 // pred_check_branch
          %669 = sbr.rel (%p667) target = $region100
        $region99: #{tpu_custom_call.1} parent=67 // pred_region
          %670 = dma.done [#allocation15], 4096
        $region100: #{tpu_custom_call.1} parent=67 // pred_fallthru
          _
        // Predicated region
        $region101: #{tpu_custom_call.1} parent=67 // pred_check
          %p671 = pneg %p300
        $region102: #{tpu_custom_call.1} parent=67 // pred_check_branch
          %673 = sbr.rel (%p671) target = $region104
        $region103: #{tpu_custom_call.1} parent=67 // pred_region
          %674 = dma.done [#allocation15], 4096
        $region104: #{tpu_custom_call.1} parent=67 // pred_fallthru
          _
        %s675 = sand.u32 %s52, 1
        %s676 = scalar_lea.sflag [#allocation3], %s675
        %s677 = sand.u32 %s52, 1
        %s678 = smul.addr %s677, 128
        %s679 = scalar_lea.vmem [#allocation2], %s678
        %p680 = pneg %p65
        %p681 = pneg %p62
        %s682 = sand.u32 %s44, 1
        %s683 = scalar_lea.sflag [#allocation6], %s682
        %s684 = sand.u32 %s78, 1
        %s685 = smul.addr %s684, 128
        %s686 = scalar_lea.vmem [#allocation5], %s685
        %p687 = pneg %p91
        %p688 = pneg %p88
        %s689 = sand.u32 %s44, 1
        %s690 = scalar_lea.sflag [#allocation6], %s689
        %s691 = sand.u32 %s104, 1
        %s692 = smul.addr %s691, 128
        %s693 = scalar_lea.vmem [#allocation7], %s692
        %p694 = pneg %p117
        %p695 = pneg %p114
        %s696 = sand.u32 %s44, 1
        %s697 = scalar_lea.sflag [#allocation9], %s696
        %s698 = sand.u32 %s130, 1
        %s699 = smul.addr %s698, 128
        %s700 = scalar_lea.vmem [#allocation8], %s699
        %p701 = pneg %p143
        %p702 = pneg %p140
        %s703 = sand.u32 %s44, 1
        %s704 = scalar_lea.sflag [#allocation9], %s703
        %s705 = sand.u32 %s156, 1
        %s706 = smul.addr %s705, 128
        %s707 = scalar_lea.vmem [#allocation10], %s706
        %p708 = pneg %p169
        %p709 = pneg %p166
        %s710 = sand.u32 %s44, 1
        %s711 = scalar_lea.sflag [#allocation12], %s710
        %s712 = sand.u32 %s182, 1
        %s713 = smul.addr %s712, 128
        %s714 = scalar_lea.vmem [#allocation11], %s713
        %p715 = pneg %p195
        %p716 = pneg %p192
        %p717 = pneg %p216
        %p718 = pneg %p213
        %p719 = pneg %p237
        %p720 = pneg %p234
        %p721 = pneg %p258
        %p722 = pneg %p255
        %p723 = pneg %p279
        %p724 = pneg %p276
        %p725 = pneg %p300
        %p726 = pneg %p297
        %p727 = pneg %p321
        %p728 = pneg %p318
        %p729 = pneg %p347
        %p730 = pneg %p344
        %s731 = sand.u32 %s334, 1
        %s732 = scalar_lea.sflag [#allocation4], %s731
        %s733 = sand.u32 %s334, 1
        %s734 = smul.addr %s733, 256
        %s735 = scalar_lea.vmem [#allocation17], %s734
        %p736 = pneg %p373
        %p737 = pneg %p370
        %s738 = sand.u32 %s360, 1
        %s739 = scalar_lea.sflag [#allocation19], %s738
        %s740 = sand.u32 %s360, 1
        %s741 = smul.addr %s740, 256
        %s742 = scalar_lea.vmem [#allocation18], %s741
        %s743 = smul.u32 32, %s44
        %s744 = ssub.s32 38, %s743
        %p745 = scmp.lt.s32.totalorder %s744, 32
        %s746 = scalar_select %p745, %s744, 32
        %s747 = smul.u32 64, %s746
        %s748 = smul.u32 32, %s44
        %s749 = ssub.s32 38, %s748
        %p750 = scmp.lt.s32.totalorder %s749, 32
        %s751 = scalar_select %p750, %s749, 32
        %s752 = smul.u32 64, %s751
        %s753 = smul.u32 32, %s44
        %s754 = ssub.s32 38, %s753
        %p755 = scmp.lt.s32.totalorder %s754, 32
        %s756 = scalar_select %p755, %s754, 32
        %s757 = smul.u32 64, %s756
        %s758 = smul.u32 32, %s44
        %s759 = ssub.s32 38, %s758
        %p760 = scmp.lt.s32.totalorder %s759, 32
        %s761 = scalar_select %p760, %s759, 32
        %s762 = smul.u32 64, %s761
        %s763 = smul.u32 32, %s44
        %s764 = ssub.s32 38, %s763
        %p765 = scmp.lt.s32.totalorder %s764, 32
        %s766 = scalar_select %p765, %s764, 32
        %s767 = smul.u32 64, %s766
        %s768 = smul.u32 32, %s44
        %s769 = ssub.s32 38, %s768
        %p770 = scmp.lt.s32.totalorder %s769, 32
        %s771 = scalar_select %p770, %s769, 32
        %s772 = smul.u32 64, %s771
        %s773 = smul.u32 32, %s44
        %s774 = ssub.s32 38, %s773
        %p775 = scmp.lt.s32.totalorder %s774, 32
        %s776 = scalar_select %p775, %s774, 32
        %s777 = smul.u32 128, %s776
        %s778 = smul.u32 32, %s44
        %s779 = ssub.s32 38, %s778
        %p780 = scmp.lt.s32.totalorder %s779, 32
        %s781 = scalar_select %p780, %s779, 32
        %s782 = smul.u32 128, %s781
        %v783 = vld [vmem:[%s613] sm:$0xf]
        %v784 = vld [vmem:[%s613 + $0x4] sm:$0xf]
        %v785 = vld [vmem:[%s613 + $0x8] sm:$0xf]
        %v786 = vld [vmem:[%s613 + $0xc] sm:$0xf]
        %v787 = vld [vmem:[%s613 + $0x10] sm:$0xf]
        %v788 = vld [vmem:[%s613 + $0x14] sm:$0xf]
        %v789 = vld [vmem:[%s613 + $0x18] sm:$0xf]
        %v790 = vld [vmem:[%s613 + $0x1c] sm:$0xf]
        %v791 = vld [vmem:[%s613 + $0x20] sm:$0xf]
        %v792 = vld [vmem:[%s613 + $0x24] sm:$0xf]
        %v793 = vld [vmem:[%s613 + $0x28] sm:$0xf]
        %v794 = vld [vmem:[%s613 + $0x2c] sm:$0xf]
        %v795 = vld [vmem:[%s613 + $0x30] sm:$0xf]
        %v796 = vld [vmem:[%s613 + $0x34] sm:$0xf]
        %v797 = vld [vmem:[%s613 + $0x38] sm:$0xf]
        %v798 = vld [vmem:[%s613 + $0x3c] sm:$0xf]
        %v799 = vld [vmem:[%s613 + $0x40] sm:$0xf]
        %v800 = vld [vmem:[%s613 + $0x44] sm:$0xf]
        %v801 = vld [vmem:[%s613 + $0x48] sm:$0xf]
        %v802 = vld [vmem:[%s613 + $0x4c] sm:$0xf]
        %v803 = vld [vmem:[%s613 + $0x50] sm:$0xf]
        %v804 = vld [vmem:[%s613 + $0x54] sm:$0xf]
        %v805 = vld [vmem:[%s613 + $0x58] sm:$0xf]
        %v806 = vld [vmem:[%s613 + $0x5c] sm:$0xf]
        %v807 = vld [vmem:[%s613 + $0x60] sm:$0xf]
        %v808 = vld [vmem:[%s613 + $0x64] sm:$0xf]
        %v809 = vld [vmem:[%s613 + $0x68] sm:$0xf]
        %v810 = vld [vmem:[%s613 + $0x6c] sm:$0xf]
        %v811 = vld [vmem:[%s613 + $0x70] sm:$0xf]
        %v812 = vld [vmem:[%s613 + $0x74] sm:$0xf]
        %v813 = vld [vmem:[%s613 + $0x78] sm:$0xf]
        %v814 = vld [vmem:[%s613 + $0x7c] sm:$0xf]
        %v815 = vunpack.c.l.bf16 %v783
        %v816 = vunpack.c.l.bf16 %v784
        %v817 = vunpack.c.l.bf16 %v785
        %v818 = vunpack.c.l.bf16 %v786
        %v819 = vunpack.c.l.bf16 %v787
        %v820 = vunpack.c.l.bf16 %v788
        %v821 = vunpack.c.l.bf16 %v789
        %v822 = vunpack.c.l.bf16 %v790
        %v823 = vunpack.c.l.bf16 %v791
        %v824 = vunpack.c.l.bf16 %v792
        %v825 = vunpack.c.l.bf16 %v793
        %v826 = vunpack.c.l.bf16 %v794
        %v827 = vunpack.c.l.bf16 %v795
        %v828 = vunpack.c.l.bf16 %v796
        %v829 = vunpack.c.l.bf16 %v797
        %v830 = vunpack.c.l.bf16 %v798
        %v831 = vunpack.c.l.bf16 %v799
        %v832 = vunpack.c.l.bf16 %v800
        %v833 = vunpack.c.l.bf16 %v801
        %v834 = vunpack.c.l.bf16 %v802
        %v835 = vunpack.c.l.bf16 %v803
        %v836 = vunpack.c.l.bf16 %v804
        %v837 = vunpack.c.l.bf16 %v805
        %v838 = vunpack.c.l.bf16 %v806
        %v839 = vunpack.c.l.bf16 %v807
        %v840 = vunpack.c.l.bf16 %v808
        %v841 = vunpack.c.l.bf16 %v809
        %v842 = vunpack.c.l.bf16 %v810
        %v843 = vunpack.c.l.bf16 %v811
        %v844 = vunpack.c.l.bf16 %v812
        %v845 = vunpack.c.l.bf16 %v813
        %v846 = vunpack.c.l.bf16 %v814
        %v847 = vld [vmem:[%s631] sm:$0xf]
        %v848 = vld [vmem:[%s631 + $0x4] sm:$0xf]
        %v849 = vld [vmem:[%s631 + $0x8] sm:$0xf]
        %v850 = vld [vmem:[%s631 + $0xc] sm:$0xf]
        %v851 = vld [vmem:[%s631 + $0x10] sm:$0xf]
        %v852 = vld [vmem:[%s631 + $0x14] sm:$0xf]
        %v853 = vld [vmem:[%s631 + $0x18] sm:$0xf]
        %v854 = vld [vmem:[%s631 + $0x1c] sm:$0xf]
        %v855 = vld [vmem:[%s631 + $0x20] sm:$0xf]
        %v856 = vld [vmem:[%s631 + $0x24] sm:$0xf]
        %v857 = vld [vmem:[%s631 + $0x28] sm:$0xf]
        %v858 = vld [vmem:[%s631 + $0x2c] sm:$0xf]
        %v859 = vld [vmem:[%s631 + $0x30] sm:$0xf]
        %v860 = vld [vmem:[%s631 + $0x34] sm:$0xf]
        %v861 = vld [vmem:[%s631 + $0x38] sm:$0xf]
        %v862 = vld [vmem:[%s631 + $0x3c] sm:$0xf]
        %v863 = vld [vmem:[%s631 + $0x40] sm:$0xf]
        %v864 = vld [vmem:[%s631 + $0x44] sm:$0xf]
        %v865 = vld [vmem:[%s631 + $0x48] sm:$0xf]
        %v866 = vld [vmem:[%s631 + $0x4c] sm:$0xf]
        %v867 = vld [vmem:[%s631 + $0x50] sm:$0xf]
        %v868 = vld [vmem:[%s631 + $0x54] sm:$0xf]
        %v869 = vld [vmem:[%s631 + $0x58] sm:$0xf]
        %v870 = vld [vmem:[%s631 + $0x5c] sm:$0xf]
        %v871 = vld [vmem:[%s631 + $0x60] sm:$0xf]
        %v872 = vld [vmem:[%s631 + $0x64] sm:$0xf]
        %v873 = vld [vmem:[%s631 + $0x68] sm:$0xf]
        %v874 = vld [vmem:[%s631 + $0x6c] sm:$0xf]
        %v875 = vld [vmem:[%s631 + $0x70] sm:$0xf]
        %v876 = vld [vmem:[%s631 + $0x74] sm:$0xf]
        %v877 = vld [vmem:[%s631 + $0x78] sm:$0xf]
        %v878 = vld [vmem:[%s631 + $0x7c] sm:$0xf]
        %v879 = vunpack.c.l.bf16 %v847
        %v880 = vunpack.c.l.bf16 %v848
        %v881 = vunpack.c.l.bf16 %v849
        %v882 = vunpack.c.l.bf16 %v850
        %v883 = vunpack.c.l.bf16 %v851
        %v884 = vunpack.c.l.bf16 %v852
        %v885 = vunpack.c.l.bf16 %v853
        %v886 = vunpack.c.l.bf16 %v854
        %v887 = vunpack.c.l.bf16 %v855
        %v888 = vunpack.c.l.bf16 %v856
        %v889 = vunpack.c.l.bf16 %v857
        %v890 = vunpack.c.l.bf16 %v858
        %v891 = vunpack.c.l.bf16 %v859
        %v892 = vunpack.c.l.bf16 %v860
        %v893 = vunpack.c.l.bf16 %v861
        %v894 = vunpack.c.l.bf16 %v862
        %v895 = vunpack.c.l.bf16 %v863
        %v896 = vunpack.c.l.bf16 %v864
        %v897 = vunpack.c.l.bf16 %v865
        %v898 = vunpack.c.l.bf16 %v866
        %v899 = vunpack.c.l.bf16 %v867
        %v900 = vunpack.c.l.bf16 %v868
        %v901 = vunpack.c.l.bf16 %v869
        %v902 = vunpack.c.l.bf16 %v870
        %v903 = vunpack.c.l.bf16 %v871
        %v904 = vunpack.c.l.bf16 %v872
        %v905 = vunpack.c.l.bf16 %v873
        %v906 = vunpack.c.l.bf16 %v874
        %v907 = vunpack.c.l.bf16 %v875
        %v908 = vunpack.c.l.bf16 %v876
        %v909 = vunpack.c.l.bf16 %v877
        %v910 = vunpack.c.l.bf16 %v878
        %v911 = vadd.f32 %v815, %v879
        %v912 = vadd.f32 %v816, %v880
        %v913 = vadd.f32 %v817, %v881
        %v914 = vadd.f32 %v818, %v882
        %v915 = vadd.f32 %v819, %v883
        %v916 = vadd.f32 %v820, %v884
        %v917 = vadd.f32 %v821, %v885
        %v918 = vadd.f32 %v822, %v886
        %v919 = vadd.f32 %v823, %v887
        %v920 = vadd.f32 %v824, %v888
        %v921 = vadd.f32 %v825, %v889
        %v922 = vadd.f32 %v826, %v890
        %v923 = vadd.f32 %v827, %v891
        %v924 = vadd.f32 %v828, %v892
        %v925 = vadd.f32 %v829, %v893
        %v926 = vadd.f32 %v830, %v894
        %v927 = vadd.f32 %v831, %v895
        %v928 = vadd.f32 %v832, %v896
        %v929 = vadd.f32 %v833, %v897
        %v930 = vadd.f32 %v834, %v898
        %v931 = vadd.f32 %v835, %v899
        %v932 = vadd.f32 %v836, %v900
        %v933 = vadd.f32 %v837, %v901
        %v934 = vadd.f32 %v838, %v902
        %v935 = vadd.f32 %v839, %v903
        %v936 = vadd.f32 %v840, %v904
        %v937 = vadd.f32 %v841, %v905
        %v938 = vadd.f32 %v842, %v906
        %v939 = vadd.f32 %v843, %v907
        %v940 = vadd.f32 %v844, %v908
        %v941 = vadd.f32 %v845, %v909
        %v942 = vadd.f32 %v846, %v910
        %v943 = vld [vmem:[%s649] sm:$0xf]
        %v944 = vld [vmem:[%s649 + $0x4] sm:$0xf]
        %v945 = vld [vmem:[%s649 + $0x8] sm:$0xf]
        %v946 = vld [vmem:[%s649 + $0xc] sm:$0xf]
        %v947 = vld [vmem:[%s649 + $0x10] sm:$0xf]
        %v948 = vld [vmem:[%s649 + $0x14] sm:$0xf]
        %v949 = vld [vmem:[%s649 + $0x18] sm:$0xf]
        %v950 = vld [vmem:[%s649 + $0x1c] sm:$0xf]
        %v951 = vld [vmem:[%s649 + $0x20] sm:$0xf]
        %v952 = vld [vmem:[%s649 + $0x24] sm:$0xf]
        %v953 = vld [vmem:[%s649 + $0x28] sm:$0xf]
        %v954 = vld [vmem:[%s649 + $0x2c] sm:$0xf]
        %v955 = vld [vmem:[%s649 + $0x30] sm:$0xf]
        %v956 = vld [vmem:[%s649 + $0x34] sm:$0xf]
        %v957 = vld [vmem:[%s649 + $0x38] sm:$0xf]
        %v958 = vld [vmem:[%s649 + $0x3c] sm:$0xf]
        %v959 = vld [vmem:[%s649 + $0x40] sm:$0xf]
        %v960 = vld [vmem:[%s649 + $0x44] sm:$0xf]
        %v961 = vld [vmem:[%s649 + $0x48] sm:$0xf]
        %v962 = vld [vmem:[%s649 + $0x4c] sm:$0xf]
        %v963 = vld [vmem:[%s649 + $0x50] sm:$0xf]
        %v964 = vld [vmem:[%s649 + $0x54] sm:$0xf]
        %v965 = vld [vmem:[%s649 + $0x58] sm:$0xf]
        %v966 = vld [vmem:[%s649 + $0x5c] sm:$0xf]
        %v967 = vld [vmem:[%s649 + $0x60] sm:$0xf]
        %v968 = vld [vmem:[%s649 + $0x64] sm:$0xf]
        %v969 = vld [vmem:[%s649 + $0x68] sm:$0xf]
        %v970 = vld [vmem:[%s649 + $0x6c] sm:$0xf]
        %v971 = vld [vmem:[%s649 + $0x70] sm:$0xf]
        %v972 = vld [vmem:[%s649 + $0x74] sm:$0xf]
        %v973 = vld [vmem:[%s649 + $0x78] sm:$0xf]
        %v974 = vld [vmem:[%s649 + $0x7c] sm:$0xf]
        %v975 = vunpack.c.l.bf16 %v943
        %v976 = vunpack.c.l.bf16 %v944
        %v977 = vunpack.c.l.bf16 %v945
        %v978 = vunpack.c.l.bf16 %v946
        %v979 = vunpack.c.l.bf16 %v947
        %v980 = vunpack.c.l.bf16 %v948
        %v981 = vunpack.c.l.bf16 %v949
        %v982 = vunpack.c.l.bf16 %v950
        %v983 = vunpack.c.l.bf16 %v951
        %v984 = vunpack.c.l.bf16 %v952
        %v985 = vunpack.c.l.bf16 %v953
        %v986 = vunpack.c.l.bf16 %v954
        %v987 = vunpack.c.l.bf16 %v955
        %v988 = vunpack.c.l.bf16 %v956
        %v989 = vunpack.c.l.bf16 %v957
        %v990 = vunpack.c.l.bf16 %v958
        %v991 = vunpack.c.l.bf16 %v959
        %v992 = vunpack.c.l.bf16 %v960
        %v993 = vunpack.c.l.bf16 %v961
        %v994 = vunpack.c.l.bf16 %v962
        %v995 = vunpack.c.l.bf16 %v963
        %v996 = vunpack.c.l.bf16 %v964
        %v997 = vunpack.c.l.bf16 %v965
        %v998 = vunpack.c.l.bf16 %v966
        %v999 = vunpack.c.l.bf16 %v967
        %v1000 = vunpack.c.l.bf16 %v968
        %v1001 = vunpack.c.l.bf16 %v969
        %v1002 = vunpack.c.l.bf16 %v970
        %v1003 = vunpack.c.l.bf16 %v971
        %v1004 = vunpack.c.l.bf16 %v972
        %v1005 = vunpack.c.l.bf16 %v973
        %v1006 = vunpack.c.l.bf16 %v974
        %v1007 = vadd.f32 %v911, %v975
        %v1008 = vadd.f32 %v912, %v976
        %v1009 = vadd.f32 %v913, %v977
        %v1010 = vadd.f32 %v914, %v978
        %v1011 = vadd.f32 %v915, %v979
        %v1012 = vadd.f32 %v916, %v980
        %v1013 = vadd.f32 %v917, %v981
        %v1014 = vadd.f32 %v918, %v982
        %v1015 = vadd.f32 %v919, %v983
        %v1016 = vadd.f32 %v920, %v984
        %v1017 = vadd.f32 %v921, %v985
        %v1018 = vadd.f32 %v922, %v986
        %v1019 = vadd.f32 %v923, %v987
        %v1020 = vadd.f32 %v924, %v988
        %v1021 = vadd.f32 %v925, %v989
        %v1022 = vadd.f32 %v926, %v990
        %v1023 = vadd.f32 %v927, %v991
        %v1024 = vadd.f32 %v928, %v992
        %v1025 = vadd.f32 %v929, %v993
        %v1026 = vadd.f32 %v930, %v994
        %v1027 = vadd.f32 %v931, %v995
        %v1028 = vadd.f32 %v932, %v996
        %v1029 = vadd.f32 %v933, %v997
        %v1030 = vadd.f32 %v934, %v998
        %v1031 = vadd.f32 %v935, %v999
        %v1032 = vadd.f32 %v936, %v1000
        %v1033 = vadd.f32 %v937, %v1001
        %v1034 = vadd.f32 %v938, %v1002
        %v1035 = vadd.f32 %v939, %v1003
        %v1036 = vadd.f32 %v940, %v1004
        %v1037 = vadd.f32 %v941, %v1005
        %v1038 = vadd.f32 %v942, %v1006
        %v1039 = vld [vmem:[%s622] sm:$0xf]
        %v1040 = vld [vmem:[%s622 + $0x4] sm:$0xf]
        %v1041 = vld [vmem:[%s622 + $0x8] sm:$0xf]
        %v1042 = vld [vmem:[%s622 + $0xc] sm:$0xf]
        %v1043 = vld [vmem:[%s622 + $0x10] sm:$0xf]
        %v1044 = vld [vmem:[%s622 + $0x14] sm:$0xf]
        %v1045 = vld [vmem:[%s622 + $0x18] sm:$0xf]
        %v1046 = vld [vmem:[%s622 + $0x1c] sm:$0xf]
        %v1047 = vld [vmem:[%s622 + $0x20] sm:$0xf]
        %v1048 = vld [vmem:[%s622 + $0x24] sm:$0xf]
        %v1049 = vld [vmem:[%s622 + $0x28] sm:$0xf]
        %v1050 = vld [vmem:[%s622 + $0x2c] sm:$0xf]
        %v1051 = vld [vmem:[%s622 + $0x30] sm:$0xf]
        %v1052 = vld [vmem:[%s622 + $0x34] sm:$0xf]
        %v1053 = vld [vmem:[%s622 + $0x38] sm:$0xf]
        %v1054 = vld [vmem:[%s622 + $0x3c] sm:$0xf]
        %v1055 = vld [vmem:[%s622 + $0x40] sm:$0xf]
        %v1056 = vld [vmem:[%s622 + $0x44] sm:$0xf]
        %v1057 = vld [vmem:[%s622 + $0x48] sm:$0xf]
        %v1058 = vld [vmem:[%s622 + $0x4c] sm:$0xf]
        %v1059 = vld [vmem:[%s622 + $0x50] sm:$0xf]
        %v1060 = vld [vmem:[%s622 + $0x54] sm:$0xf]
        %v1061 = vld [vmem:[%s622 + $0x58] sm:$0xf]
        %v1062 = vld [vmem:[%s622 + $0x5c] sm:$0xf]
        %v1063 = vld [vmem:[%s622 + $0x60] sm:$0xf]
        %v1064 = vld [vmem:[%s622 + $0x64] sm:$0xf]
        %v1065 = vld [vmem:[%s622 + $0x68] sm:$0xf]
        %v1066 = vld [vmem:[%s622 + $0x6c] sm:$0xf]
        %v1067 = vld [vmem:[%s622 + $0x70] sm:$0xf]
        %v1068 = vld [vmem:[%s622 + $0x74] sm:$0xf]
        %v1069 = vld [vmem:[%s622 + $0x78] sm:$0xf]
        %v1070 = vld [vmem:[%s622 + $0x7c] sm:$0xf]
        %v1071 = vunpack.c.l.bf16 %v1039
        %v1072 = vunpack.c.l.bf16 %v1040
        %v1073 = vunpack.c.l.bf16 %v1041
        %v1074 = vunpack.c.l.bf16 %v1042
        %v1075 = vunpack.c.l.bf16 %v1043
        %v1076 = vunpack.c.l.bf16 %v1044
        %v1077 = vunpack.c.l.bf16 %v1045
        %v1078 = vunpack.c.l.bf16 %v1046
        %v1079 = vunpack.c.l.bf16 %v1047
        %v1080 = vunpack.c.l.bf16 %v1048
        %v1081 = vunpack.c.l.bf16 %v1049
        %v1082 = vunpack.c.l.bf16 %v1050
        %v1083 = vunpack.c.l.bf16 %v1051
        %v1084 = vunpack.c.l.bf16 %v1052
        %v1085 = vunpack.c.l.bf16 %v1053
        %v1086 = vunpack.c.l.bf16 %v1054
        %v1087 = vunpack.c.l.bf16 %v1055
        %v1088 = vunpack.c.l.bf16 %v1056
        %v1089 = vunpack.c.l.bf16 %v1057
        %v1090 = vunpack.c.l.bf16 %v1058
        %v1091 = vunpack.c.l.bf16 %v1059
        %v1092 = vunpack.c.l.bf16 %v1060
        %v1093 = vunpack.c.l.bf16 %v1061
        %v1094 = vunpack.c.l.bf16 %v1062
        %v1095 = vunpack.c.l.bf16 %v1063
        %v1096 = vunpack.c.l.bf16 %v1064
        %v1097 = vunpack.c.l.bf16 %v1065
        %v1098 = vunpack.c.l.bf16 %v1066
        %v1099 = vunpack.c.l.bf16 %v1067
        %v1100 = vunpack.c.l.bf16 %v1068
        %v1101 = vunpack.c.l.bf16 %v1069
        %v1102 = vunpack.c.l.bf16 %v1070
        %v1103 = vld [vmem:[%s640] sm:$0xf]
        %v1104 = vld [vmem:[%s640 + $0x4] sm:$0xf]
        %v1105 = vld [vmem:[%s640 + $0x8] sm:$0xf]
        %v1106 = vld [vmem:[%s640 + $0xc] sm:$0xf]
        %v1107 = vld [vmem:[%s640 + $0x10] sm:$0xf]
        %v1108 = vld [vmem:[%s640 + $0x14] sm:$0xf]
        %v1109 = vld [vmem:[%s640 + $0x18] sm:$0xf]
        %v1110 = vld [vmem:[%s640 + $0x1c] sm:$0xf]
        %v1111 = vld [vmem:[%s640 + $0x20] sm:$0xf]
        %v1112 = vld [vmem:[%s640 + $0x24] sm:$0xf]
        %v1113 = vld [vmem:[%s640 + $0x28] sm:$0xf]
        %v1114 = vld [vmem:[%s640 + $0x2c] sm:$0xf]
        %v1115 = vld [vmem:[%s640 + $0x30] sm:$0xf]
        %v1116 = vld [vmem:[%s640 + $0x34] sm:$0xf]
        %v1117 = vld [vmem:[%s640 + $0x38] sm:$0xf]
        %v1118 = vld [vmem:[%s640 + $0x3c] sm:$0xf]
        %v1119 = vld [vmem:[%s640 + $0x40] sm:$0xf]
        %v1120 = vld [vmem:[%s640 + $0x44] sm:$0xf]
        %v1121 = vld [vmem:[%s640 + $0x48] sm:$0xf]
        %v1122 = vld [vmem:[%s640 + $0x4c] sm:$0xf]
        %v1123 = vld [vmem:[%s640 + $0x50] sm:$0xf]
        %v1124 = vld [vmem:[%s640 + $0x54] sm:$0xf]
        %v1125 = vld [vmem:[%s640 + $0x58] sm:$0xf]
        %v1126 = vld [vmem:[%s640 + $0x5c] sm:$0xf]
        %v1127 = vld [vmem:[%s640 + $0x60] sm:$0xf]
        %v1128 = vld [vmem:[%s640 + $0x64] sm:$0xf]
        %v1129 = vld [vmem:[%s640 + $0x68] sm:$0xf]
        %v1130 = vld [vmem:[%s640 + $0x6c] sm:$0xf]
        %v1131 = vld [vmem:[%s640 + $0x70] sm:$0xf]
        %v1132 = vld [vmem:[%s640 + $0x74] sm:$0xf]
        %v1133 = vld [vmem:[%s640 + $0x78] sm:$0xf]
        %v1134 = vld [vmem:[%s640 + $0x7c] sm:$0xf]
        %v1135 = vunpack.c.l.bf16 %v1103
        %v1136 = vunpack.c.l.bf16 %v1104
        %v1137 = vunpack.c.l.bf16 %v1105
        %v1138 = vunpack.c.l.bf16 %v1106
        %v1139 = vunpack.c.l.bf16 %v1107
        %v1140 = vunpack.c.l.bf16 %v1108
        %v1141 = vunpack.c.l.bf16 %v1109
        %v1142 = vunpack.c.l.bf16 %v1110
        %v1143 = vunpack.c.l.bf16 %v1111
        %v1144 = vunpack.c.l.bf16 %v1112
        %v1145 = vunpack.c.l.bf16 %v1113
        %v1146 = vunpack.c.l.bf16 %v1114
        %v1147 = vunpack.c.l.bf16 %v1115
        %v1148 = vunpack.c.l.bf16 %v1116
        %v1149 = vunpack.c.l.bf16 %v1117
        %v1150 = vunpack.c.l.bf16 %v1118
        %v1151 = vunpack.c.l.bf16 %v1119
        %v1152 = vunpack.c.l.bf16 %v1120
        %v1153 = vunpack.c.l.bf16 %v1121
        %v1154 = vunpack.c.l.bf16 %v1122
        %v1155 = vunpack.c.l.bf16 %v1123
        %v1156 = vunpack.c.l.bf16 %v1124
        %v1157 = vunpack.c.l.bf16 %v1125
        %v1158 = vunpack.c.l.bf16 %v1126
        %v1159 = vunpack.c.l.bf16 %v1127
        %v1160 = vunpack.c.l.bf16 %v1128
        %v1161 = vunpack.c.l.bf16 %v1129
        %v1162 = vunpack.c.l.bf16 %v1130
        %v1163 = vunpack.c.l.bf16 %v1131
        %v1164 = vunpack.c.l.bf16 %v1132
        %v1165 = vunpack.c.l.bf16 %v1133
        %v1166 = vunpack.c.l.bf16 %v1134
        %v1167 = vadd.f32 %v1071, %v1135
        %v1168 = vadd.f32 %v1072, %v1136
        %v1169 = vadd.f32 %v1073, %v1137
        %v1170 = vadd.f32 %v1074, %v1138
        %v1171 = vadd.f32 %v1075, %v1139
        %v1172 = vadd.f32 %v1076, %v1140
        %v1173 = vadd.f32 %v1077, %v1141
        %v1174 = vadd.f32 %v1078, %v1142
        %v1175 = vadd.f32 %v1079, %v1143
        %v1176 = vadd.f32 %v1080, %v1144
        %v1177 = vadd.f32 %v1081, %v1145
        %v1178 = vadd.f32 %v1082, %v1146
        %v1179 = vadd.f32 %v1083, %v1147
        %v1180 = vadd.f32 %v1084, %v1148
        %v1181 = vadd.f32 %v1085, %v1149
        %v1182 = vadd.f32 %v1086, %v1150
        %v1183 = vadd.f32 %v1087, %v1151
        %v1184 = vadd.f32 %v1088, %v1152
        %v1185 = vadd.f32 %v1089, %v1153
        %v1186 = vadd.f32 %v1090, %v1154
        %v1187 = vadd.f32 %v1091, %v1155
        %v1188 = vadd.f32 %v1092, %v1156
        %v1189 = vadd.f32 %v1093, %v1157
        %v1190 = vadd.f32 %v1094, %v1158
        %v1191 = vadd.f32 %v1095, %v1159
        %v1192 = vadd.f32 %v1096, %v1160
        %v1193 = vadd.f32 %v1097, %v1161
        %v1194 = vadd.f32 %v1098, %v1162
        %v1195 = vadd.f32 %v1099, %v1163
        %v1196 = vadd.f32 %v1100, %v1164
        %v1197 = vadd.f32 %v1101, %v1165
        %v1198 = vadd.f32 %v1102, %v1166
        %v1199 = vld [vmem:[%s658] sm:$0xf]
        %v1200 = vld [vmem:[%s658 + $0x4] sm:$0xf]
        %v1201 = vld [vmem:[%s658 + $0x8] sm:$0xf]
        %v1202 = vld [vmem:[%s658 + $0xc] sm:$0xf]
        %v1203 = vld [vmem:[%s658 + $0x10] sm:$0xf]
        %v1204 = vld [vmem:[%s658 + $0x14] sm:$0xf]
        %v1205 = vld [vmem:[%s658 + $0x18] sm:$0xf]
        %v1206 = vld [vmem:[%s658 + $0x1c] sm:$0xf]
        %v1207 = vld [vmem:[%s658 + $0x20] sm:$0xf]
        %v1208 = vld [vmem:[%s658 + $0x24] sm:$0xf]
        %v1209 = vld [vmem:[%s658 + $0x28] sm:$0xf]
        %v1210 = vld [vmem:[%s658 + $0x2c] sm:$0xf]
        %v1211 = vld [vmem:[%s658 + $0x30] sm:$0xf]
        %v1212 = vld [vmem:[%s658 + $0x34] sm:$0xf]
        %v1213 = vld [vmem:[%s658 + $0x38] sm:$0xf]
        %v1214 = vld [vmem:[%s658 + $0x3c] sm:$0xf]
        %v1215 = vld [vmem:[%s658 + $0x40] sm:$0xf]
        %v1216 = vld [vmem:[%s658 + $0x44] sm:$0xf]
        %v1217 = vld [vmem:[%s658 + $0x48] sm:$0xf]
        %v1218 = vld [vmem:[%s658 + $0x4c] sm:$0xf]
        %v1219 = vld [vmem:[%s658 + $0x50] sm:$0xf]
        %v1220 = vld [vmem:[%s658 + $0x54] sm:$0xf]
        %v1221 = vld [vmem:[%s658 + $0x58] sm:$0xf]
        %v1222 = vld [vmem:[%s658 + $0x5c] sm:$0xf]
        %v1223 = vld [vmem:[%s658 + $0x60] sm:$0xf]
        %v1224 = vld [vmem:[%s658 + $0x64] sm:$0xf]
        %v1225 = vld [vmem:[%s658 + $0x68] sm:$0xf]
        %v1226 = vld [vmem:[%s658 + $0x6c] sm:$0xf]
        %v1227 = vld [vmem:[%s658 + $0x70] sm:$0xf]
        %v1228 = vld [vmem:[%s658 + $0x74] sm:$0xf]
        %v1229 = vld [vmem:[%s658 + $0x78] sm:$0xf]
        %v1230 = vld [vmem:[%s658 + $0x7c] sm:$0xf]
        %v1231 = vunpack.c.l.bf16 %v1199
        %v1232 = vunpack.c.l.bf16 %v1200
        %v1233 = vunpack.c.l.bf16 %v1201
        %v1234 = vunpack.c.l.bf16 %v1202
        %v1235 = vunpack.c.l.bf16 %v1203
        %v1236 = vunpack.c.l.bf16 %v1204
        %v1237 = vunpack.c.l.bf16 %v1205
        %v1238 = vunpack.c.l.bf16 %v1206
        %v1239 = vunpack.c.l.bf16 %v1207
        %v1240 = vunpack.c.l.bf16 %v1208
        %v1241 = vunpack.c.l.bf16 %v1209
        %v1242 = vunpack.c.l.bf16 %v1210
        %v1243 = vunpack.c.l.bf16 %v1211
        %v1244 = vunpack.c.l.bf16 %v1212
        %v1245 = vunpack.c.l.bf16 %v1213
        %v1246 = vunpack.c.l.bf16 %v1214
        %v1247 = vunpack.c.l.bf16 %v1215
        %v1248 = vunpack.c.l.bf16 %v1216
        %v1249 = vunpack.c.l.bf16 %v1217
        %v1250 = vunpack.c.l.bf16 %v1218
        %v1251 = vunpack.c.l.bf16 %v1219
        %v1252 = vunpack.c.l.bf16 %v1220
        %v1253 = vunpack.c.l.bf16 %v1221
        %v1254 = vunpack.c.l.bf16 %v1222
        %v1255 = vunpack.c.l.bf16 %v1223
        %v1256 = vunpack.c.l.bf16 %v1224
        %v1257 = vunpack.c.l.bf16 %v1225
        %v1258 = vunpack.c.l.bf16 %v1226
        %v1259 = vunpack.c.l.bf16 %v1227
        %v1260 = vunpack.c.l.bf16 %v1228
        %v1261 = vunpack.c.l.bf16 %v1229
        %v1262 = vunpack.c.l.bf16 %v1230
        %v1263 = vadd.f32 %v1167, %v1231
        %v1264 = vadd.f32 %v1168, %v1232
        %v1265 = vadd.f32 %v1169, %v1233
        %v1266 = vadd.f32 %v1170, %v1234
        %v1267 = vadd.f32 %v1171, %v1235
        %v1268 = vadd.f32 %v1172, %v1236
        %v1269 = vadd.f32 %v1173, %v1237
        %v1270 = vadd.f32 %v1174, %v1238
        %v1271 = vadd.f32 %v1175, %v1239
        %v1272 = vadd.f32 %v1176, %v1240
        %v1273 = vadd.f32 %v1177, %v1241
        %v1274 = vadd.f32 %v1178, %v1242
        %v1275 = vadd.f32 %v1179, %v1243
        %v1276 = vadd.f32 %v1180, %v1244
        %v1277 = vadd.f32 %v1181, %v1245
        %v1278 = vadd.f32 %v1182, %v1246
        %v1279 = vadd.f32 %v1183, %v1247
        %v1280 = vadd.f32 %v1184, %v1248
        %v1281 = vadd.f32 %v1185, %v1249
        %v1282 = vadd.f32 %v1186, %v1250
        %v1283 = vadd.f32 %v1187, %v1251
        %v1284 = vadd.f32 %v1188, %v1252
        %v1285 = vadd.f32 %v1189, %v1253
        %v1286 = vadd.f32 %v1190, %v1254
        %v1287 = vadd.f32 %v1191, %v1255
        %v1288 = vadd.f32 %v1192, %v1256
        %v1289 = vadd.f32 %v1193, %v1257
        %v1290 = vadd.f32 %v1194, %v1258
        %v1291 = vadd.f32 %v1195, %v1259
        %v1292 = vadd.f32 %v1196, %v1260
        %v1293 = vadd.f32 %v1197, %v1261
        %v1294 = vadd.f32 %v1198, %v1262
        %v1295 = vpack.c.bf16 %v1008, %v1007
        %v1296 = vpack.c.bf16 %v1264, %v1263
        %v1297 = vpack.c.bf16 %v1010, %v1009
        %v1298 = vpack.c.bf16 %v1266, %v1265
        %v1299 = vpack.c.bf16 %v1012, %v1011
        %v1300 = vpack.c.bf16 %v1268, %v1267
        %v1301 = vpack.c.bf16 %v1014, %v1013
        %v1302 = vpack.c.bf16 %v1270, %v1269
        %v1303 = vpack.c.bf16 %v1016, %v1015
        %v1304 = vpack.c.bf16 %v1272, %v1271
        %v1305 = vpack.c.bf16 %v1018, %v1017
        %v1306 = vpack.c.bf16 %v1274, %v1273
        %v1307 = vpack.c.bf16 %v1020, %v1019
        %v1308 = vpack.c.bf16 %v1276, %v1275
        %v1309 = vpack.c.bf16 %v1022, %v1021
        %v1310 = vpack.c.bf16 %v1278, %v1277
        %v1311 = vpack.c.bf16 %v1024, %v1023
        %v1312 = vpack.c.bf16 %v1280, %v1279
        %v1313 = vpack.c.bf16 %v1026, %v1025
        %v1314 = vpack.c.bf16 %v1282, %v1281
        %v1315 = vpack.c.bf16 %v1028, %v1027
        %v1316 = vpack.c.bf16 %v1284, %v1283
        %v1317 = vpack.c.bf16 %v1030, %v1029
        %v1318 = vpack.c.bf16 %v1286, %v1285
        %v1319 = vpack.c.bf16 %v1032, %v1031
        %v1320 = vpack.c.bf16 %v1288, %v1287
        %v1321 = vpack.c.bf16 %v1034, %v1033
        %v1322 = vpack.c.bf16 %v1290, %v1289
        %v1323 = vpack.c.bf16 %v1036, %v1035
        %v1324 = vpack.c.bf16 %v1292, %v1291
        %v1325 = vpack.c.bf16 %v1038, %v1037
        %v1326 = vpack.c.bf16 %v1294, %v1293
        %v1327 = vld [vmem:[#allocation13] sm:$0xff]
        %v1328 = vld [vmem:[#allocation13 + $0x8] sm:$0xff]
        %v1329 = vld [vmem:[#allocation13 + $0x10] sm:$0xff]
        %v1330 = vld [vmem:[#allocation13 + $0x18] sm:$0xff]
        %v1331 = vld [vmem:[#allocation13 + $0x20] sm:$0xff]
        %v1332 = vld [vmem:[#allocation13 + $0x28] sm:$0xff]
        %v1333 = vld [vmem:[#allocation13 + $0x30] sm:$0xff]
        %v1334 = vld [vmem:[#allocation13 + $0x38] sm:$0xff]
        %v1335 = vld [vmem:[#allocation13 + $0x40] sm:$0xff]
        %v1336 = vld [vmem:[#allocation13 + $0x48] sm:$0xff]
        %v1337 = vld [vmem:[#allocation13 + $0x50] sm:$0xff]
        %v1338 = vld [vmem:[#allocation13 + $0x58] sm:$0xff]
        %v1339 = vld [vmem:[#allocation13 + $0x60] sm:$0xff]
        %v1340 = vld [vmem:[#allocation13 + $0x68] sm:$0xff]
        %v1341 = vld [vmem:[#allocation13 + $0x70] sm:$0xff]
        %v1342 = vld [vmem:[#allocation13 + $0x78] sm:$0xff]
        %v1343 = vld [vmem:[#allocation13 + $0x80] sm:$0xff]
        %v1344 = vld [vmem:[#allocation13 + $0x88] sm:$0xff]
        %v1345 = vld [vmem:[#allocation13 + $0x90] sm:$0xff]
        %v1346 = vld [vmem:[#allocation13 + $0x98] sm:$0xff]
        %v1347 = vld [vmem:[#allocation13 + $0xa0] sm:$0xff]
        %v1348 = vld [vmem:[#allocation13 + $0xa8] sm:$0xff]
        %v1349 = vld [vmem:[#allocation13 + $0xb0] sm:$0xff]
        %v1350 = vld [vmem:[#allocation13 + $0xb8] sm:$0xff]
        %v1351 = vld [vmem:[#allocation13 + $0xc0] sm:$0xff]
        %v1352 = vld [vmem:[#allocation13 + $0xc8] sm:$0xff]
        %v1353 = vld [vmem:[#allocation13 + $0xd0] sm:$0xff]
        %v1354 = vld [vmem:[#allocation13 + $0xd8] sm:$0xff]
        %v1355 = vld [vmem:[#allocation13 + $0xe0] sm:$0xff]
        %v1356 = vld [vmem:[#allocation13 + $0xe8] sm:$0xff]
        %v1357 = vld [vmem:[#allocation13 + $0xf0] sm:$0xff]
        %v1358 = vld [vmem:[#allocation13 + $0xf8] sm:$0xff]
        %v1359 = vld [vmem:[%s7] sm:$0x3]
        %v1361 = vlaneseq
        %v1362 = vshrl.u32 %v1361, 7
        %v1363 = vsub.s32 0, %v1362
        %v1364 = vrot.slane %v1359, %v1363
        %v1365 = vlaneseq
        %v1366 = vshrl.u32 %v1365, 7
        %v1367 = vsub.s32 1, %v1366
        %v1368 = vrot.slane %v1359, %v1367
        %v1403 = vunpack.c.l.b16 %v1327
        %v1404 = vunpack.c.h.b16 %v1327
        %v1405 = vunpack.c.l.b16 %v1328
        %v1406 = vunpack.c.h.b16 %v1328
        %v1407 = vunpack.c.l.b16 %v1329
        %v1408 = vunpack.c.h.b16 %v1329
        %v1409 = vunpack.c.l.b16 %v1330
        %v1410 = vunpack.c.h.b16 %v1330
        %v1411 = vunpack.c.l.b16 %v1331
        %v1412 = vunpack.c.h.b16 %v1331
        %v1413 = vunpack.c.l.b16 %v1332
        %v1414 = vunpack.c.h.b16 %v1332
        %v1415 = vunpack.c.l.b16 %v1333
        %v1416 = vunpack.c.h.b16 %v1333
        %v1417 = vunpack.c.l.b16 %v1334
        %v1418 = vunpack.c.h.b16 %v1334
        %v1419 = vunpack.c.l.b16 %v1335
        %v1420 = vunpack.c.h.b16 %v1335
        %v1421 = vunpack.c.l.b16 %v1336
        %v1422 = vunpack.c.h.b16 %v1336
        %v1423 = vunpack.c.l.b16 %v1337
        %v1424 = vunpack.c.h.b16 %v1337
        %v1425 = vunpack.c.l.b16 %v1338
        %v1426 = vunpack.c.h.b16 %v1338
        %v1427 = vunpack.c.l.b16 %v1339
        %v1428 = vunpack.c.h.b16 %v1339
        %v1429 = vunpack.c.l.b16 %v1340
        %v1430 = vunpack.c.h.b16 %v1340
        %v1431 = vunpack.c.l.b16 %v1341
        %v1432 = vunpack.c.h.b16 %v1341
        %v1433 = vunpack.c.l.b16 %v1342
        %v1434 = vunpack.c.h.b16 %v1342
        %v1435 = vunpack.c.l.b16 %v1343
        %v1436 = vunpack.c.h.b16 %v1343
        %v1437 = vunpack.c.l.b16 %v1344
        %v1438 = vunpack.c.h.b16 %v1344
        %v1439 = vunpack.c.l.b16 %v1345
        %v1440 = vunpack.c.h.b16 %v1345
        %v1441 = vunpack.c.l.b16 %v1346
        %v1442 = vunpack.c.h.b16 %v1346
        %v1443 = vunpack.c.l.b16 %v1347
        %v1444 = vunpack.c.h.b16 %v1347
        %v1445 = vunpack.c.l.b16 %v1348
        %v1446 = vunpack.c.h.b16 %v1348
        %v1447 = vunpack.c.l.b16 %v1349
        %v1448 = vunpack.c.h.b16 %v1349
        %v1449 = vunpack.c.l.b16 %v1350
        %v1450 = vunpack.c.h.b16 %v1350
        %v1451 = vunpack.c.l.b16 %v1351
        %v1452 = vunpack.c.h.b16 %v1351
        %v1453 = vunpack.c.l.b16 %v1352
        %v1454 = vunpack.c.h.b16 %v1352
        %v1455 = vunpack.c.l.b16 %v1353
        %v1456 = vunpack.c.h.b16 %v1353
        %v1457 = vunpack.c.l.b16 %v1354
        %v1458 = vunpack.c.h.b16 %v1354
        %v1459 = vunpack.c.l.b16 %v1355
        %v1460 = vunpack.c.h.b16 %v1355
        %v1461 = vunpack.c.l.b16 %v1356
        %v1462 = vunpack.c.h.b16 %v1356
        %v1463 = vunpack.c.l.b16 %v1357
        %v1464 = vunpack.c.h.b16 %v1357
        %v1465 = vunpack.c.l.b16 %v1358
        %v1466 = vunpack.c.h.b16 %v1358
        %v1467 = vpack.c.b16 %v1405, %v1403
        %v1468 = vpack.c.b16 %v1406, %v1404
        %v1469 = vpack.c.b16 %v1409, %v1407
        %v1470 = vpack.c.b16 %v1410, %v1408
        %v1471 = vpack.c.b16 %v1413, %v1411
        %v1472 = vpack.c.b16 %v1414, %v1412
        %v1473 = vpack.c.b16 %v1417, %v1415
        %v1474 = vpack.c.b16 %v1418, %v1416
        %v1475 = vpack.c.b16 %v1421, %v1419
        %v1476 = vpack.c.b16 %v1422, %v1420
        %v1477 = vpack.c.b16 %v1425, %v1423
        %v1478 = vpack.c.b16 %v1426, %v1424
        %v1479 = vpack.c.b16 %v1429, %v1427
        %v1480 = vpack.c.b16 %v1430, %v1428
        %v1481 = vpack.c.b16 %v1433, %v1431
        %v1482 = vpack.c.b16 %v1434, %v1432
        %v1483 = vpack.c.b16 %v1437, %v1435
        %v1484 = vpack.c.b16 %v1438, %v1436
        %v1485 = vpack.c.b16 %v1441, %v1439
        %v1486 = vpack.c.b16 %v1442, %v1440
        %v1487 = vpack.c.b16 %v1445, %v1443
        %v1488 = vpack.c.b16 %v1446, %v1444
        %v1489 = vpack.c.b16 %v1449, %v1447
        %v1490 = vpack.c.b16 %v1450, %v1448
        %v1491 = vpack.c.b16 %v1453, %v1451
        %v1492 = vpack.c.b16 %v1454, %v1452
        %v1493 = vpack.c.b16 %v1457, %v1455
        %v1494 = vpack.c.b16 %v1458, %v1456
        %v1495 = vpack.c.b16 %v1461, %v1459
        %v1496 = vpack.c.b16 %v1462, %v1460
        %v1497 = vpack.c.b16 %v1465, %v1463
        %v1498 = vpack.c.b16 %v1466, %v1464
        %1531 = vmatprep.subr.bf16.mxu0 %v1482
        %1532 = vmatpush1.bf16.msra.mxu0 %v1481
        %1533 = vmatprep.subr.bf16.mxu0 %v1480
        %1534 = vmatpush1.bf16.msra.mxu0 %v1479
        %1535 = vmatprep.subr.bf16.mxu0 %v1478
        %1536 = vmatpush1.bf16.msra.mxu0 %v1477
        %1537 = vmatprep.subr.bf16.mxu0 %v1476
        %1538 = vmatpush1.bf16.msra.mxu0 %v1475
        %1539 = vmatprep.subr.bf16.mxu0 %v1474
        %1540 = vmatpush1.bf16.msra.mxu0 %v1473
        %1541 = vmatprep.subr.bf16.mxu0 %v1472
        %1542 = vmatpush1.bf16.msra.mxu0 %v1471
        %1543 = vmatprep.subr.bf16.mxu0 %v1470
        %1544 = vmatpush1.bf16.msra.mxu0 %v1469
        %1545 = vmatprep.subr.bf16.mxu0 %v1468
        %1546 = vmatpush1.bf16.msra.mxu0 %v1467
        %1547 = vmatprep.subr.bf16.mxu0 %v1498
        %1548 = vmatpush2.bf16.msra.mxu0 %v1497
        %1549 = vmatprep.subr.bf16.mxu0 %v1496
        %1550 = vmatpush2.bf16.msra.mxu0 %v1495
        %1551 = vmatprep.subr.bf16.mxu0 %v1494
        %1552 = vmatpush2.bf16.msra.mxu0 %v1493
        %1553 = vmatprep.subr.bf16.mxu0 %v1492
        %1554 = vmatpush2.bf16.msra.mxu0 %v1491
        %1555 = vmatprep.subr.bf16.mxu0 %v1490
        %1556 = vmatpush2.bf16.msra.mxu0 %v1489
        %1557 = vmatprep.subr.bf16.mxu0 %v1488
        %1558 = vmatpush2.bf16.msra.mxu0 %v1487
        %1559 = vmatprep.subr.bf16.mxu0 %v1486
        %1560 = vmatpush2.bf16.msra.mxu0 %v1485
        %1561 = vmatprep.subr.bf16.mxu0 %v1484
        %1562 = vmatpush2.bf16.msra.mxu0 %v1483
        %1563 = vmatprep.mubr.bf16.mxu0 %v1296
        %1564 = vmatmul.mubr.bf16.gmra.mxu0 %v1295
        %v1565 = vpop.f32.mrf.mxu0
        %v1566 = vadd.f32 %v1364, %v1565
        %v1567 = vpop.f32.mrf.mxu0
        %v1568 = vadd.f32 %v1368, %v1567
        %v1569 = vpop.f32.mrf.mxu0
        %v1570 = vadd.f32 %v1364, %v1569
        %v1571 = vpop.f32.mrf.mxu0
        %v1572 = vadd.f32 %v1368, %v1571
        %1573 = vmatprep.mubr.bf16.mxu0 %v1298
        %1574 = vmatmul.mubr.bf16.gmra.mxu0 %v1297
        %v1575 = vpop.f32.mrf.mxu0
        %v1576 = vadd.f32 %v1364, %v1575
        %v1577 = vpop.f32.mrf.mxu0
        %v1578 = vadd.f32 %v1368, %v1577
        %v1579 = vpop.f32.mrf.mxu0
        %v1580 = vadd.f32 %v1364, %v1579
        %v1581 = vpop.f32.mrf.mxu0
        %v1582 = vadd.f32 %v1368, %v1581
        %1583 = vmatprep.mubr.bf16.mxu0 %v1300
        %1584 = vmatmul.mubr.bf16.gmra.mxu0 %v1299
        %v1585 = vpop.f32.mrf.mxu0
        %v1586 = vadd.f32 %v1364, %v1585
        %v1587 = vpop.f32.mrf.mxu0
        %v1588 = vadd.f32 %v1368, %v1587
        %v1589 = vpop.f32.mrf.mxu0
        %v1590 = vadd.f32 %v1364, %v1589
        %v1591 = vpop.f32.mrf.mxu0
        %v1592 = vadd.f32 %v1368, %v1591
        %1593 = vmatprep.mubr.bf16.mxu0 %v1302
        %1594 = vmatmul.mubr.bf16.gmra.mxu0 %v1301
        %v1595 = vpop.f32.mrf.mxu0
        %v1596 = vadd.f32 %v1364, %v1595
        %v1597 = vpop.f32.mrf.mxu0
        %v1598 = vadd.f32 %v1368, %v1597
        %v1599 = vpop.f32.mrf.mxu0
        %v1600 = vadd.f32 %v1364, %v1599
        %v1601 = vpop.f32.mrf.mxu0
        %v1602 = vadd.f32 %v1368, %v1601
        %1603 = vmatprep.mubr.bf16.mxu0 %v1304
        %1604 = vmatmul.mubr.bf16.gmra.mxu0 %v1303
        %v1605 = vpop.f32.mrf.mxu0
        %v1606 = vadd.f32 %v1364, %v1605
        %v1607 = vpop.f32.mrf.mxu0
        %v1608 = vadd.f32 %v1368, %v1607
        %v1609 = vpop.f32.mrf.mxu0
        %v1610 = vadd.f32 %v1364, %v1609
        %v1611 = vpop.f32.mrf.mxu0
        %v1612 = vadd.f32 %v1368, %v1611
        %1613 = vmatprep.mubr.bf16.mxu0 %v1306
        %1614 = vmatmul.mubr.bf16.gmra.mxu0 %v1305
        %v1615 = vpop.f32.mrf.mxu0
        %v1616 = vadd.f32 %v1364, %v1615
        %v1617 = vpop.f32.mrf.mxu0
        %v1618 = vadd.f32 %v1368, %v1617
        %v1619 = vpop.f32.mrf.mxu0
        %v1620 = vadd.f32 %v1364, %v1619
        %v1621 = vpop.f32.mrf.mxu0
        %v1622 = vadd.f32 %v1368, %v1621
        %1623 = vmatprep.mubr.bf16.mxu0 %v1308
        %1624 = vmatmul.mubr.bf16.gmra.mxu0 %v1307
        %v1625 = vpop.f32.mrf.mxu0
        %v1626 = vadd.f32 %v1364, %v1625
        %v1627 = vpop.f32.mrf.mxu0
        %v1628 = vadd.f32 %v1368, %v1627
        %v1629 = vpop.f32.mrf.mxu0
        %v1630 = vadd.f32 %v1364, %v1629
        %v1631 = vpop.f32.mrf.mxu0
        %v1632 = vadd.f32 %v1368, %v1631
        %1633 = vmatprep.mubr.bf16.mxu0 %v1310
        %1634 = vmatmul.mubr.bf16.gmra.mxu0 %v1309
        %v1635 = vpop.f32.mrf.mxu0
        %v1636 = vadd.f32 %v1364, %v1635
        %v1637 = vpop.f32.mrf.mxu0
        %v1638 = vadd.f32 %v1368, %v1637
        %v1639 = vpop.f32.mrf.mxu0
        %v1640 = vadd.f32 %v1364, %v1639
        %v1641 = vpop.f32.mrf.mxu0
        %v1642 = vadd.f32 %v1368, %v1641
        %1643 = vmatprep.mubr.bf16.mxu0 %v1312
        %1644 = vmatmul.mubr.bf16.gmra.mxu0 %v1311
        %v1645 = vpop.f32.mrf.mxu0
        %v1646 = vadd.f32 %v1364, %v1645
        %v1647 = vpop.f32.mrf.mxu0
        %v1648 = vadd.f32 %v1368, %v1647
        %v1649 = vpop.f32.mrf.mxu0
        %v1650 = vadd.f32 %v1364, %v1649
        %v1651 = vpop.f32.mrf.mxu0
        %v1652 = vadd.f32 %v1368, %v1651
        %1653 = vmatprep.mubr.bf16.mxu0 %v1314
        %1654 = vmatmul.mubr.bf16.gmra.mxu0 %v1313
        %v1655 = vpop.f32.mrf.mxu0
        %v1656 = vadd.f32 %v1364, %v1655
        %v1657 = vpop.f32.mrf.mxu0
        %v1658 = vadd.f32 %v1368, %v1657
        %v1659 = vpop.f32.mrf.mxu0
        %v1660 = vadd.f32 %v1364, %v1659
        %v1661 = vpop.f32.mrf.mxu0
        %v1662 = vadd.f32 %v1368, %v1661
        %1663 = vmatprep.mubr.bf16.mxu0 %v1316
        %1664 = vmatmul.mubr.bf16.gmra.mxu0 %v1315
        %v1665 = vpop.f32.mrf.mxu0
        %v1666 = vadd.f32 %v1364, %v1665
        %v1667 = vpop.f32.mrf.mxu0
        %v1668 = vadd.f32 %v1368, %v1667
        %v1669 = vpop.f32.mrf.mxu0
        %v1670 = vadd.f32 %v1364, %v1669
        %v1671 = vpop.f32.mrf.mxu0
        %v1672 = vadd.f32 %v1368, %v1671
        %1673 = vmatprep.mubr.bf16.mxu0 %v1318
        %1674 = vmatmul.mubr.bf16.gmra.mxu0 %v1317
        %v1675 = vpop.f32.mrf.mxu0
        %v1676 = vadd.f32 %v1364, %v1675
        %v1677 = vpop.f32.mrf.mxu0
        %v1678 = vadd.f32 %v1368, %v1677
        %v1679 = vpop.f32.mrf.mxu0
        %v1680 = vadd.f32 %v1364, %v1679
        %v1681 = vpop.f32.mrf.mxu0
        %v1682 = vadd.f32 %v1368, %v1681
        %1683 = vmatprep.mubr.bf16.mxu0 %v1320
        %1684 = vmatmul.mubr.bf16.gmra.mxu0 %v1319
        %v1685 = vpop.f32.mrf.mxu0
        %v1686 = vadd.f32 %v1364, %v1685
        %v1687 = vpop.f32.mrf.mxu0
        %v1688 = vadd.f32 %v1368, %v1687
        %v1689 = vpop.f32.mrf.mxu0
        %v1690 = vadd.f32 %v1364, %v1689
        %v1691 = vpop.f32.mrf.mxu0
        %v1692 = vadd.f32 %v1368, %v1691
        %1693 = vmatprep.mubr.bf16.mxu0 %v1322
        %1694 = vmatmul.mubr.bf16.gmra.mxu0 %v1321
        %v1695 = vpop.f32.mrf.mxu0
        %v1696 = vadd.f32 %v1364, %v1695
        %v1697 = vpop.f32.mrf.mxu0
        %v1698 = vadd.f32 %v1368, %v1697
        %v1699 = vpop.f32.mrf.mxu0
        %v1700 = vadd.f32 %v1364, %v1699
        %v1701 = vpop.f32.mrf.mxu0
        %v1702 = vadd.f32 %v1368, %v1701
        %1703 = vmatprep.mubr.bf16.mxu0 %v1324
        %1704 = vmatmul.mubr.bf16.gmra.mxu0 %v1323
        %v1705 = vpop.f32.mrf.mxu0
        %v1706 = vadd.f32 %v1364, %v1705
        %v1707 = vpop.f32.mrf.mxu0
        %v1708 = vadd.f32 %v1368, %v1707
        %v1709 = vpop.f32.mrf.mxu0
        %v1710 = vadd.f32 %v1364, %v1709
        %v1711 = vpop.f32.mrf.mxu0
        %v1712 = vadd.f32 %v1368, %v1711
        %1713 = vmatprep.mubr.bf16.mxu0 %v1326
        %1714 = vmatmul.mubr.bf16.gmra.mxu0 %v1325
        %v1715 = vpop.f32.mrf.mxu0
        %v1716 = vadd.f32 %v1364, %v1715
        %v1717 = vpop.f32.mrf.mxu0
        %v1718 = vadd.f32 %v1368, %v1717
        %v1719 = vpop.f32.mrf.mxu0
        %v1720 = vadd.f32 %v1364, %v1719
        %v1721 = vpop.f32.mrf.mxu0
        %v1722 = vadd.f32 %v1368, %v1721
        %1723 = vdwg.mxu0
        %v1724 = vmax.f32 %v1566, 0.0
        %v1725 = vmax.f32 %v1568, 0.0
        %v1726 = vmax.f32 %v1570, 0.0
        %v1727 = vmax.f32 %v1572, 0.0
        %v1728 = vmax.f32 %v1576, 0.0
        %v1729 = vmax.f32 %v1578, 0.0
        %v1730 = vmax.f32 %v1580, 0.0
        %v1731 = vmax.f32 %v1582, 0.0
        %v1732 = vmax.f32 %v1586, 0.0
        %v1733 = vmax.f32 %v1588, 0.0
        %v1734 = vmax.f32 %v1590, 0.0
        %v1735 = vmax.f32 %v1592, 0.0
        %v1736 = vmax.f32 %v1596, 0.0
        %v1737 = vmax.f32 %v1598, 0.0
        %v1738 = vmax.f32 %v1600, 0.0
        %v1739 = vmax.f32 %v1602, 0.0
        %v1740 = vmax.f32 %v1606, 0.0
        %v1741 = vmax.f32 %v1608, 0.0
        %v1742 = vmax.f32 %v1610, 0.0
        %v1743 = vmax.f32 %v1612, 0.0
        %v1744 = vmax.f32 %v1616, 0.0
        %v1745 = vmax.f32 %v1618, 0.0
        %v1746 = vmax.f32 %v1620, 0.0
        %v1747 = vmax.f32 %v1622, 0.0
        %v1748 = vmax.f32 %v1626, 0.0
        %v1749 = vmax.f32 %v1628, 0.0
        %v1750 = vmax.f32 %v1630, 0.0
        %v1751 = vmax.f32 %v1632, 0.0
        %v1752 = vmax.f32 %v1636, 0.0
        %v1753 = vmax.f32 %v1638, 0.0
        %v1754 = vmax.f32 %v1640, 0.0
        %v1755 = vmax.f32 %v1642, 0.0
        %v1756 = vmax.f32 %v1646, 0.0
        %v1757 = vmax.f32 %v1648, 0.0
        %v1758 = vmax.f32 %v1650, 0.0
        %v1759 = vmax.f32 %v1652, 0.0
        %v1760 = vmax.f32 %v1656, 0.0
        %v1761 = vmax.f32 %v1658, 0.0
        %v1762 = vmax.f32 %v1660, 0.0
        %v1763 = vmax.f32 %v1662, 0.0
        %v1764 = vmax.f32 %v1666, 0.0
        %v1765 = vmax.f32 %v1668, 0.0
        %v1766 = vmax.f32 %v1670, 0.0
        %v1767 = vmax.f32 %v1672, 0.0
        %v1768 = vmax.f32 %v1676, 0.0
        %v1769 = vmax.f32 %v1678, 0.0
        %v1770 = vmax.f32 %v1680, 0.0
        %v1771 = vmax.f32 %v1682, 0.0
        %v1772 = vmax.f32 %v1686, 0.0
        %v1773 = vmax.f32 %v1688, 0.0
        %v1774 = vmax.f32 %v1690, 0.0
        %v1775 = vmax.f32 %v1692, 0.0
        %v1776 = vmax.f32 %v1696, 0.0
        %v1777 = vmax.f32 %v1698, 0.0
        %v1778 = vmax.f32 %v1700, 0.0
        %v1779 = vmax.f32 %v1702, 0.0
        %v1780 = vmax.f32 %v1706, 0.0
        %v1781 = vmax.f32 %v1708, 0.0
        %v1782 = vmax.f32 %v1710, 0.0
        %v1783 = vmax.f32 %v1712, 0.0
        %v1784 = vmax.f32 %v1716, 0.0
        %v1785 = vmax.f32 %v1718, 0.0
        %v1786 = vmax.f32 %v1720, 0.0
        %v1787 = vmax.f32 %v1722, 0.0
        %v1788 = vpack.c.bf16 %v1726, %v1724
        %v1789 = vpack.c.bf16 %v1727, %v1725
        %v1790 = vpack.c.bf16 %v1730, %v1728
        %v1791 = vpack.c.bf16 %v1731, %v1729
        %v1792 = vpack.c.bf16 %v1734, %v1732
        %v1793 = vpack.c.bf16 %v1735, %v1733
        %v1794 = vpack.c.bf16 %v1738, %v1736
        %v1795 = vpack.c.bf16 %v1739, %v1737
        %v1796 = vpack.c.bf16 %v1742, %v1740
        %v1797 = vpack.c.bf16 %v1743, %v1741
        %v1798 = vpack.c.bf16 %v1746, %v1744
        %v1799 = vpack.c.bf16 %v1747, %v1745
        %v1800 = vpack.c.bf16 %v1750, %v1748
        %v1801 = vpack.c.bf16 %v1751, %v1749
        %v1802 = vpack.c.bf16 %v1754, %v1752
        %v1803 = vpack.c.bf16 %v1755, %v1753
        %v1804 = vpack.c.bf16 %v1758, %v1756
        %v1805 = vpack.c.bf16 %v1759, %v1757
        %v1806 = vpack.c.bf16 %v1762, %v1760
        %v1807 = vpack.c.bf16 %v1763, %v1761
        %v1808 = vpack.c.bf16 %v1766, %v1764
        %v1809 = vpack.c.bf16 %v1767, %v1765
        %v1810 = vpack.c.bf16 %v1770, %v1768
        %v1811 = vpack.c.bf16 %v1771, %v1769
        %v1812 = vpack.c.bf16 %v1774, %v1772
        %v1813 = vpack.c.bf16 %v1775, %v1773
        %v1814 = vpack.c.bf16 %v1778, %v1776
        %v1815 = vpack.c.bf16 %v1779, %v1777
        %v1816 = vpack.c.bf16 %v1782, %v1780
        %v1817 = vpack.c.bf16 %v1783, %v1781
        %v1818 = vpack.c.bf16 %v1786, %v1784
        %v1819 = vpack.c.bf16 %v1787, %v1785
        %v1820 = vld [vmem:[#allocation14] sm:$0xff]
        %v1821 = vld [vmem:[#allocation14 + $0x8] sm:$0xff]
        %v1822 = vld [vmem:[#allocation14 + $0x10] sm:$0xff]
        %v1823 = vld [vmem:[#allocation14 + $0x18] sm:$0xff]
        %v1824 = vld [vmem:[#allocation14 + $0x20] sm:$0xff]
        %v1825 = vld [vmem:[#allocation14 + $0x28] sm:$0xff]
        %v1826 = vld [vmem:[#allocation14 + $0x30] sm:$0xff]
        %v1827 = vld [vmem:[#allocation14 + $0x38] sm:$0xff]
        %v1828 = vld [vmem:[#allocation14 + $0x40] sm:$0xff]
        %v1829 = vld [vmem:[#allocation14 + $0x48] sm:$0xff]
        %v1830 = vld [vmem:[#allocation14 + $0x50] sm:$0xff]
        %v1831 = vld [vmem:[#allocation14 + $0x58] sm:$0xff]
        %v1832 = vld [vmem:[#allocation14 + $0x60] sm:$0xff]
        %v1833 = vld [vmem:[#allocation14 + $0x68] sm:$0xff]
        %v1834 = vld [vmem:[#allocation14 + $0x70] sm:$0xff]
        %v1835 = vld [vmem:[#allocation14 + $0x78] sm:$0xff]
        %v1836 = vld [vmem:[#allocation14 + $0x80] sm:$0xff]
        %v1837 = vld [vmem:[#allocation14 + $0x88] sm:$0xff]
        %v1838 = vld [vmem:[#allocation14 + $0x90] sm:$0xff]
        %v1839 = vld [vmem:[#allocation14 + $0x98] sm:$0xff]
        %v1840 = vld [vmem:[#allocation14 + $0xa0] sm:$0xff]
        %v1841 = vld [vmem:[#allocation14 + $0xa8] sm:$0xff]
        %v1842 = vld [vmem:[#allocation14 + $0xb0] sm:$0xff]
        %v1843 = vld [vmem:[#allocation14 + $0xb8] sm:$0xff]
        %v1844 = vld [vmem:[#allocation14 + $0xc0] sm:$0xff]
        %v1845 = vld [vmem:[#allocation14 + $0xc8] sm:$0xff]
        %v1846 = vld [vmem:[#allocation14 + $0xd0] sm:$0xff]
        %v1847 = vld [vmem:[#allocation14 + $0xd8] sm:$0xff]
        %v1848 = vld [vmem:[#allocation14 + $0xe0] sm:$0xff]
        %v1849 = vld [vmem:[#allocation14 + $0xe8] sm:$0xff]
        %v1850 = vld [vmem:[#allocation14 + $0xf0] sm:$0xff]
        %v1851 = vld [vmem:[#allocation14 + $0xf8] sm:$0xff]
        %v1852 = vld [vmem:[%s9] sm:$0x3]
        %v1854 = vlaneseq
        %v1855 = vshrl.u32 %v1854, 7
        %v1856 = vsub.s32 0, %v1855
        %v1857 = vrot.slane %v1852, %v1856
        %v1858 = vlaneseq
        %v1859 = vshrl.u32 %v1858, 7
        %v1860 = vsub.s32 1, %v1859
        %v1861 = vrot.slane %v1852, %v1860
        %v1896 = vunpack.c.l.b16 %v1820
        %v1897 = vunpack.c.h.b16 %v1820
        %v1898 = vunpack.c.l.b16 %v1821
        %v1899 = vunpack.c.h.b16 %v1821
        %v1900 = vunpack.c.l.b16 %v1822
        %v1901 = vunpack.c.h.b16 %v1822
        %v1902 = vunpack.c.l.b16 %v1823
        %v1903 = vunpack.c.h.b16 %v1823
        %v1904 = vunpack.c.l.b16 %v1824
        %v1905 = vunpack.c.h.b16 %v1824
        %v1906 = vunpack.c.l.b16 %v1825
        %v1907 = vunpack.c.h.b16 %v1825
        %v1908 = vunpack.c.l.b16 %v1826
        %v1909 = vunpack.c.h.b16 %v1826
        %v1910 = vunpack.c.l.b16 %v1827
        %v1911 = vunpack.c.h.b16 %v1827
        %v1912 = vunpack.c.l.b16 %v1828
        %v1913 = vunpack.c.h.b16 %v1828
        %v1914 = vunpack.c.l.b16 %v1829
        %v1915 = vunpack.c.h.b16 %v1829
        %v1916 = vunpack.c.l.b16 %v1830
        %v1917 = vunpack.c.h.b16 %v1830
        %v1918 = vunpack.c.l.b16 %v1831
        %v1919 = vunpack.c.h.b16 %v1831
        %v1920 = vunpack.c.l.b16 %v1832
        %v1921 = vunpack.c.h.b16 %v1832
        %v1922 = vunpack.c.l.b16 %v1833
        %v1923 = vunpack.c.h.b16 %v1833
        %v1924 = vunpack.c.l.b16 %v1834
        %v1925 = vunpack.c.h.b16 %v1834
        %v1926 = vunpack.c.l.b16 %v1835
        %v1927 = vunpack.c.h.b16 %v1835
        %v1928 = vunpack.c.l.b16 %v1836
        %v1929 = vunpack.c.h.b16 %v1836
        %v1930 = vunpack.c.l.b16 %v1837
        %v1931 = vunpack.c.h.b16 %v1837
        %v1932 = vunpack.c.l.b16 %v1838
        %v1933 = vunpack.c.h.b16 %v1838
        %v1934 = vunpack.c.l.b16 %v1839
        %v1935 = vunpack.c.h.b16 %v1839
        %v1936 = vunpack.c.l.b16 %v1840
        %v1937 = vunpack.c.h.b16 %v1840
        %v1938 = vunpack.c.l.b16 %v1841
        %v1939 = vunpack.c.h.b16 %v1841
        %v1940 = vunpack.c.l.b16 %v1842
        %v1941 = vunpack.c.h.b16 %v1842
        %v1942 = vunpack.c.l.b16 %v1843
        %v1943 = vunpack.c.h.b16 %v1843
        %v1944 = vunpack.c.l.b16 %v1844
        %v1945 = vunpack.c.h.b16 %v1844
        %v1946 = vunpack.c.l.b16 %v1845
        %v1947 = vunpack.c.h.b16 %v1845
        %v1948 = vunpack.c.l.b16 %v1846
        %v1949 = vunpack.c.h.b16 %v1846
        %v1950 = vunpack.c.l.b16 %v1847
        %v1951 = vunpack.c.h.b16 %v1847
        %v1952 = vunpack.c.l.b16 %v1848
        %v1953 = vunpack.c.h.b16 %v1848
        %v1954 = vunpack.c.l.b16 %v1849
        %v1955 = vunpack.c.h.b16 %v1849
        %v1956 = vunpack.c.l.b16 %v1850
        %v1957 = vunpack.c.h.b16 %v1850
        %v1958 = vunpack.c.l.b16 %v1851
        %v1959 = vunpack.c.h.b16 %v1851
        %v1960 = vpack.c.b16 %v1898, %v1896
        %v1961 = vpack.c.b16 %v1899, %v1897
        %v1962 = vpack.c.b16 %v1902, %v1900
        %v1963 = vpack.c.b16 %v1903, %v1901
        %v1964 = vpack.c.b16 %v1906, %v1904
        %v1965 = vpack.c.b16 %v1907, %v1905
        %v1966 = vpack.c.b16 %v1910, %v1908
        %v1967 = vpack.c.b16 %v1911, %v1909
        %v1968 = vpack.c.b16 %v1914, %v1912
        %v1969 = vpack.c.b16 %v1915, %v1913
        %v1970 = vpack.c.b16 %v1918, %v1916
        %v1971 = vpack.c.b16 %v1919, %v1917
        %v1972 = vpack.c.b16 %v1922, %v1920
        %v1973 = vpack.c.b16 %v1923, %v1921
        %v1974 = vpack.c.b16 %v1926, %v1924
        %v1975 = vpack.c.b16 %v1927, %v1925
        %v1976 = vpack.c.b16 %v1930, %v1928
        %v1977 = vpack.c.b16 %v1931, %v1929
        %v1978 = vpack.c.b16 %v1934, %v1932
        %v1979 = vpack.c.b16 %v1935, %v1933
        %v1980 = vpack.c.b16 %v1938, %v1936
        %v1981 = vpack.c.b16 %v1939, %v1937
        %v1982 = vpack.c.b16 %v1942, %v1940
        %v1983 = vpack.c.b16 %v1943, %v1941
        %v1984 = vpack.c.b16 %v1946, %v1944
        %v1985 = vpack.c.b16 %v1947, %v1945
        %v1986 = vpack.c.b16 %v1950, %v1948
        %v1987 = vpack.c.b16 %v1951, %v1949
        %v1988 = vpack.c.b16 %v1954, %v1952
        %v1989 = vpack.c.b16 %v1955, %v1953
        %v1990 = vpack.c.b16 %v1958, %v1956
        %v1991 = vpack.c.b16 %v1959, %v1957
        %2024 = vmatprep.subr.bf16.mxu0 %v1975
        %2025 = vmatpush1.bf16.msra.mxu0 %v1974
        %2026 = vmatprep.subr.bf16.mxu0 %v1973
        %2027 = vmatpush1.bf16.msra.mxu0 %v1972
        %2028 = vmatprep.subr.bf16.mxu0 %v1971
        %2029 = vmatpush1.bf16.msra.mxu0 %v1970
        %2030 = vmatprep.subr.bf16.mxu0 %v1969
        %2031 = vmatpush1.bf16.msra.mxu0 %v1968
        %2032 = vmatprep.subr.bf16.mxu0 %v1967
        %2033 = vmatpush1.bf16.msra.mxu0 %v1966
        %2034 = vmatprep.subr.bf16.mxu0 %v1965
        %2035 = vmatpush1.bf16.msra.mxu0 %v1964
        %2036 = vmatprep.subr.bf16.mxu0 %v1963
        %2037 = vmatpush1.bf16.msra.mxu0 %v1962
        %2038 = vmatprep.subr.bf16.mxu0 %v1961
        %2039 = vmatpush1.bf16.msra.mxu0 %v1960
        %2040 = vmatprep.subr.bf16.mxu0 %v1991
        %2041 = vmatpush2.bf16.msra.mxu0 %v1990
        %2042 = vmatprep.subr.bf16.mxu0 %v1989
        %2043 = vmatpush2.bf16.msra.mxu0 %v1988
        %2044 = vmatprep.subr.bf16.mxu0 %v1987
        %2045 = vmatpush2.bf16.msra.mxu0 %v1986
        %2046 = vmatprep.subr.bf16.mxu0 %v1985
        %2047 = vmatpush2.bf16.msra.mxu0 %v1984
        %2048 = vmatprep.subr.bf16.mxu0 %v1983
        %2049 = vmatpush2.bf16.msra.mxu0 %v1982
        %2050 = vmatprep.subr.bf16.mxu0 %v1981
        %2051 = vmatpush2.bf16.msra.mxu0 %v1980
        %2052 = vmatprep.subr.bf16.mxu0 %v1979
        %2053 = vmatpush2.bf16.msra.mxu0 %v1978
        %2054 = vmatprep.subr.bf16.mxu0 %v1977
        %2055 = vmatpush2.bf16.msra.mxu0 %v1976
        %2056 = vmatprep.mubr.bf16.mxu0 %v1789
        %2057 = vmatmul.mubr.bf16.gmra.mxu0 %v1788
        %v2058 = vpop.f32.mrf.mxu0
        %v2059 = vadd.f32 %v1857, %v2058
        %v2060 = vpop.f32.mrf.mxu0
        %v2061 = vadd.f32 %v1861, %v2060
        %v2062 = vpop.f32.mrf.mxu0
        %v2063 = vadd.f32 %v1857, %v2062
        %v2064 = vpop.f32.mrf.mxu0
        %v2065 = vadd.f32 %v1861, %v2064
        %2066 = vmatprep.mubr.bf16.mxu0 %v1791
        %2067 = vmatmul.mubr.bf16.gmra.mxu0 %v1790
        %v2068 = vpop.f32.mrf.mxu0
        %v2069 = vadd.f32 %v1857, %v2068
        %v2070 = vpop.f32.mrf.mxu0
        %v2071 = vadd.f32 %v1861, %v2070
        %v2072 = vpop.f32.mrf.mxu0
        %v2073 = vadd.f32 %v1857, %v2072
        %v2074 = vpop.f32.mrf.mxu0
        %v2075 = vadd.f32 %v1861, %v2074
        %2076 = vmatprep.mubr.bf16.mxu0 %v1793
        %2077 = vmatmul.mubr.bf16.gmra.mxu0 %v1792
        %v2078 = vpop.f32.mrf.mxu0
        %v2079 = vadd.f32 %v1857, %v2078
        %v2080 = vpop.f32.mrf.mxu0
        %v2081 = vadd.f32 %v1861, %v2080
        %v2082 = vpop.f32.mrf.mxu0
        %v2083 = vadd.f32 %v1857, %v2082
        %v2084 = vpop.f32.mrf.mxu0
        %v2085 = vadd.f32 %v1861, %v2084
        %2086 = vmatprep.mubr.bf16.mxu0 %v1795
        %2087 = vmatmul.mubr.bf16.gmra.mxu0 %v1794
        %v2088 = vpop.f32.mrf.mxu0
        %v2089 = vadd.f32 %v1857, %v2088
        %v2090 = vpop.f32.mrf.mxu0
        %v2091 = vadd.f32 %v1861, %v2090
        %v2092 = vpop.f32.mrf.mxu0
        %v2093 = vadd.f32 %v1857, %v2092
        %v2094 = vpop.f32.mrf.mxu0
        %v2095 = vadd.f32 %v1861, %v2094
        %2096 = vmatprep.mubr.bf16.mxu0 %v1797
        %2097 = vmatmul.mubr.bf16.gmra.mxu0 %v1796
        %v2098 = vpop.f32.mrf.mxu0
        %v2099 = vadd.f32 %v1857, %v2098
        %v2100 = vpop.f32.mrf.mxu0
        %v2101 = vadd.f32 %v1861, %v2100
        %v2102 = vpop.f32.mrf.mxu0
        %v2103 = vadd.f32 %v1857, %v2102
        %v2104 = vpop.f32.mrf.mxu0
        %v2105 = vadd.f32 %v1861, %v2104
        %2106 = vmatprep.mubr.bf16.mxu0 %v1799
        %2107 = vmatmul.mubr.bf16.gmra.mxu0 %v1798
        %v2108 = vpop.f32.mrf.mxu0
        %v2109 = vadd.f32 %v1857, %v2108
        %v2110 = vpop.f32.mrf.mxu0
        %v2111 = vadd.f32 %v1861, %v2110
        %v2112 = vpop.f32.mrf.mxu0
        %v2113 = vadd.f32 %v1857, %v2112
        %v2114 = vpop.f32.mrf.mxu0
        %v2115 = vadd.f32 %v1861, %v2114
        %2116 = vmatprep.mubr.bf16.mxu0 %v1801
        %2117 = vmatmul.mubr.bf16.gmra.mxu0 %v1800
        %v2118 = vpop.f32.mrf.mxu0
        %v2119 = vadd.f32 %v1857, %v2118
        %v2120 = vpop.f32.mrf.mxu0
        %v2121 = vadd.f32 %v1861, %v2120
        %v2122 = vpop.f32.mrf.mxu0
        %v2123 = vadd.f32 %v1857, %v2122
        %v2124 = vpop.f32.mrf.mxu0
        %v2125 = vadd.f32 %v1861, %v2124
        %2126 = vmatprep.mubr.bf16.mxu0 %v1803
        %2127 = vmatmul.mubr.bf16.gmra.mxu0 %v1802
        %v2128 = vpop.f32.mrf.mxu0
        %v2129 = vadd.f32 %v1857, %v2128
        %v2130 = vpop.f32.mrf.mxu0
        %v2131 = vadd.f32 %v1861, %v2130
        %v2132 = vpop.f32.mrf.mxu0
        %v2133 = vadd.f32 %v1857, %v2132
        %v2134 = vpop.f32.mrf.mxu0
        %v2135 = vadd.f32 %v1861, %v2134
        %2136 = vmatprep.mubr.bf16.mxu0 %v1805
        %2137 = vmatmul.mubr.bf16.gmra.mxu0 %v1804
        %v2138 = vpop.f32.mrf.mxu0
        %v2139 = vadd.f32 %v1857, %v2138
        %v2140 = vpop.f32.mrf.mxu0
        %v2141 = vadd.f32 %v1861, %v2140
        %v2142 = vpop.f32.mrf.mxu0
        %v2143 = vadd.f32 %v1857, %v2142
        %v2144 = vpop.f32.mrf.mxu0
        %v2145 = vadd.f32 %v1861, %v2144
        %2146 = vmatprep.mubr.bf16.mxu0 %v1807
        %2147 = vmatmul.mubr.bf16.gmra.mxu0 %v1806
        %v2148 = vpop.f32.mrf.mxu0
        %v2149 = vadd.f32 %v1857, %v2148
        %v2150 = vpop.f32.mrf.mxu0
        %v2151 = vadd.f32 %v1861, %v2150
        %v2152 = vpop.f32.mrf.mxu0
        %v2153 = vadd.f32 %v1857, %v2152
        %v2154 = vpop.f32.mrf.mxu0
        %v2155 = vadd.f32 %v1861, %v2154
        %2156 = vmatprep.mubr.bf16.mxu0 %v1809
        %2157 = vmatmul.mubr.bf16.gmra.mxu0 %v1808
        %v2158 = vpop.f32.mrf.mxu0
        %v2159 = vadd.f32 %v1857, %v2158
        %v2160 = vpop.f32.mrf.mxu0
        %v2161 = vadd.f32 %v1861, %v2160
        %v2162 = vpop.f32.mrf.mxu0
        %v2163 = vadd.f32 %v1857, %v2162
        %v2164 = vpop.f32.mrf.mxu0
        %v2165 = vadd.f32 %v1861, %v2164
        %2166 = vmatprep.mubr.bf16.mxu0 %v1811
        %2167 = vmatmul.mubr.bf16.gmra.mxu0 %v1810
        %v2168 = vpop.f32.mrf.mxu0
        %v2169 = vadd.f32 %v1857, %v2168
        %v2170 = vpop.f32.mrf.mxu0
        %v2171 = vadd.f32 %v1861, %v2170
        %v2172 = vpop.f32.mrf.mxu0
        %v2173 = vadd.f32 %v1857, %v2172
        %v2174 = vpop.f32.mrf.mxu0
        %v2175 = vadd.f32 %v1861, %v2174
        %2176 = vmatprep.mubr.bf16.mxu0 %v1813
        %2177 = vmatmul.mubr.bf16.gmra.mxu0 %v1812
        %v2178 = vpop.f32.mrf.mxu0
        %v2179 = vadd.f32 %v1857, %v2178
        %v2180 = vpop.f32.mrf.mxu0
        %v2181 = vadd.f32 %v1861, %v2180
        %v2182 = vpop.f32.mrf.mxu0
        %v2183 = vadd.f32 %v1857, %v2182
        %v2184 = vpop.f32.mrf.mxu0
        %v2185 = vadd.f32 %v1861, %v2184
        %2186 = vmatprep.mubr.bf16.mxu0 %v1815
        %2187 = vmatmul.mubr.bf16.gmra.mxu0 %v1814
        %v2188 = vpop.f32.mrf.mxu0
        %v2189 = vadd.f32 %v1857, %v2188
        %v2190 = vpop.f32.mrf.mxu0
        %v2191 = vadd.f32 %v1861, %v2190
        %v2192 = vpop.f32.mrf.mxu0
        %v2193 = vadd.f32 %v1857, %v2192
        %v2194 = vpop.f32.mrf.mxu0
        %v2195 = vadd.f32 %v1861, %v2194
        %2196 = vmatprep.mubr.bf16.mxu0 %v1817
        %2197 = vmatmul.mubr.bf16.gmra.mxu0 %v1816
        %v2198 = vpop.f32.mrf.mxu0
        %v2199 = vadd.f32 %v1857, %v2198
        %v2200 = vpop.f32.mrf.mxu0
        %v2201 = vadd.f32 %v1861, %v2200
        %v2202 = vpop.f32.mrf.mxu0
        %v2203 = vadd.f32 %v1857, %v2202
        %v2204 = vpop.f32.mrf.mxu0
        %v2205 = vadd.f32 %v1861, %v2204
        %2206 = vmatprep.mubr.bf16.mxu0 %v1819
        %2207 = vmatmul.mubr.bf16.gmra.mxu0 %v1818
        %v2208 = vpop.f32.mrf.mxu0
        %v2209 = vadd.f32 %v1857, %v2208
        %v2210 = vpop.f32.mrf.mxu0
        %v2211 = vadd.f32 %v1861, %v2210
        %v2212 = vpop.f32.mrf.mxu0
        %v2213 = vadd.f32 %v1857, %v2212
        %v2214 = vpop.f32.mrf.mxu0
        %v2215 = vadd.f32 %v1861, %v2214
        %2216 = vdwg.mxu0
        %v2217 = vmax.f32 %v2059, 0.0
        %v2218 = vmax.f32 %v2061, 0.0
        %v2219 = vmax.f32 %v2063, 0.0
        %v2220 = vmax.f32 %v2065, 0.0
        %v2221 = vmax.f32 %v2069, 0.0
        %v2222 = vmax.f32 %v2071, 0.0
        %v2223 = vmax.f32 %v2073, 0.0
        %v2224 = vmax.f32 %v2075, 0.0
        %v2225 = vmax.f32 %v2079, 0.0
        %v2226 = vmax.f32 %v2081, 0.0
        %v2227 = vmax.f32 %v2083, 0.0
        %v2228 = vmax.f32 %v2085, 0.0
        %v2229 = vmax.f32 %v2089, 0.0
        %v2230 = vmax.f32 %v2091, 0.0
        %v2231 = vmax.f32 %v2093, 0.0
        %v2232 = vmax.f32 %v2095, 0.0
        %v2233 = vmax.f32 %v2099, 0.0
        %v2234 = vmax.f32 %v2101, 0.0
        %v2235 = vmax.f32 %v2103, 0.0
        %v2236 = vmax.f32 %v2105, 0.0
        %v2237 = vmax.f32 %v2109, 0.0
        %v2238 = vmax.f32 %v2111, 0.0
        %v2239 = vmax.f32 %v2113, 0.0
        %v2240 = vmax.f32 %v2115, 0.0
        %v2241 = vmax.f32 %v2119, 0.0
        %v2242 = vmax.f32 %v2121, 0.0
        %v2243 = vmax.f32 %v2123, 0.0
        %v2244 = vmax.f32 %v2125, 0.0
        %v2245 = vmax.f32 %v2129, 0.0
        %v2246 = vmax.f32 %v2131, 0.0
        %v2247 = vmax.f32 %v2133, 0.0
        %v2248 = vmax.f32 %v2135, 0.0
        %v2249 = vmax.f32 %v2139, 0.0
        %v2250 = vmax.f32 %v2141, 0.0
        %v2251 = vmax.f32 %v2143, 0.0
        %v2252 = vmax.f32 %v2145, 0.0
        %v2253 = vmax.f32 %v2149, 0.0
        %v2254 = vmax.f32 %v2151, 0.0
        %v2255 = vmax.f32 %v2153, 0.0
        %v2256 = vmax.f32 %v2155, 0.0
        %v2257 = vmax.f32 %v2159, 0.0
        %v2258 = vmax.f32 %v2161, 0.0
        %v2259 = vmax.f32 %v2163, 0.0
        %v2260 = vmax.f32 %v2165, 0.0
        %v2261 = vmax.f32 %v2169, 0.0
        %v2262 = vmax.f32 %v2171, 0.0
        %v2263 = vmax.f32 %v2173, 0.0
        %v2264 = vmax.f32 %v2175, 0.0
        %v2265 = vmax.f32 %v2179, 0.0
        %v2266 = vmax.f32 %v2181, 0.0
        %v2267 = vmax.f32 %v2183, 0.0
        %v2268 = vmax.f32 %v2185, 0.0
        %v2269 = vmax.f32 %v2189, 0.0
        %v2270 = vmax.f32 %v2191, 0.0
        %v2271 = vmax.f32 %v2193, 0.0
        %v2272 = vmax.f32 %v2195, 0.0
        %v2273 = vmax.f32 %v2199, 0.0
        %v2274 = vmax.f32 %v2201, 0.0
        %v2275 = vmax.f32 %v2203, 0.0
        %v2276 = vmax.f32 %v2205, 0.0
        %v2277 = vmax.f32 %v2209, 0.0
        %v2278 = vmax.f32 %v2211, 0.0
        %v2279 = vmax.f32 %v2213, 0.0
        %v2280 = vmax.f32 %v2215, 0.0
        %v2281 = vpack.c.bf16 %v2219, %v2217
        %v2282 = vpack.c.bf16 %v2220, %v2218
        %v2283 = vpack.c.bf16 %v2223, %v2221
        %v2284 = vpack.c.bf16 %v2224, %v2222
        %v2285 = vpack.c.bf16 %v2227, %v2225
        %v2286 = vpack.c.bf16 %v2228, %v2226
        %v2287 = vpack.c.bf16 %v2231, %v2229
        %v2288 = vpack.c.bf16 %v2232, %v2230
        %v2289 = vpack.c.bf16 %v2235, %v2233
        %v2290 = vpack.c.bf16 %v2236, %v2234
        %v2291 = vpack.c.bf16 %v2239, %v2237
        %v2292 = vpack.c.bf16 %v2240, %v2238
        %v2293 = vpack.c.bf16 %v2243, %v2241
        %v2294 = vpack.c.bf16 %v2244, %v2242
        %v2295 = vpack.c.bf16 %v2247, %v2245
        %v2296 = vpack.c.bf16 %v2248, %v2246
        %v2297 = vpack.c.bf16 %v2251, %v2249
        %v2298 = vpack.c.bf16 %v2252, %v2250
        %v2299 = vpack.c.bf16 %v2255, %v2253
        %v2300 = vpack.c.bf16 %v2256, %v2254
        %v2301 = vpack.c.bf16 %v2259, %v2257
        %v2302 = vpack.c.bf16 %v2260, %v2258
        %v2303 = vpack.c.bf16 %v2263, %v2261
        %v2304 = vpack.c.bf16 %v2264, %v2262
        %v2305 = vpack.c.bf16 %v2267, %v2265
        %v2306 = vpack.c.bf16 %v2268, %v2266
        %v2307 = vpack.c.bf16 %v2271, %v2269
        %v2308 = vpack.c.bf16 %v2272, %v2270
        %v2309 = vpack.c.bf16 %v2275, %v2273
        %v2310 = vpack.c.bf16 %v2276, %v2274
        %v2311 = vpack.c.bf16 %v2279, %v2277
        %v2312 = vpack.c.bf16 %v2280, %v2278
        %v2313 = vld [vmem:[#allocation16] sm:$0xff]
        %v2314 = vld [vmem:[#allocation16 + $0x8] sm:$0xff]
        %v2315 = vld [vmem:[#allocation16 + $0x10] sm:$0xff]
        %v2316 = vld [vmem:[#allocation16 + $0x18] sm:$0xff]
        %v2317 = vld [vmem:[#allocation16 + $0x20] sm:$0xff]
        %v2318 = vld [vmem:[#allocation16 + $0x28] sm:$0xff]
        %v2319 = vld [vmem:[#allocation16 + $0x30] sm:$0xff]
        %v2320 = vld [vmem:[#allocation16 + $0x38] sm:$0xff]
        %v2321 = vld [vmem:[#allocation16 + $0x40] sm:$0xff]
        %v2322 = vld [vmem:[#allocation16 + $0x48] sm:$0xff]
        %v2323 = vld [vmem:[#allocation16 + $0x50] sm:$0xff]
        %v2324 = vld [vmem:[#allocation16 + $0x58] sm:$0xff]
        %v2325 = vld [vmem:[#allocation16 + $0x60] sm:$0xff]
        %v2326 = vld [vmem:[#allocation16 + $0x68] sm:$0xff]
        %v2327 = vld [vmem:[#allocation16 + $0x70] sm:$0xff]
        %v2328 = vld [vmem:[#allocation16 + $0x78] sm:$0xff]
        %v2329 = vld [vmem:[#allocation16 + $0x80] sm:$0xff]
        %v2330 = vld [vmem:[#allocation16 + $0x88] sm:$0xff]
        %v2331 = vld [vmem:[#allocation16 + $0x90] sm:$0xff]
        %v2332 = vld [vmem:[#allocation16 + $0x98] sm:$0xff]
        %v2333 = vld [vmem:[#allocation16 + $0xa0] sm:$0xff]
        %v2334 = vld [vmem:[#allocation16 + $0xa8] sm:$0xff]
        %v2335 = vld [vmem:[#allocation16 + $0xb0] sm:$0xff]
        %v2336 = vld [vmem:[#allocation16 + $0xb8] sm:$0xff]
        %v2337 = vld [vmem:[#allocation16 + $0xc0] sm:$0xff]
        %v2338 = vld [vmem:[#allocation16 + $0xc8] sm:$0xff]
        %v2339 = vld [vmem:[#allocation16 + $0xd0] sm:$0xff]
        %v2340 = vld [vmem:[#allocation16 + $0xd8] sm:$0xff]
        %v2341 = vld [vmem:[#allocation16 + $0xe0] sm:$0xff]
        %v2342 = vld [vmem:[#allocation16 + $0xe8] sm:$0xff]
        %v2343 = vld [vmem:[#allocation16 + $0xf0] sm:$0xff]
        %v2344 = vld [vmem:[#allocation16 + $0xf8] sm:$0xff]
        %v2345 = vld [vmem:[%s11] sm:$0x3]
        %v2347 = vlaneseq
        %v2348 = vshrl.u32 %v2347, 7
        %v2349 = vsub.s32 0, %v2348
        %v2350 = vrot.slane %v2345, %v2349
        %v2351 = vlaneseq
        %v2352 = vshrl.u32 %v2351, 7
        %v2353 = vsub.s32 1, %v2352
        %v2354 = vrot.slane %v2345, %v2353
        %v2389 = vunpack.c.l.b16 %v2313
        %v2390 = vunpack.c.h.b16 %v2313
        %v2391 = vunpack.c.l.b16 %v2314
        %v2392 = vunpack.c.h.b16 %v2314
        %v2393 = vunpack.c.l.b16 %v2315
        %v2394 = vunpack.c.h.b16 %v2315
        %v2395 = vunpack.c.l.b16 %v2316
        %v2396 = vunpack.c.h.b16 %v2316
        %v2397 = vunpack.c.l.b16 %v2317
        %v2398 = vunpack.c.h.b16 %v2317
        %v2399 = vunpack.c.l.b16 %v2318
        %v2400 = vunpack.c.h.b16 %v2318
        %v2401 = vunpack.c.l.b16 %v2319
        %v2402 = vunpack.c.h.b16 %v2319
        %v2403 = vunpack.c.l.b16 %v2320
        %v2404 = vunpack.c.h.b16 %v2320
        %v2405 = vunpack.c.l.b16 %v2321
        %v2406 = vunpack.c.h.b16 %v2321
        %v2407 = vunpack.c.l.b16 %v2322
        %v2408 = vunpack.c.h.b16 %v2322
        %v2409 = vunpack.c.l.b16 %v2323
        %v2410 = vunpack.c.h.b16 %v2323
        %v2411 = vunpack.c.l.b16 %v2324
        %v2412 = vunpack.c.h.b16 %v2324
        %v2413 = vunpack.c.l.b16 %v2325
        %v2414 = vunpack.c.h.b16 %v2325
        %v2415 = vunpack.c.l.b16 %v2326
        %v2416 = vunpack.c.h.b16 %v2326
        %v2417 = vunpack.c.l.b16 %v2327
        %v2418 = vunpack.c.h.b16 %v2327
        %v2419 = vunpack.c.l.b16 %v2328
        %v2420 = vunpack.c.h.b16 %v2328
        %v2421 = vunpack.c.l.b16 %v2329
        %v2422 = vunpack.c.h.b16 %v2329
        %v2423 = vunpack.c.l.b16 %v2330
        %v2424 = vunpack.c.h.b16 %v2330
        %v2425 = vunpack.c.l.b16 %v2331
        %v2426 = vunpack.c.h.b16 %v2331
        %v2427 = vunpack.c.l.b16 %v2332
        %v2428 = vunpack.c.h.b16 %v2332
        %v2429 = vunpack.c.l.b16 %v2333
        %v2430 = vunpack.c.h.b16 %v2333
        %v2431 = vunpack.c.l.b16 %v2334
        %v2432 = vunpack.c.h.b16 %v2334
        %v2433 = vunpack.c.l.b16 %v2335
        %v2434 = vunpack.c.h.b16 %v2335
        %v2435 = vunpack.c.l.b16 %v2336
        %v2436 = vunpack.c.h.b16 %v2336
        %v2437 = vunpack.c.l.b16 %v2337
        %v2438 = vunpack.c.h.b16 %v2337
        %v2439 = vunpack.c.l.b16 %v2338
        %v2440 = vunpack.c.h.b16 %v2338
        %v2441 = vunpack.c.l.b16 %v2339
        %v2442 = vunpack.c.h.b16 %v2339
        %v2443 = vunpack.c.l.b16 %v2340
        %v2444 = vunpack.c.h.b16 %v2340
        %v2445 = vunpack.c.l.b16 %v2341
        %v2446 = vunpack.c.h.b16 %v2341
        %v2447 = vunpack.c.l.b16 %v2342
        %v2448 = vunpack.c.h.b16 %v2342
        %v2449 = vunpack.c.l.b16 %v2343
        %v2450 = vunpack.c.h.b16 %v2343
        %v2451 = vunpack.c.l.b16 %v2344
        %v2452 = vunpack.c.h.b16 %v2344
        %v2453 = vpack.c.b16 %v2391, %v2389
        %v2454 = vpack.c.b16 %v2392, %v2390
        %v2455 = vpack.c.b16 %v2395, %v2393
        %v2456 = vpack.c.b16 %v2396, %v2394
        %v2457 = vpack.c.b16 %v2399, %v2397
        %v2458 = vpack.c.b16 %v2400, %v2398
        %v2459 = vpack.c.b16 %v2403, %v2401
        %v2460 = vpack.c.b16 %v2404, %v2402
        %v2461 = vpack.c.b16 %v2407, %v2405
        %v2462 = vpack.c.b16 %v2408, %v2406
        %v2463 = vpack.c.b16 %v2411, %v2409
        %v2464 = vpack.c.b16 %v2412, %v2410
        %v2465 = vpack.c.b16 %v2415, %v2413
        %v2466 = vpack.c.b16 %v2416, %v2414
        %v2467 = vpack.c.b16 %v2419, %v2417
        %v2468 = vpack.c.b16 %v2420, %v2418
        %v2469 = vpack.c.b16 %v2423, %v2421
        %v2470 = vpack.c.b16 %v2424, %v2422
        %v2471 = vpack.c.b16 %v2427, %v2425
        %v2472 = vpack.c.b16 %v2428, %v2426
        %v2473 = vpack.c.b16 %v2431, %v2429
        %v2474 = vpack.c.b16 %v2432, %v2430
        %v2475 = vpack.c.b16 %v2435, %v2433
        %v2476 = vpack.c.b16 %v2436, %v2434
        %v2477 = vpack.c.b16 %v2439, %v2437
        %v2478 = vpack.c.b16 %v2440, %v2438
        %v2479 = vpack.c.b16 %v2443, %v2441
        %v2480 = vpack.c.b16 %v2444, %v2442
        %v2481 = vpack.c.b16 %v2447, %v2445
        %v2482 = vpack.c.b16 %v2448, %v2446
        %v2483 = vpack.c.b16 %v2451, %v2449
        %v2484 = vpack.c.b16 %v2452, %v2450
        %2517 = vmatprep.subr.bf16.mxu0 %v2468
        %2518 = vmatpush1.bf16.msra.mxu0 %v2467
        %2519 = vmatprep.subr.bf16.mxu0 %v2466
        %2520 = vmatpush1.bf16.msra.mxu0 %v2465
        %2521 = vmatprep.subr.bf16.mxu0 %v2464
        %2522 = vmatpush1.bf16.msra.mxu0 %v2463
        %2523 = vmatprep.subr.bf16.mxu0 %v2462
        %2524 = vmatpush1.bf16.msra.mxu0 %v2461
        %2525 = vmatprep.subr.bf16.mxu0 %v2460
        %2526 = vmatpush1.bf16.msra.mxu0 %v2459
        %2527 = vmatprep.subr.bf16.mxu0 %v2458
        %2528 = vmatpush1.bf16.msra.mxu0 %v2457
        %2529 = vmatprep.subr.bf16.mxu0 %v2456
        %2530 = vmatpush1.bf16.msra.mxu0 %v2455
        %2531 = vmatprep.subr.bf16.mxu0 %v2454
        %2532 = vmatpush1.bf16.msra.mxu0 %v2453
        %2533 = vmatprep.subr.bf16.mxu0 %v2484
        %2534 = vmatpush2.bf16.msra.mxu0 %v2483
        %2535 = vmatprep.subr.bf16.mxu0 %v2482
        %2536 = vmatpush2.bf16.msra.mxu0 %v2481
        %2537 = vmatprep.subr.bf16.mxu0 %v2480
        %2538 = vmatpush2.bf16.msra.mxu0 %v2479
        %2539 = vmatprep.subr.bf16.mxu0 %v2478
        %2540 = vmatpush2.bf16.msra.mxu0 %v2477
        %2541 = vmatprep.subr.bf16.mxu0 %v2476
        %2542 = vmatpush2.bf16.msra.mxu0 %v2475
        %2543 = vmatprep.subr.bf16.mxu0 %v2474
        %2544 = vmatpush2.bf16.msra.mxu0 %v2473
        %2545 = vmatprep.subr.bf16.mxu0 %v2472
        %2546 = vmatpush2.bf16.msra.mxu0 %v2471
        %2547 = vmatprep.subr.bf16.mxu0 %v2470
        %2548 = vmatpush2.bf16.msra.mxu0 %v2469
        %2549 = vmatprep.mubr.bf16.mxu0 %v2282
        %2550 = vmatmul.mubr.bf16.gmra.mxu0 %v2281
        %v2551 = vpop.f32.mrf.mxu0
        %v2552 = vadd.f32 %v2350, %v2551
        %v2553 = vpop.f32.mrf.mxu0
        %v2554 = vadd.f32 %v2354, %v2553
        %v2555 = vpop.f32.mrf.mxu0
        %v2556 = vadd.f32 %v2350, %v2555
        %v2557 = vpop.f32.mrf.mxu0
        %v2558 = vadd.f32 %v2354, %v2557
        %2559 = vmatprep.mubr.bf16.mxu0 %v2284
        %2560 = vmatmul.mubr.bf16.gmra.mxu0 %v2283
        %v2561 = vpop.f32.mrf.mxu0
        %v2562 = vadd.f32 %v2350, %v2561
        %v2563 = vpop.f32.mrf.mxu0
        %v2564 = vadd.f32 %v2354, %v2563
        %v2565 = vpop.f32.mrf.mxu0
        %v2566 = vadd.f32 %v2350, %v2565
        %v2567 = vpop.f32.mrf.mxu0
        %v2568 = vadd.f32 %v2354, %v2567
        %2569 = vmatprep.mubr.bf16.mxu0 %v2286
        %2570 = vmatmul.mubr.bf16.gmra.mxu0 %v2285
        %v2571 = vpop.f32.mrf.mxu0
        %v2572 = vadd.f32 %v2350, %v2571
        %v2573 = vpop.f32.mrf.mxu0
        %v2574 = vadd.f32 %v2354, %v2573
        %v2575 = vpop.f32.mrf.mxu0
        %v2576 = vadd.f32 %v2350, %v2575
        %v2577 = vpop.f32.mrf.mxu0
        %v2578 = vadd.f32 %v2354, %v2577
        %2579 = vmatprep.mubr.bf16.mxu0 %v2288
        %2580 = vmatmul.mubr.bf16.gmra.mxu0 %v2287
        %v2581 = vpop.f32.mrf.mxu0
        %v2582 = vadd.f32 %v2350, %v2581
        %v2583 = vpop.f32.mrf.mxu0
        %v2584 = vadd.f32 %v2354, %v2583
        %v2585 = vpop.f32.mrf.mxu0
        %v2586 = vadd.f32 %v2350, %v2585
        %v2587 = vpop.f32.mrf.mxu0
        %v2588 = vadd.f32 %v2354, %v2587
        %2589 = vmatprep.mubr.bf16.mxu0 %v2290
        %2590 = vmatmul.mubr.bf16.gmra.mxu0 %v2289
        %v2591 = vpop.f32.mrf.mxu0
        %v2592 = vadd.f32 %v2350, %v2591
        %v2593 = vpop.f32.mrf.mxu0
        %v2594 = vadd.f32 %v2354, %v2593
        %v2595 = vpop.f32.mrf.mxu0
        %v2596 = vadd.f32 %v2350, %v2595
        %v2597 = vpop.f32.mrf.mxu0
        %v2598 = vadd.f32 %v2354, %v2597
        %2599 = vmatprep.mubr.bf16.mxu0 %v2292
        %2600 = vmatmul.mubr.bf16.gmra.mxu0 %v2291
        %v2601 = vpop.f32.mrf.mxu0
        %v2602 = vadd.f32 %v2350, %v2601
        %v2603 = vpop.f32.mrf.mxu0
        %v2604 = vadd.f32 %v2354, %v2603
        %v2605 = vpop.f32.mrf.mxu0
        %v2606 = vadd.f32 %v2350, %v2605
        %v2607 = vpop.f32.mrf.mxu0
        %v2608 = vadd.f32 %v2354, %v2607
        %2609 = vmatprep.mubr.bf16.mxu0 %v2294
        %2610 = vmatmul.mubr.bf16.gmra.mxu0 %v2293
        %v2611 = vpop.f32.mrf.mxu0
        %v2612 = vadd.f32 %v2350, %v2611
        %v2613 = vpop.f32.mrf.mxu0
        %v2614 = vadd.f32 %v2354, %v2613
        %v2615 = vpop.f32.mrf.mxu0
        %v2616 = vadd.f32 %v2350, %v2615
        %v2617 = vpop.f32.mrf.mxu0
        %v2618 = vadd.f32 %v2354, %v2617
        %2619 = vmatprep.mubr.bf16.mxu0 %v2296
        %2620 = vmatmul.mubr.bf16.gmra.mxu0 %v2295
        %v2621 = vpop.f32.mrf.mxu0
        %v2622 = vadd.f32 %v2350, %v2621
        %v2623 = vpop.f32.mrf.mxu0
        %v2624 = vadd.f32 %v2354, %v2623
        %v2625 = vpop.f32.mrf.mxu0
        %v2626 = vadd.f32 %v2350, %v2625
        %v2627 = vpop.f32.mrf.mxu0
        %v2628 = vadd.f32 %v2354, %v2627
        %2629 = vmatprep.mubr.bf16.mxu0 %v2298
        %2630 = vmatmul.mubr.bf16.gmra.mxu0 %v2297
        %v2631 = vpop.f32.mrf.mxu0
        %v2632 = vadd.f32 %v2350, %v2631
        %v2633 = vpop.f32.mrf.mxu0
        %v2634 = vadd.f32 %v2354, %v2633
        %v2635 = vpop.f32.mrf.mxu0
        %v2636 = vadd.f32 %v2350, %v2635
        %v2637 = vpop.f32.mrf.mxu0
        %v2638 = vadd.f32 %v2354, %v2637
        %2639 = vmatprep.mubr.bf16.mxu0 %v2300
        %2640 = vmatmul.mubr.bf16.gmra.mxu0 %v2299
        %v2641 = vpop.f32.mrf.mxu0
        %v2642 = vadd.f32 %v2350, %v2641
        %v2643 = vpop.f32.mrf.mxu0
        %v2644 = vadd.f32 %v2354, %v2643
        %v2645 = vpop.f32.mrf.mxu0
        %v2646 = vadd.f32 %v2350, %v2645
        %v2647 = vpop.f32.mrf.mxu0
        %v2648 = vadd.f32 %v2354, %v2647
        %2649 = vmatprep.mubr.bf16.mxu0 %v2302
        %2650 = vmatmul.mubr.bf16.gmra.mxu0 %v2301
        %v2651 = vpop.f32.mrf.mxu0
        %v2652 = vadd.f32 %v2350, %v2651
        %v2653 = vpop.f32.mrf.mxu0
        %v2654 = vadd.f32 %v2354, %v2653
        %v2655 = vpop.f32.mrf.mxu0
        %v2656 = vadd.f32 %v2350, %v2655
        %v2657 = vpop.f32.mrf.mxu0
        %v2658 = vadd.f32 %v2354, %v2657
        %2659 = vmatprep.mubr.bf16.mxu0 %v2304
        %2660 = vmatmul.mubr.bf16.gmra.mxu0 %v2303
        %v2661 = vpop.f32.mrf.mxu0
        %v2662 = vadd.f32 %v2350, %v2661
        %v2663 = vpop.f32.mrf.mxu0
        %v2664 = vadd.f32 %v2354, %v2663
        %v2665 = vpop.f32.mrf.mxu0
        %v2666 = vadd.f32 %v2350, %v2665
        %v2667 = vpop.f32.mrf.mxu0
        %v2668 = vadd.f32 %v2354, %v2667
        %2669 = vmatprep.mubr.bf16.mxu0 %v2306
        %2670 = vmatmul.mubr.bf16.gmra.mxu0 %v2305
        %v2671 = vpop.f32.mrf.mxu0
        %v2672 = vadd.f32 %v2350, %v2671
        %v2673 = vpop.f32.mrf.mxu0
        %v2674 = vadd.f32 %v2354, %v2673
        %v2675 = vpop.f32.mrf.mxu0
        %v2676 = vadd.f32 %v2350, %v2675
        %v2677 = vpop.f32.mrf.mxu0
        %v2678 = vadd.f32 %v2354, %v2677
        %2679 = vmatprep.mubr.bf16.mxu0 %v2308
        %2680 = vmatmul.mubr.bf16.gmra.mxu0 %v2307
        %v2681 = vpop.f32.mrf.mxu0
        %v2682 = vadd.f32 %v2350, %v2681
        %v2683 = vpop.f32.mrf.mxu0
        %v2684 = vadd.f32 %v2354, %v2683
        %v2685 = vpop.f32.mrf.mxu0
        %v2686 = vadd.f32 %v2350, %v2685
        %v2687 = vpop.f32.mrf.mxu0
        %v2688 = vadd.f32 %v2354, %v2687
        %2689 = vmatprep.mubr.bf16.mxu0 %v2310
        %2690 = vmatmul.mubr.bf16.gmra.mxu0 %v2309
        %v2691 = vpop.f32.mrf.mxu0
        %v2692 = vadd.f32 %v2350, %v2691
        %v2693 = vpop.f32.mrf.mxu0
        %v2694 = vadd.f32 %v2354, %v2693
        %v2695 = vpop.f32.mrf.mxu0
        %v2696 = vadd.f32 %v2350, %v2695
        %v2697 = vpop.f32.mrf.mxu0
        %v2698 = vadd.f32 %v2354, %v2697
        %2699 = vmatprep.mubr.bf16.mxu0 %v2312
        %2700 = vmatmul.mubr.bf16.gmra.mxu0 %v2311
        %v2701 = vpop.f32.mrf.mxu0
        %v2702 = vadd.f32 %v2350, %v2701
        %v2703 = vpop.f32.mrf.mxu0
        %v2704 = vadd.f32 %v2354, %v2703
        %v2705 = vpop.f32.mrf.mxu0
        %v2706 = vadd.f32 %v2350, %v2705
        %v2707 = vpop.f32.mrf.mxu0
        %v2708 = vadd.f32 %v2354, %v2707
        %2709 = vdwg.mxu0
        %v2710 = vtanh.pop %v2552
        %v2711 = vtanh.pop %v2556
        %v2712 = vtanh.pop %v2562
        %v2713 = vtanh.pop %v2566
        %v2714 = vtanh.pop %v2572
        %v2715 = vtanh.pop %v2576
        %v2716 = vtanh.pop %v2582
        %v2717 = vtanh.pop %v2586
        %v2718 = vtanh.pop %v2592
        %v2719 = vtanh.pop %v2596
        %v2720 = vtanh.pop %v2602
        %v2721 = vtanh.pop %v2606
        %v2722 = vtanh.pop %v2612
        %v2723 = vtanh.pop %v2616
        %v2724 = vtanh.pop %v2622
        %v2725 = vtanh.pop %v2626
        %v2726 = vtanh.pop %v2632
        %v2727 = vtanh.pop %v2636
        %v2728 = vtanh.pop %v2642
        %v2729 = vtanh.pop %v2646
        %v2730 = vtanh.pop %v2652
        %v2731 = vtanh.pop %v2656
        %v2732 = vtanh.pop %v2662
        %v2733 = vtanh.pop %v2666
        %v2734 = vtanh.pop %v2672
        %v2735 = vtanh.pop %v2676
        %v2736 = vtanh.pop %v2682
        %v2737 = vtanh.pop %v2686
        %v2738 = vtanh.pop %v2692
        %v2739 = vtanh.pop %v2696
        %v2740 = vtanh.pop %v2702
        %v2741 = vtanh.pop %v2706
        %v2742 = vmul.f32 %v2710, 3.1415927
        %v2743 = vmul.f32 %v2711, 3.1415927
        %v2744 = vmul.f32 %v2712, 3.1415927
        %v2745 = vmul.f32 %v2713, 3.1415927
        %v2746 = vmul.f32 %v2714, 3.1415927
        %v2747 = vmul.f32 %v2715, 3.1415927
        %v2748 = vmul.f32 %v2716, 3.1415927
        %v2749 = vmul.f32 %v2717, 3.1415927
        %v2750 = vmul.f32 %v2718, 3.1415927
        %v2751 = vmul.f32 %v2719, 3.1415927
        %v2752 = vmul.f32 %v2720, 3.1415927
        %v2753 = vmul.f32 %v2721, 3.1415927
        %v2754 = vmul.f32 %v2722, 3.1415927
        %v2755 = vmul.f32 %v2723, 3.1415927
        %v2756 = vmul.f32 %v2724, 3.1415927
        %v2757 = vmul.f32 %v2725, 3.1415927
        %v2758 = vmul.f32 %v2726, 3.1415927
        %v2759 = vmul.f32 %v2727, 3.1415927
        %v2760 = vmul.f32 %v2728, 3.1415927
        %v2761 = vmul.f32 %v2729, 3.1415927
        %v2762 = vmul.f32 %v2730, 3.1415927
        %v2763 = vmul.f32 %v2731, 3.1415927
        %v2764 = vmul.f32 %v2732, 3.1415927
        %v2765 = vmul.f32 %v2733, 3.1415927
        %v2766 = vmul.f32 %v2734, 3.1415927
        %v2767 = vmul.f32 %v2735, 3.1415927
        %v2768 = vmul.f32 %v2736, 3.1415927
        %v2769 = vmul.f32 %v2737, 3.1415927
        %v2770 = vmul.f32 %v2738, 3.1415927
        %v2771 = vmul.f32 %v2739, 3.1415927
        %v2772 = vmul.f32 %v2740, 3.1415927
        %v2773 = vmul.f32 %v2741, 3.1415927
        %2774 = vst [vmem:[%s735] sm:$0xff] %v2742
        %2775 = vst [vmem:[%s735 + $0x8] sm:$0xff] %v2743
        %2776 = vst [vmem:[%s735 + $0x10] sm:$0xff] %v2744
        %2777 = vst [vmem:[%s735 + $0x18] sm:$0xff] %v2745
        %2778 = vst [vmem:[%s735 + $0x20] sm:$0xff] %v2746
        %2779 = vst [vmem:[%s735 + $0x28] sm:$0xff] %v2747
        %2780 = vst [vmem:[%s735 + $0x30] sm:$0xff] %v2748
        %2781 = vst [vmem:[%s735 + $0x38] sm:$0xff] %v2749
        %2782 = vst [vmem:[%s735 + $0x40] sm:$0xff] %v2750
        %2783 = vst [vmem:[%s735 + $0x48] sm:$0xff] %v2751
        %2784 = vst [vmem:[%s735 + $0x50] sm:$0xff] %v2752
        %2785 = vst [vmem:[%s735 + $0x58] sm:$0xff] %v2753
        %2786 = vst [vmem:[%s735 + $0x60] sm:$0xff] %v2754
        %2787 = vst [vmem:[%s735 + $0x68] sm:$0xff] %v2755
        %2788 = vst [vmem:[%s735 + $0x70] sm:$0xff] %v2756
        %2789 = vst [vmem:[%s735 + $0x78] sm:$0xff] %v2757
        %2790 = vst [vmem:[%s735 + $0x80] sm:$0xff] %v2758
        %2791 = vst [vmem:[%s735 + $0x88] sm:$0xff] %v2759
        %2792 = vst [vmem:[%s735 + $0x90] sm:$0xff] %v2760
        %2793 = vst [vmem:[%s735 + $0x98] sm:$0xff] %v2761
        %2794 = vst [vmem:[%s735 + $0xa0] sm:$0xff] %v2762
        %2795 = vst [vmem:[%s735 + $0xa8] sm:$0xff] %v2763
        %2796 = vst [vmem:[%s735 + $0xb0] sm:$0xff] %v2764
        %2797 = vst [vmem:[%s735 + $0xb8] sm:$0xff] %v2765
        %2798 = vst [vmem:[%s735 + $0xc0] sm:$0xff] %v2766
        %2799 = vst [vmem:[%s735 + $0xc8] sm:$0xff] %v2767
        %2800 = vst [vmem:[%s735 + $0xd0] sm:$0xff] %v2768
        %2801 = vst [vmem:[%s735 + $0xd8] sm:$0xff] %v2769
        %2802 = vst [vmem:[%s735 + $0xe0] sm:$0xff] %v2770
        %2803 = vst [vmem:[%s735 + $0xe8] sm:$0xff] %v2771
        %2804 = vst [vmem:[%s735 + $0xf0] sm:$0xff] %v2772
        %2805 = vst [vmem:[%s735 + $0xf8] sm:$0xff] %v2773
        %v2806 = vmul.f32 %v2554, 2.0
        %v2807 = vmul.f32 %v2558, 2.0
        %v2808 = vmul.f32 %v2564, 2.0
        %v2809 = vmul.f32 %v2568, 2.0
        %v2810 = vmul.f32 %v2574, 2.0
        %v2811 = vmul.f32 %v2578, 2.0
        %v2812 = vmul.f32 %v2584, 2.0
        %v2813 = vmul.f32 %v2588, 2.0
        %v2814 = vmul.f32 %v2594, 2.0
        %v2815 = vmul.f32 %v2598, 2.0
        %v2816 = vmul.f32 %v2604, 2.0
        %v2817 = vmul.f32 %v2608, 2.0
        %v2818 = vmul.f32 %v2614, 2.0
        %v2819 = vmul.f32 %v2618, 2.0
        %v2820 = vmul.f32 %v2624, 2.0
        %v2821 = vmul.f32 %v2628, 2.0
        %v2822 = vmul.f32 %v2634, 2.0
        %v2823 = vmul.f32 %v2638, 2.0
        %v2824 = vmul.f32 %v2644, 2.0
        %v2825 = vmul.f32 %v2648, 2.0
        %v2826 = vmul.f32 %v2654, 2.0
        %v2827 = vmul.f32 %v2658, 2.0
        %v2828 = vmul.f32 %v2664, 2.0
        %v2829 = vmul.f32 %v2668, 2.0
        %v2830 = vmul.f32 %v2674, 2.0
        %v2831 = vmul.f32 %v2678, 2.0
        %v2832 = vmul.f32 %v2684, 2.0
        %v2833 = vmul.f32 %v2688, 2.0
        %v2834 = vmul.f32 %v2694, 2.0
        %v2835 = vmul.f32 %v2698, 2.0
        %v2836 = vmul.f32 %v2704, 2.0
        %v2837 = vmul.f32 %v2708, 2.0
        %v2838 = vtanh.pop %v2806
        %v2839 = vtanh.pop %v2807
        %v2840 = vtanh.pop %v2808
        %v2841 = vtanh.pop %v2809
        %v2842 = vtanh.pop %v2810
        %v2843 = vtanh.pop %v2811
        %v2844 = vtanh.pop %v2812
        %v2845 = vtanh.pop %v2813
        %v2846 = vtanh.pop %v2814
        %v2847 = vtanh.pop %v2815
        %v2848 = vtanh.pop %v2816
        %v2849 = vtanh.pop %v2817
        %v2850 = vtanh.pop %v2818
        %v2851 = vtanh.pop %v2819
        %v2852 = vtanh.pop %v2820
        %v2853 = vtanh.pop %v2821
        %v2854 = vtanh.pop %v2822
        %v2855 = vtanh.pop %v2823
        %v2856 = vtanh.pop %v2824
        %v2857 = vtanh.pop %v2825
        %v2858 = vtanh.pop %v2826
        %v2859 = vtanh.pop %v2827
        %v2860 = vtanh.pop %v2828
        %v2861 = vtanh.pop %v2829
        %v2862 = vtanh.pop %v2830
        %v2863 = vtanh.pop %v2831
        %v2864 = vtanh.pop %v2832
        %v2865 = vtanh.pop %v2833
        %v2866 = vtanh.pop %v2834
        %v2867 = vtanh.pop %v2835
        %v2868 = vtanh.pop %v2836
        %v2869 = vtanh.pop %v2837
        %v2870 = vmul.f32 %v2838, 1.5707964
        %v2871 = vmul.f32 %v2839, 1.5707964
        %v2872 = vmul.f32 %v2840, 1.5707964
        %v2873 = vmul.f32 %v2841, 1.5707964
        %v2874 = vmul.f32 %v2842, 1.5707964
        %v2875 = vmul.f32 %v2843, 1.5707964
        %v2876 = vmul.f32 %v2844, 1.5707964
        %v2877 = vmul.f32 %v2845, 1.5707964
        %v2878 = vmul.f32 %v2846, 1.5707964
        %v2879 = vmul.f32 %v2847, 1.5707964
        %v2880 = vmul.f32 %v2848, 1.5707964
        %v2881 = vmul.f32 %v2849, 1.5707964
        %v2882 = vmul.f32 %v2850, 1.5707964
        %v2883 = vmul.f32 %v2851, 1.5707964
        %v2884 = vmul.f32 %v2852, 1.5707964
        %v2885 = vmul.f32 %v2853, 1.5707964
        %v2886 = vmul.f32 %v2854, 1.5707964
        %v2887 = vmul.f32 %v2855, 1.5707964
        %v2888 = vmul.f32 %v2856, 1.5707964
        %v2889 = vmul.f32 %v2857, 1.5707964
        %v2890 = vmul.f32 %v2858, 1.5707964
        %v2891 = vmul.f32 %v2859, 1.5707964
        %v2892 = vmul.f32 %v2860, 1.5707964
        %v2893 = vmul.f32 %v2861, 1.5707964
        %v2894 = vmul.f32 %v2862, 1.5707964
        %v2895 = vmul.f32 %v2863, 1.5707964
        %v2896 = vmul.f32 %v2864, 1.5707964
        %v2897 = vmul.f32 %v2865, 1.5707964
        %v2898 = vmul.f32 %v2866, 1.5707964
        %v2899 = vmul.f32 %v2867, 1.5707964
        %v2900 = vmul.f32 %v2868, 1.5707964
        %v2901 = vmul.f32 %v2869, 1.5707964
        %v2902 = vadd.f32 %v2870, 1.5707964
        %v2903 = vadd.f32 %v2871, 1.5707964
        %v2904 = vadd.f32 %v2872, 1.5707964
        %v2905 = vadd.f32 %v2873, 1.5707964
        %v2906 = vadd.f32 %v2874, 1.5707964
        %v2907 = vadd.f32 %v2875, 1.5707964
        %v2908 = vadd.f32 %v2876, 1.5707964
        %v2909 = vadd.f32 %v2877, 1.5707964
        %v2910 = vadd.f32 %v2878, 1.5707964
        %v2911 = vadd.f32 %v2879, 1.5707964
        %v2912 = vadd.f32 %v2880, 1.5707964
        %v2913 = vadd.f32 %v2881, 1.5707964
        %v2914 = vadd.f32 %v2882, 1.5707964
        %v2915 = vadd.f32 %v2883, 1.5707964
        %v2916 = vadd.f32 %v2884, 1.5707964
        %v2917 = vadd.f32 %v2885, 1.5707964
        %v2918 = vadd.f32 %v2886, 1.5707964
        %v2919 = vadd.f32 %v2887, 1.5707964
        %v2920 = vadd.f32 %v2888, 1.5707964
        %v2921 = vadd.f32 %v2889, 1.5707964
        %v2922 = vadd.f32 %v2890, 1.5707964
        %v2923 = vadd.f32 %v2891, 1.5707964
        %v2924 = vadd.f32 %v2892, 1.5707964
        %v2925 = vadd.f32 %v2893, 1.5707964
        %v2926 = vadd.f32 %v2894, 1.5707964
        %v2927 = vadd.f32 %v2895, 1.5707964
        %v2928 = vadd.f32 %v2896, 1.5707964
        %v2929 = vadd.f32 %v2897, 1.5707964
        %v2930 = vadd.f32 %v2898, 1.5707964
        %v2931 = vadd.f32 %v2899, 1.5707964
        %v2932 = vadd.f32 %v2900, 1.5707964
        %v2933 = vadd.f32 %v2901, 1.5707964
        %2934 = vst [vmem:[%s742] sm:$0xff] %v2902
        %2935 = vst [vmem:[%s742 + $0x8] sm:$0xff] %v2903
        %2936 = vst [vmem:[%s742 + $0x10] sm:$0xff] %v2904
        %2937 = vst [vmem:[%s742 + $0x18] sm:$0xff] %v2905
        %2938 = vst [vmem:[%s742 + $0x20] sm:$0xff] %v2906
        %2939 = vst [vmem:[%s742 + $0x28] sm:$0xff] %v2907
        %2940 = vst [vmem:[%s742 + $0x30] sm:$0xff] %v2908
        %2941 = vst [vmem:[%s742 + $0x38] sm:$0xff] %v2909
        %2942 = vst [vmem:[%s742 + $0x40] sm:$0xff] %v2910
        %2943 = vst [vmem:[%s742 + $0x48] sm:$0xff] %v2911
        %2944 = vst [vmem:[%s742 + $0x50] sm:$0xff] %v2912
        %2945 = vst [vmem:[%s742 + $0x58] sm:$0xff] %v2913
        %2946 = vst [vmem:[%s742 + $0x60] sm:$0xff] %v2914
        %2947 = vst [vmem:[%s742 + $0x68] sm:$0xff] %v2915
        %2948 = vst [vmem:[%s742 + $0x70] sm:$0xff] %v2916
        %2949 = vst [vmem:[%s742 + $0x78] sm:$0xff] %v2917
        %2950 = vst [vmem:[%s742 + $0x80] sm:$0xff] %v2918
        %2951 = vst [vmem:[%s742 + $0x88] sm:$0xff] %v2919
        %2952 = vst [vmem:[%s742 + $0x90] sm:$0xff] %v2920
        %2953 = vst [vmem:[%s742 + $0x98] sm:$0xff] %v2921
        %2954 = vst [vmem:[%s742 + $0xa0] sm:$0xff] %v2922
        %2955 = vst [vmem:[%s742 + $0xa8] sm:$0xff] %v2923
        %2956 = vst [vmem:[%s742 + $0xb0] sm:$0xff] %v2924
        %2957 = vst [vmem:[%s742 + $0xb8] sm:$0xff] %v2925
        %2958 = vst [vmem:[%s742 + $0xc0] sm:$0xff] %v2926
        %2959 = vst [vmem:[%s742 + $0xc8] sm:$0xff] %v2927
        %2960 = vst [vmem:[%s742 + $0xd0] sm:$0xff] %v2928
        %2961 = vst [vmem:[%s742 + $0xd8] sm:$0xff] %v2929
        %2962 = vst [vmem:[%s742 + $0xe0] sm:$0xff] %v2930
        %2963 = vst [vmem:[%s742 + $0xe8] sm:$0xff] %v2931
        %2964 = vst [vmem:[%s742 + $0xf0] sm:$0xff] %v2932
        %2965 = vst [vmem:[%s742 + $0xf8] sm:$0xff] %v2933
        %s2966 = sand.u32 %s334, 1
        %s2967 = scalar_lea.sflag [#allocation4], %s2966
        %s2968 = sand.u32 %s334, 1
        %s2969 = smul.addr %s2968, 256
        %s2970 = scalar_lea.vmem [#allocation17], %s2969
        %s2971 = sand.u32 %s360, 1
        %s2972 = scalar_lea.sflag [#allocation19], %s2971
        %s2973 = sand.u32 %s360, 1
        %s2974 = smul.addr %s2973, 256
        %s2975 = scalar_lea.vmem [#allocation18], %s2974
        // Predicated region
        $region105: #{tpu_custom_call.1} parent=67 // pred_check
          %p2976 = pneg %p344
        $region106: #{tpu_custom_call.1} parent=67 // pred_check_branch
          %2978 = sbr.rel (%p2976) target = $region108
        $region107: #{tpu_custom_call.1} parent=67 // pred_region
          %s2979 = smul.u32 32, %s44
          %s2980 = ssub.s32 38, %s2979
          %p2981 = scmp.lt.s32.totalorder %s2980, 32
          %s2982 = scalar_select %p2981, %s2980, 32
          %s2983 = smul.u32 128, %s2982
          %s2985 = ssub.s32 4096, %s2983
          %2986 = vsyncadd %s2967, %s2985
          %p2987 = scmp.ne.s32.totalorder 0, %s2983
          %s2988 = smul.addr %s2979, 128
          %s2989 = scalar_lea.hbm %s12, %s2988
          %s2990 = smul.u32 8, %s2982
          %s2991 = sshll.u32 %s2970, 4
          %s2992 = int_to_ptr.vmem [resolvable:$true] %s2991
          %s2993 = sshll.u32 %s2990, 4
          %2997 = dma.vmem_to_hbm [thread:$0]  (%p2987), %s2992, %s2993, %s2989, %s2967, 128, 128, 8
        $region108: #{tpu_custom_call.1} parent=67 // pred_fallthru
          _
        // Predicated region
        $region109: #{tpu_custom_call.1} parent=67 // pred_check
          %p2998 = pneg %p370
        $region110: #{tpu_custom_call.1} parent=67 // pred_check_branch
          %3000 = sbr.rel (%p2998) target = $region112
        $region111: #{tpu_custom_call.1} parent=67 // pred_region
          %s3001 = smul.u32 32, %s44
          %s3002 = ssub.s32 38, %s3001
          %p3003 = scmp.lt.s32.totalorder %s3002, 32
          %s3004 = scalar_select %p3003, %s3002, 32
          %s3005 = smul.u32 128, %s3004
          %s3007 = ssub.s32 4096, %s3005
          %3008 = vsyncadd %s2972, %s3007
          %p3009 = scmp.ne.s32.totalorder 0, %s3005
          %s3010 = smul.addr %s3001, 128
          %s3011 = scalar_lea.hbm %s13, %s3010
          %s3012 = smul.u32 8, %s3004
          %s3013 = sshll.u32 %s2975, 4
          %s3014 = int_to_ptr.vmem [resolvable:$true] %s3013
          %s3015 = sshll.u32 %s3012, 4
          %3019 = dma.vmem_to_hbm [thread:$0]  (%p3009), %s3014, %s3015, %s3011, %s2972, 128, 128, 8
        $region112: #{tpu_custom_call.1} parent=67 // pred_fallthru
          _
      $region68: #{tpu_custom_call.1} parent=5 // pred_fallthru
        _
      %p3020 = scmp.le.s32.totalorder 2, %s39
      // Predicated region
      $region113: #{tpu_custom_call.1} parent=5 // pred_check
        %p3021 = pneg %p3020
      $region114: #{tpu_custom_call.1} parent=5 // pred_check_branch
        %3023 = sbr.rel (%p3021) target = $region116
      $region115: #{tpu_custom_call.1} parent=5 // pred_region
        %s3024 = ssub.s32 %s39, 2
        // Predicated region
        $region117: #{tpu_custom_call.1} parent=115 // pred_check
          %p3025 = pneg %p350
        $region118: #{tpu_custom_call.1} parent=115 // pred_check_branch
          %3027 = sbr.rel (%p3025) target = $region120
        $region119: #{tpu_custom_call.1} parent=115 // pred_region
          %s3028 = sand.u32 %s335, 1
          %s3029 = scalar_lea.sflag [#allocation4], %s3028
          %s3030 = sand.u32 %s335, 1
          %s3031 = smul.addr %s3030, 256
          %s3032 = scalar_lea.vmem [#allocation17], %s3031
          %3033 = dma.done %s3029, 4096
        $region120: #{tpu_custom_call.1} parent=115 // pred_fallthru
          _
        // Predicated region
        $region121: #{tpu_custom_call.1} parent=115 // pred_check
          %p3034 = pneg %p376
        $region122: #{tpu_custom_call.1} parent=115 // pred_check_branch
          %3036 = sbr.rel (%p3034) target = $region124
        $region123: #{tpu_custom_call.1} parent=115 // pred_region
          %s3037 = sand.u32 %s361, 1
          %s3038 = scalar_lea.sflag [#allocation19], %s3037
          %s3039 = sand.u32 %s361, 1
          %s3040 = smul.addr %s3039, 256
          %s3041 = scalar_lea.vmem [#allocation18], %s3040
          %3042 = dma.done %s3038, 4096
        $region124: #{tpu_custom_call.1} parent=115 // pred_fallthru
          _
      $region116: #{tpu_custom_call.1} parent=5 // pred_fallthru
        _
    $region6: #{tpu_custom_call.1} parent=1 // loop_footer
      %s43 = sadd.s32 1, %s39
    $region7: #{tpu_custom_call.1} parent=1 // loop_footer_branch
      %38 = sbr.rel target = $region3
    $region8: #{tpu_custom_call.1} parent=1 // loop_exit
      _
    %3043 = vsyncpa [#allocation3], 1
    %s3044 = scalar_lea.sflag [#allocation3], 1
    %3045 = vsyncpa %s3044, 1
    %3046 = vsyncpa [#allocation6], 1
    %s3047 = scalar_lea.sflag [#allocation6], 1
    %3048 = vsyncpa %s3047, 1
    %3049 = vsyncpa [#allocation9], 1
    %s3050 = scalar_lea.sflag [#allocation9], 1
    %3051 = vsyncpa %s3050, 1
    %3052 = vsyncpa [#allocation12], 1
    %s3053 = scalar_lea.sflag [#allocation12], 1
    %3054 = vsyncpa %s3053, 1
    %3055 = vsyncpa [#allocation15], 1
    %3056 = vsyncpa [#allocation4], 1
    %s3057 = scalar_lea.sflag [#allocation4], 1
    %3058 = vsyncpa %s3057, 1
    %3059 = vsyncpa [#allocation19], 1
    %s3060 = scalar_lea.sflag [#allocation19], 1
    %3061 = vsyncpa %s3060, 1

</llo_original>
